<compile_context>
chip_gen: v5e
topology: v5e:2x2
jax: 0.10.0
libtpu: 0.0.40
codegen_flags: <defaults>
</compile_context>

<pallas_src>
import functools

import jax
import jax.numpy as jnp
from jax.experimental import pallas as pl
from jax.experimental.pallas import tpu as pltpu

HIDDEN = 50          # logical hidden size (matches the PyTorch module)
HP = 128             # hidden size padded to one lane tile
GP = 4 * HP          # padded gate width: each gate starts on a lane boundary


def sine_lstm_kernel(xT_ref,
                     wih1_ref, b1_ref,
                     w1f_ref,              # (HP, 2*GP)  fused [W_ih2 | W_hh1]
                     b2_ref,
                     whh2_ref,             # (HP, GP)
                     w2fb_ref,             # (HP, 2*GP)  fused [W_hh2 | W_eff]
                     wlin_row_ref, blin_ref,
                     out_ref,
                     *, seq_len, predict):
    S = seq_len
    B = xT_ref.shape[1]

    xT = xT_ref[...]                 # (S, B)    time-major scalar inputs
    wih1 = wih1_ref[...]             # (1, GP)
    b1 = b1_ref[...]                 # (1, GP)
    w1f = w1f_ref[...]               # (HP, 2*GP)
    b2 = b2_ref[...]                 # (1, GP)
    whh2 = whh2_ref[...]             # (HP, GP)
    wlin_row = wlin_row_ref[...]     # (1, HP)
    blin = blin_ref[...]             # (1, 1)

    # Precompute every teacher-phase layer-1 input contribution (incl. bias)
    # once: xw[t] == x[:, t:t+1] @ W_ih1 + b1.  Time-major layout makes the
    # per-step access a leading-dim index (no K=1 matmuls, no 1-lane slices
    # inside the recurrence).
    xw = xT[:, :, None] * wih1[None, :, :] + b1[None, :, :]   # (S, B, GP)

    # Hoisted bias broadcast (JAX does not CSE broadcast_in_dim).
    b2_b = jnp.broadcast_to(b2, (B, GP))

    def gates_to_state(gates, c):
        # Lane-aligned gate slices: gate g occupies lanes [g*128, (g+1)*128).
        i = jax.nn.sigmoid(gates[:, 0 * HP:1 * HP])
        f = jax.nn.sigmoid(gates[:, 1 * HP:2 * HP])
        g = jnp.tanh(gates[:, 2 * HP:3 * HP])
        o = jax.nn.sigmoid(gates[:, 3 * HP:4 * HP])
        c_new = f * c + i * g          # padded lanes: 0.5*0 + 0.5*0 = 0
        h_new = o * jnp.tanh(c_new)    # padded lanes stay exactly 0
        return h_new, c_new

    c1 = jnp.zeros((B, HP), jnp.float32)
    c2 = jnp.zeros((B, HP), jnp.float32)
    # Carried next-step contributions (h_0 == 0 for both layers -> zeros).
    hh1_next = jnp.zeros((B, GP), jnp.float32)   # h1_{t-1} @ W_hh1
    hh2_next = jnp.zeros((B, GP), jnp.float32)   # h2_{t-1} @ W_hh2

    outs = []
    lin = jnp.zeros((B, 1), jnp.float32)         # h2 @ W_lin (no bias)

    # ---- teacher-forced part: consume the observed sequence ----
    for t in range(S):
        gates1 = xw[t] + hh1_next
        h1, c1 = gates_to_state(gates1, c1)
        # One MXU pass for both h1 consumers: [:, :GP] -> layer-2 input
        # contribution now, [:, GP:] -> layer-1 hidden contribution next step.
        m1 = jnp.dot(h1, w1f, preferred_element_type=jnp.float32)   # (B, 2*GP)
        gates2 = m1[:, :GP] + hh2_next + b2_b
        hh1_next = m1[:, GP:]
        h2, c2 = gates_to_state(gates2, c2)
        # h2_prev @ W_hh2 for the NEXT step: off next step's h1 critical path,
        # free to overlap with next step's layer-1 work.
        hh2_next = jnp.dot(h2, whh2, preferred_element_type=jnp.float32)
        # Readout on VPU + lane reduce; nothing in the recurrence depends on it.
        lin = jnp.sum(h2 * wlin_row, axis=-1, keepdims=True)        # (B, 1)
        outs.append(lin + blin)

    # ---- free-running part: feed the previous scalar output back in ----
    if predict > 0:
        w2fb = w2fb_ref[...]                       # (HP, 2*GP) [W_hh2 | W_eff]
        # Folded feedback bias: b1 + b_lin * W_ih1 (padded lanes stay 0).
        b1fb_b = jnp.broadcast_to(b1 + blin * wih1, (B, GP))
        # One-time seed for the first feedback step (== h2_last @ W_eff).
        x_contrib = lin * wih1                     # (B, GP) VPU outer product
        for _ in range(predict):
            gates1 = x_contrib + b1fb_b + hh1_next
            h1, c1 = gates_to_state(gates1, c1)
            m1 = jnp.dot(h1, w1f, preferred_element_type=jnp.float32)
            gates2 = m1[:, :GP] + hh2_next + b2_b
            hh1_next = m1[:, GP:]
            h2, c2 = gates_to_state(gates2, c2)
            # Single matmul on h2 produces BOTH next-step contributions:
            # layer-2 hidden term and (rank-1 folded) layer-1 input term --
            # no XLU reduce on the recurrence critical path.
            m2 = jnp.dot(h2, w2fb, preferred_element_type=jnp.float32)
            hh2_next = m2[:, :GP]
            x_contrib = m2[:, GP:]
            # Readout only records the output (off the critical path).
            outs.append(jnp.sum(h2 * wlin_row, axis=-1, keepdims=True) + blin)

    # Single store of the whole (B, S + predict) output.
    out_ref[...] = jnp.concatenate(outs, axis=1)


# ---------------- parameter preparation (done ONCE at model init) -----------

def _pad_gates(w):
    """(K, 4*HIDDEN) -> (K, GP): zero-pad each gate to its own 128-lane slot."""
    K = w.shape[0]
    w4 = w.reshape(K, 4, HIDDEN)
    w4 = jnp.pad(w4, ((0, 0), (0, 0), (0, HP - HIDDEN)))
    return w4.reshape(K, GP)


def _pad_rows(w, rows):
    return jnp.pad(w, ((0, rows - w.shape[0]), (0, 0)))


def prepare_params(params):
    """Pad/fuse the logical (PyTorch-shaped) params into TPU layouts.

    Called once at init; the per-call forward takes the result directly
    (no per-call pad/reshape/concat XLA ops).
    """
    wih1, whh1, b1, wih2, whh2, b2, wlin, blin = params
    wih1_p = _pad_gates(wih1)                              # (1, GP)
    b1_p = _pad_gates(b1)                                  # (1, GP)
    whh1_p = _pad_rows(_pad_gates(whh1), HP)               # (HP, GP)
    wih2_p = _pad_rows(_pad_gates(wih2), HP)               # (HP, GP)
    whh2_p = _pad_rows(_pad_gates(whh2), HP)               # (HP, GP)
    b2_p = _pad_gates(b2)                                  # (1, GP)
    wlin_col = _pad_rows(wlin, HP)                         # (HP, 1)
    wlin_row = wlin_col.T                                  # (1, HP)
    # Rank-1 feedback weight: h2 @ (W_lin ⊗ W_ih1) == (h2 @ W_lin) * W_ih1.
    weff = wlin_col @ wih1_p                               # (HP, GP)
    # Fused N-stacked weights (needed-now columns first).
    w1f = jnp.concatenate([wih2_p, whh1_p], axis=1)        # (HP, 2*GP)
    w2fb = jnp.concatenate([whh2_p, weff], axis=1)         # (HP, 2*GP)
    return (wih1_p, b1_p, w1f, b2_p, whh2_p, w2fb, wlin_row, blin)


@functools.partial(jax.jit, static_argnames="predict")
def sine_lstm_forward(x, padded_params, predict=0):
    """x: (B, S) float32, padded_params from prepare_params -> (B, S+predict)."""
    B, S = x.shape
    kernel = functools.partial(sine_lstm_kernel, seq_len=S, predict=predict)
    vmem = pl.BlockSpec(memory_space=pltpu.VMEM)
    return pl.pallas_call(
        kernel,
        out_shape=jax.ShapeDtypeStruct((B, S + predict), jnp.float32),
        in_specs=[vmem] * 9,
        out_specs=vmem,
    )(x.T, *padded_params)   # x passed time-major (S, B): 64 B of layout plumbing


# ---------------- init & pure-JAX reference (unpadded math) -----------------

def init_params(key, H=HIDDEN):
    """Deterministic parameter init (uniform(-1/sqrt(H), 1/sqrt(H)), like torch)."""
    ks = jax.random.split(key, 11)
    bound = 1.0 / jnp.sqrt(jnp.float32(H))

    def u(k, shape):
        return jax.random.uniform(k, shape, jnp.float32, -bound, bound)

    # Cell 1: input size 1, hidden H. Weights stored transposed for x @ W.
    wih1 = u(ks[0], (1, 4 * H))
    whh1 = u(ks[1], (H, 4 * H))
    b1 = u(ks[2], (1, 4 * H)) + u(ks[3], (1, 4 * H))   # b_ih + b_hh
    # Cell 2: input size H, hidden H.
    wih2 = u(ks[4], (H, 4 * H))
    whh2 = u(ks[5], (H, 4 * H))
    b2 = u(ks[6], (1, 4 * H)) + u(ks[7], (1, 4 * H))
    # Linear(H, 1)
    wlin = u(ks[8], (H, 1))
    blin = u(ks[9], (1, 1))
    return (wih1, whh1, b1, wih2, whh2, b2, wlin, blin)


def reference_forward(x, params, predict=0):
    """Pure-JAX reference mirroring the PyTorch forward (for validation)."""
    (wih1, whh1, b1, wih2, whh2, b2, wlin, blin) = params
    H = HIDDEN
    B, S = x.shape
    h1 = jnp.zeros((B, H), jnp.float32)
    c1 = jnp.zeros((B, H), jnp.float32)
    h2 = jnp.zeros((B, H), jnp.float32)
    c2 = jnp.zeros((B, H), jnp.float32)

    def cell(xt, h, c, wih, whh, b):
        g = xt @ wih + h @ whh + b
        i = jax.nn.sigmoid(g[:, 0 * H:1 * H])
        f = jax.nn.sigmoid(g[:, 1 * H:2 * H])
        gg = jnp.tanh(g[:, 2 * H:3 * H])
        o = jax.nn.sigmoid(g[:, 3 * H:4 * H])
        c = f * c + i * gg
        h = o * jnp.tanh(c)
        return h, c

    outs = []
    out = jnp.zeros((B, 1), jnp.float32)
    for t in range(S):
        xt = x[:, t:t + 1]
        h1, c1 = cell(xt, h1, c1, wih1, whh1, b1)
        h2, c2 = cell(h1, h2, c2, wih2, whh2, b2)
        out = h2 @ wlin + blin
        outs.append(out)
    for _ in range(predict):
        h1, c1 = cell(out, h1, c1, wih1, whh1, b1)
        h2, c2 = cell(h1, h2, c2, wih2, whh2, b2)
        out = h2 @ wlin + blin
        outs.append(out)
    return jnp.concatenate(outs, axis=1)   # stack on dim 1, squeeze(2)


if __name__ == "__main__":
    key = jax.random.PRNGKey(0)
    k_param, k_x = jax.random.split(key)

    B, S, PREDICT = 2, 8, 4
    params = init_params(k_param)
    padded_params = prepare_params(params)   # hoisted: weights padded/fused once

    # Sine-like input: (batch, seq) scalars.
    t = jnp.arange(S, dtype=jnp.float32)
    phase = jax.random.uniform(k_x, (B, 1), jnp.float32, 0.0, 2.0 * jnp.pi)
    x = jnp.sin(0.5 * t[None, :] + phase)

    # Teacher-forced only.
    out0 = sine_lstm_forward(x, padded_params, predict=0)
    jax.block_until_ready(out0)
    ref0 = reference_forward(x, params, predict=0)
    assert out0.shape == (B, S), out0.shape
    assert jnp.allclose(out0, ref0, atol=1e-4, rtol=1e-4), \
        float(jnp.max(jnp.abs(out0 - ref0)))

    # Teacher-forced + free-running prediction (exercises the rank-1 folded
    # feedback path and verifies padded gate lanes never leak into real lanes).
    out1 = sine_lstm_forward(x, padded_params, predict=PREDICT)
    jax.block_until_ready(out1)
    ref1 = reference_forward(x, params, predict=PREDICT)
    assert out1.shape == (B, S + PREDICT), out1.shape
    assert jnp.allclose(out1, ref1, atol=1e-4, rtol=1e-4), \
        float(jnp.max(jnp.abs(out1 - ref1)))

    print("KERNEL_OK")
</pallas_src>

<mosaic_0001>
module attributes {stable_mosaic.version = 11 : i64} {
  func.func @sine_lstm_kernel(%arg0: memref<8x2xf32, #tpu.memory_space<vmem>>, %arg1: memref<1x512xf32, #tpu.memory_space<vmem>>, %arg2: memref<1x512xf32, #tpu.memory_space<vmem>>, %arg3: memref<128x1024xf32, #tpu.memory_space<vmem>>, %arg4: memref<1x512xf32, #tpu.memory_space<vmem>>, %arg5: memref<128x512xf32, #tpu.memory_space<vmem>>, %arg6: memref<128x1024xf32, #tpu.memory_space<vmem>>, %arg7: memref<1x128xf32, #tpu.memory_space<vmem>>, %arg8: memref<1x1xf32, #tpu.memory_space<vmem>>, %arg9: memref<2x8xf32, #tpu.memory_space<vmem>>) attributes {dimension_semantics = [], scalar_prefetch = 0 : i64, scratch_operands = 0 : i64, tpu.core_type = #tpu.core_type<tc>} {
    %c0 = arith.constant 0 : index
    %c0_0 = arith.constant 0 : index
    %0 = vector.load %arg0[%c0, %c0_0] : memref<8x2xf32, #tpu.memory_space<vmem>>, vector<8x2xf32>
    %c0_1 = arith.constant 0 : index
    %c0_2 = arith.constant 0 : index
    %1 = vector.load %arg1[%c0_1, %c0_2] : memref<1x512xf32, #tpu.memory_space<vmem>>, vector<1x512xf32>
    %c0_3 = arith.constant 0 : index
    %c0_4 = arith.constant 0 : index
    %2 = vector.load %arg2[%c0_3, %c0_4] : memref<1x512xf32, #tpu.memory_space<vmem>>, vector<1x512xf32>
    %c0_5 = arith.constant 0 : index
    %c0_6 = arith.constant 0 : index
    %3 = vector.load %arg3[%c0_5, %c0_6] : memref<128x1024xf32, #tpu.memory_space<vmem>>, vector<128x1024xf32>
    %c0_7 = arith.constant 0 : index
    %c0_8 = arith.constant 0 : index
    %4 = vector.load %arg4[%c0_7, %c0_8] : memref<1x512xf32, #tpu.memory_space<vmem>>, vector<1x512xf32>
    %c0_9 = arith.constant 0 : index
    %c0_10 = arith.constant 0 : index
    %5 = vector.load %arg5[%c0_9, %c0_10] : memref<128x512xf32, #tpu.memory_space<vmem>>, vector<128x512xf32>
    %c0_11 = arith.constant 0 : index
    %c0_12 = arith.constant 0 : index
    %6 = vector.load %arg7[%c0_11, %c0_12] : memref<1x128xf32, #tpu.memory_space<vmem>>, vector<1x128xf32>
    %c0_13 = arith.constant 0 : index
    %c0_14 = arith.constant 0 : index
    %7 = vector.load %arg8[%c0_13, %c0_14] : memref<1x1xf32, #tpu.memory_space<vmem>>, vector<1x1xf32>
    %8 = vector.shape_cast %0 : vector<8x2xf32> to vector<8x2x1xf32>
    %9 = vector.shape_cast %1 : vector<1x512xf32> to vector<1x1x512xf32>
    %10 = vector.broadcast %8 : vector<8x2x1xf32> to vector<8x2x512xf32>
    %11 = vector.broadcast %9 : vector<1x1x512xf32> to vector<8x2x512xf32>
    %12 = arith.mulf %10, %11 : vector<8x2x512xf32>
    %13 = vector.shape_cast %2 : vector<1x512xf32> to vector<1x1x512xf32>
    %14 = vector.broadcast %13 : vector<1x1x512xf32> to vector<8x2x512xf32>
    %15 = arith.addf %12, %14 : vector<8x2x512xf32>
    %16 = vector.shape_cast %4 : vector<1x512xf32> to vector<1x512xf32>
    %17 = vector.broadcast %16 : vector<1x512xf32> to vector<2x512xf32>
    %cst = arith.constant 0.000000e+00 : f32
    %18 = vector.broadcast %cst : f32 to vector<2x128xf32>
    %cst_15 = arith.constant 0.000000e+00 : f32
    %19 = vector.broadcast %cst_15 : f32 to vector<2x128xf32>
    %cst_16 = arith.constant 0.000000e+00 : f32
    %20 = vector.broadcast %cst_16 : f32 to vector<2x512xf32>
    %cst_17 = arith.constant 0.000000e+00 : f32
    %21 = vector.broadcast %cst_17 : f32 to vector<2x512xf32>
    %22 = vector.extract_strided_slice %15 {offsets = [0, 0, 0], sizes = [1, 2, 512], strides = [1, 1, 1]} : vector<8x2x512xf32> to vector<1x2x512xf32>
    %23 = vector.shape_cast %22 : vector<1x2x512xf32> to vector<2x512xf32>
    %24 = arith.addf %23, %20 : vector<2x512xf32>
    %25 = vector.extract_strided_slice %24 {offsets = [0, 0], sizes = [2, 128], strides = [1, 1]} : vector<2x512xf32> to vector<2x128xf32>
    %26 = arith.negf %25 : vector<2x128xf32>
    %27 = math.exp %26 : vector<2x128xf32>
    %cst_18 = arith.constant 1.000000e+00 : f32
    %28 = vector.broadcast %cst_18 : f32 to vector<2x128xf32>
    %29 = arith.addf %28, %27 : vector<2x128xf32>
    %30 = arith.divf %28, %29 : vector<2x128xf32>
    %31 = vector.extract_strided_slice %24 {offsets = [0, 128], sizes = [2, 128], strides = [1, 1]} : vector<2x512xf32> to vector<2x128xf32>
    %32 = arith.negf %31 : vector<2x128xf32>
    %33 = math.exp %32 : vector<2x128xf32>
    %cst_19 = arith.constant 1.000000e+00 : f32
    %34 = vector.broadcast %cst_19 : f32 to vector<2x128xf32>
    %35 = arith.addf %34, %33 : vector<2x128xf32>
    %36 = arith.divf %34, %35 : vector<2x128xf32>
    %37 = vector.extract_strided_slice %24 {offsets = [0, 256], sizes = [2, 128], strides = [1, 1]} : vector<2x512xf32> to vector<2x128xf32>
    %38 = math.tanh %37 : vector<2x128xf32>
    %39 = vector.extract_strided_slice %24 {offsets = [0, 384], sizes = [2, 128], strides = [1, 1]} : vector<2x512xf32> to vector<2x128xf32>
    %40 = arith.negf %39 : vector<2x128xf32>
    %41 = math.exp %40 : vector<2x128xf32>
    %cst_20 = arith.constant 1.000000e+00 : f32
    %42 = vector.broadcast %cst_20 : f32 to vector<2x128xf32>
    %43 = arith.addf %42, %41 : vector<2x128xf32>
    %44 = arith.divf %42, %43 : vector<2x128xf32>
    %45 = arith.mulf %36, %18 : vector<2x128xf32>
    %46 = arith.mulf %30, %38 : vector<2x128xf32>
    %47 = arith.addf %45, %46 : vector<2x128xf32>
    %48 = math.tanh %47 : vector<2x128xf32>
    %49 = arith.mulf %44, %48 : vector<2x128xf32>
    %cst_21 = arith.constant dense<0.000000e+00> : vector<2x1024xf32>
    %50 = tpu.matmul %49, %3, %cst_21 {dimension_numbers = #tpu.dot_dimension_numbers<[1], [0], [0], [1], [0, 0, 1, 1], [], []>} : vector<2x128xf32>, vector<128x1024xf32>, vector<2x1024xf32> -> vector<2x1024xf32>
    %51 = vector.extract_strided_slice %50 {offsets = [0, 0], sizes = [2, 512], strides = [1, 1]} : vector<2x1024xf32> to vector<2x512xf32>
    %52 = arith.addf %51, %21 : vector<2x512xf32>
    %53 = arith.addf %52, %17 : vector<2x512xf32>
    %54 = vector.extract_strided_slice %50 {offsets = [0, 512], sizes = [2, 512], strides = [1, 1]} : vector<2x1024xf32> to vector<2x512xf32>
    %55 = vector.extract_strided_slice %53 {offsets = [0, 0], sizes = [2, 128], strides = [1, 1]} : vector<2x512xf32> to vector<2x128xf32>
    %56 = arith.negf %55 : vector<2x128xf32>
    %57 = math.exp %56 : vector<2x128xf32>
    %cst_22 = arith.constant 1.000000e+00 : f32
    %58 = vector.broadcast %cst_22 : f32 to vector<2x128xf32>
    %59 = arith.addf %58, %57 : vector<2x128xf32>
    %60 = arith.divf %58, %59 : vector<2x128xf32>
    %61 = vector.extract_strided_slice %53 {offsets = [0, 128], sizes = [2, 128], strides = [1, 1]} : vector<2x512xf32> to vector<2x128xf32>
    %62 = arith.negf %61 : vector<2x128xf32>
    %63 = math.exp %62 : vector<2x128xf32>
    %cst_23 = arith.constant 1.000000e+00 : f32
    %64 = vector.broadcast %cst_23 : f32 to vector<2x128xf32>
    %65 = arith.addf %64, %63 : vector<2x128xf32>
    %66 = arith.divf %64, %65 : vector<2x128xf32>
    %67 = vector.extract_strided_slice %53 {offsets = [0, 256], sizes = [2, 128], strides = [1, 1]} : vector<2x512xf32> to vector<2x128xf32>
    %68 = math.tanh %67 : vector<2x128xf32>
    %69 = vector.extract_strided_slice %53 {offsets = [0, 384], sizes = [2, 128], strides = [1, 1]} : vector<2x512xf32> to vector<2x128xf32>
    %70 = arith.negf %69 : vector<2x128xf32>
    %71 = math.exp %70 : vector<2x128xf32>
    %cst_24 = arith.constant 1.000000e+00 : f32
    %72 = vector.broadcast %cst_24 : f32 to vector<2x128xf32>
    %73 = arith.addf %72, %71 : vector<2x128xf32>
    %74 = arith.divf %72, %73 : vector<2x128xf32>
    %75 = arith.mulf %66, %19 : vector<2x128xf32>
    %76 = arith.mulf %60, %68 : vector<2x128xf32>
    %77 = arith.addf %75, %76 : vector<2x128xf32>
    %78 = math.tanh %77 : vector<2x128xf32>
    %79 = arith.mulf %74, %78 : vector<2x128xf32>
    %cst_25 = arith.constant dense<0.000000e+00> : vector<2x512xf32>
    %80 = tpu.matmul %79, %5, %cst_25 {dimension_numbers = #tpu.dot_dimension_numbers<[1], [0], [0], [1], [0, 0, 1, 1], [], []>} : vector<2x128xf32>, vector<128x512xf32>, vector<2x512xf32> -> vector<2x512xf32>
    %81 = vector.broadcast %6 : vector<1x128xf32> to vector<2x128xf32>
    %82 = arith.mulf %79, %81 : vector<2x128xf32>
    %cst_26 = arith.constant dense<0.000000e+00> : vector<2xf32>
    %83 = vector.multi_reduction <add>, %82, %cst_26 [1] : vector<2x128xf32> to vector<2xf32>
    %84 = vector.shape_cast %83 : vector<2xf32> to vector<2x1xf32>
    %85 = vector.broadcast %7 : vector<1x1xf32> to vector<2x1xf32>
    %86 = arith.addf %84, %85 : vector<2x1xf32>
    %87 = vector.extract_strided_slice %15 {offsets = [1, 0, 0], sizes = [1, 2, 512], strides = [1, 1, 1]} : vector<8x2x512xf32> to vector<1x2x512xf32>
    %88 = vector.shape_cast %87 : vector<1x2x512xf32> to vector<2x512xf32>
    %89 = arith.addf %88, %54 : vector<2x512xf32>
    %90 = vector.extract_strided_slice %89 {offsets = [0, 0], sizes = [2, 128], strides = [1, 1]} : vector<2x512xf32> to vector<2x128xf32>
    %91 = arith.negf %90 : vector<2x128xf32>
    %92 = math.exp %91 : vector<2x128xf32>
    %cst_27 = arith.constant 1.000000e+00 : f32
    %93 = vector.broadcast %cst_27 : f32 to vector<2x128xf32>
    %94 = arith.addf %93, %92 : vector<2x128xf32>
    %95 = arith.divf %93, %94 : vector<2x128xf32>
    %96 = vector.extract_strided_slice %89 {offsets = [0, 128], sizes = [2, 128], strides = [1, 1]} : vector<2x512xf32> to vector<2x128xf32>
    %97 = arith.negf %96 : vector<2x128xf32>
    %98 = math.exp %97 : vector<2x128xf32>
    %cst_28 = arith.constant 1.000000e+00 : f32
    %99 = vector.broadcast %cst_28 : f32 to vector<2x128xf32>
    %100 = arith.addf %99, %98 : vector<2x128xf32>
    %101 = arith.divf %99, %100 : vector<2x128xf32>
    %102 = vector.extract_strided_slice %89 {offsets = [0, 256], sizes = [2, 128], strides = [1, 1]} : vector<2x512xf32> to vector<2x128xf32>
    %103 = math.tanh %102 : vector<2x128xf32>
    %104 = vector.extract_strided_slice %89 {offsets = [0, 384], sizes = [2, 128], strides = [1, 1]} : vector<2x512xf32> to vector<2x128xf32>
    %105 = arith.negf %104 : vector<2x128xf32>
    %106 = math.exp %105 : vector<2x128xf32>
    %cst_29 = arith.constant 1.000000e+00 : f32
    %107 = vector.broadcast %cst_29 : f32 to vector<2x128xf32>
    %108 = arith.addf %107, %106 : vector<2x128xf32>
    %109 = arith.divf %107, %108 : vector<2x128xf32>
    %110 = arith.mulf %101, %47 : vector<2x128xf32>
    %111 = arith.mulf %95, %103 : vector<2x128xf32>
    %112 = arith.addf %110, %111 : vector<2x128xf32>
    %113 = math.tanh %112 : vector<2x128xf32>
    %114 = arith.mulf %109, %113 : vector<2x128xf32>
    %cst_30 = arith.constant dense<0.000000e+00> : vector<2x1024xf32>
    %115 = tpu.matmul %114, %3, %cst_30 {dimension_numbers = #tpu.dot_dimension_numbers<[1], [0], [0], [1], [0, 0, 1, 1], [], []>} : vector<2x128xf32>, vector<128x1024xf32>, vector<2x1024xf32> -> vector<2x1024xf32>
    %116 = vector.extract_strided_slice %115 {offsets = [0, 0], sizes = [2, 512], strides = [1, 1]} : vector<2x1024xf32> to vector<2x512xf32>
    %117 = arith.addf %116, %80 : vector<2x512xf32>
    %118 = arith.addf %117, %17 : vector<2x512xf32>
    %119 = vector.extract_strided_slice %115 {offsets = [0, 512], sizes = [2, 512], strides = [1, 1]} : vector<2x1024xf32> to vector<2x512xf32>
    %120 = vector.extract_strided_slice %118 {offsets = [0, 0], sizes = [2, 128], strides = [1, 1]} : vector<2x512xf32> to vector<2x128xf32>
    %121 = arith.negf %120 : vector<2x128xf32>
    %122 = math.exp %121 : vector<2x128xf32>
    %cst_31 = arith.constant 1.000000e+00 : f32
    %123 = vector.broadcast %cst_31 : f32 to vector<2x128xf32>
    %124 = arith.addf %123, %122 : vector<2x128xf32>
    %125 = arith.divf %123, %124 : vector<2x128xf32>
    %126 = vector.extract_strided_slice %118 {offsets = [0, 128], sizes = [2, 128], strides = [1, 1]} : vector<2x512xf32> to vector<2x128xf32>
    %127 = arith.negf %126 : vector<2x128xf32>
    %128 = math.exp %127 : vector<2x128xf32>
    %cst_32 = arith.constant 1.000000e+00 : f32
    %129 = vector.broadcast %cst_32 : f32 to vector<2x128xf32>
    %130 = arith.addf %129, %128 : vector<2x128xf32>
    %131 = arith.divf %129, %130 : vector<2x128xf32>
    %132 = vector.extract_strided_slice %118 {offsets = [0, 256], sizes = [2, 128], strides = [1, 1]} : vector<2x512xf32> to vector<2x128xf32>
    %133 = math.tanh %132 : vector<2x128xf32>
    %134 = vector.extract_strided_slice %118 {offsets = [0, 384], sizes = [2, 128], strides = [1, 1]} : vector<2x512xf32> to vector<2x128xf32>
    %135 = arith.negf %134 : vector<2x128xf32>
    %136 = math.exp %135 : vector<2x128xf32>
    %cst_33 = arith.constant 1.000000e+00 : f32
    %137 = vector.broadcast %cst_33 : f32 to vector<2x128xf32>
    %138 = arith.addf %137, %136 : vector<2x128xf32>
    %139 = arith.divf %137, %138 : vector<2x128xf32>
    %140 = arith.mulf %131, %77 : vector<2x128xf32>
    %141 = arith.mulf %125, %133 : vector<2x128xf32>
    %142 = arith.addf %140, %141 : vector<2x128xf32>
    %143 = math.tanh %142 : vector<2x128xf32>
    %144 = arith.mulf %139, %143 : vector<2x128xf32>
    %cst_34 = arith.constant dense<0.000000e+00> : vector<2x512xf32>
    %145 = tpu.matmul %144, %5, %cst_34 {dimension_numbers = #tpu.dot_dimension_numbers<[1], [0], [0], [1], [0, 0, 1, 1], [], []>} : vector<2x128xf32>, vector<128x512xf32>, vector<2x512xf32> -> vector<2x512xf32>
    %146 = vector.broadcast %6 : vector<1x128xf32> to vector<2x128xf32>
    %147 = arith.mulf %144, %146 : vector<2x128xf32>
    %cst_35 = arith.constant dense<0.000000e+00> : vector<2xf32>
    %148 = vector.multi_reduction <add>, %147, %cst_35 [1] : vector<2x128xf32> to vector<2xf32>
    %149 = vector.shape_cast %148 : vector<2xf32> to vector<2x1xf32>
    %150 = vector.broadcast %7 : vector<1x1xf32> to vector<2x1xf32>
    %151 = arith.addf %149, %150 : vector<2x1xf32>
    %152 = vector.extract_strided_slice %15 {offsets = [2, 0, 0], sizes = [1, 2, 512], strides = [1, 1, 1]} : vector<8x2x512xf32> to vector<1x2x512xf32>
    %153 = vector.shape_cast %152 : vector<1x2x512xf32> to vector<2x512xf32>
    %154 = arith.addf %153, %119 : vector<2x512xf32>
    %155 = vector.extract_strided_slice %154 {offsets = [0, 0], sizes = [2, 128], strides = [1, 1]} : vector<2x512xf32> to vector<2x128xf32>
    %156 = arith.negf %155 : vector<2x128xf32>
    %157 = math.exp %156 : vector<2x128xf32>
    %cst_36 = arith.constant 1.000000e+00 : f32
    %158 = vector.broadcast %cst_36 : f32 to vector<2x128xf32>
    %159 = arith.addf %158, %157 : vector<2x128xf32>
    %160 = arith.divf %158, %159 : vector<2x128xf32>
    %161 = vector.extract_strided_slice %154 {offsets = [0, 128], sizes = [2, 128], strides = [1, 1]} : vector<2x512xf32> to vector<2x128xf32>
    %162 = arith.negf %161 : vector<2x128xf32>
    %163 = math.exp %162 : vector<2x128xf32>
    %cst_37 = arith.constant 1.000000e+00 : f32
    %164 = vector.broadcast %cst_37 : f32 to vector<2x128xf32>
    %165 = arith.addf %164, %163 : vector<2x128xf32>
    %166 = arith.divf %164, %165 : vector<2x128xf32>
    %167 = vector.extract_strided_slice %154 {offsets = [0, 256], sizes = [2, 128], strides = [1, 1]} : vector<2x512xf32> to vector<2x128xf32>
    %168 = math.tanh %167 : vector<2x128xf32>
    %169 = vector.extract_strided_slice %154 {offsets = [0, 384], sizes = [2, 128], strides = [1, 1]} : vector<2x512xf32> to vector<2x128xf32>
    %170 = arith.negf %169 : vector<2x128xf32>
    %171 = math.exp %170 : vector<2x128xf32>
    %cst_38 = arith.constant 1.000000e+00 : f32
    %172 = vector.broadcast %cst_38 : f32 to vector<2x128xf32>
    %173 = arith.addf %172, %171 : vector<2x128xf32>
    %174 = arith.divf %172, %173 : vector<2x128xf32>
    %175 = arith.mulf %166, %112 : vector<2x128xf32>
    %176 = arith.mulf %160, %168 : vector<2x128xf32>
    %177 = arith.addf %175, %176 : vector<2x128xf32>
    %178 = math.tanh %177 : vector<2x128xf32>
    %179 = arith.mulf %174, %178 : vector<2x128xf32>
    %cst_39 = arith.constant dense<0.000000e+00> : vector<2x1024xf32>
    %180 = tpu.matmul %179, %3, %cst_39 {dimension_numbers = #tpu.dot_dimension_numbers<[1], [0], [0], [1], [0, 0, 1, 1], [], []>} : vector<2x128xf32>, vector<128x1024xf32>, vector<2x1024xf32> -> vector<2x1024xf32>
    %181 = vector.extract_strided_slice %180 {offsets = [0, 0], sizes = [2, 512], strides = [1, 1]} : vector<2x1024xf32> to vector<2x512xf32>
    %182 = arith.addf %181, %145 : vector<2x512xf32>
    %183 = arith.addf %182, %17 : vector<2x512xf32>
    %184 = vector.extract_strided_slice %180 {offsets = [0, 512], sizes = [2, 512], strides = [1, 1]} : vector<2x1024xf32> to vector<2x512xf32>
    %185 = vector.extract_strided_slice %183 {offsets = [0, 0], sizes = [2, 128], strides = [1, 1]} : vector<2x512xf32> to vector<2x128xf32>
    %186 = arith.negf %185 : vector<2x128xf32>
    %187 = math.exp %186 : vector<2x128xf32>
    %cst_40 = arith.constant 1.000000e+00 : f32
    %188 = vector.broadcast %cst_40 : f32 to vector<2x128xf32>
    %189 = arith.addf %188, %187 : vector<2x128xf32>
    %190 = arith.divf %188, %189 : vector<2x128xf32>
    %191 = vector.extract_strided_slice %183 {offsets = [0, 128], sizes = [2, 128], strides = [1, 1]} : vector<2x512xf32> to vector<2x128xf32>
    %192 = arith.negf %191 : vector<2x128xf32>
    %193 = math.exp %192 : vector<2x128xf32>
    %cst_41 = arith.constant 1.000000e+00 : f32
    %194 = vector.broadcast %cst_41 : f32 to vector<2x128xf32>
    %195 = arith.addf %194, %193 : vector<2x128xf32>
    %196 = arith.divf %194, %195 : vector<2x128xf32>
    %197 = vector.extract_strided_slice %183 {offsets = [0, 256], sizes = [2, 128], strides = [1, 1]} : vector<2x512xf32> to vector<2x128xf32>
    %198 = math.tanh %197 : vector<2x128xf32>
    %199 = vector.extract_strided_slice %183 {offsets = [0, 384], sizes = [2, 128], strides = [1, 1]} : vector<2x512xf32> to vector<2x128xf32>
    %200 = arith.negf %199 : vector<2x128xf32>
    %201 = math.exp %200 : vector<2x128xf32>
    %cst_42 = arith.constant 1.000000e+00 : f32
    %202 = vector.broadcast %cst_42 : f32 to vector<2x128xf32>
    %203 = arith.addf %202, %201 : vector<2x128xf32>
    %204 = arith.divf %202, %203 : vector<2x128xf32>
    %205 = arith.mulf %196, %142 : vector<2x128xf32>
    %206 = arith.mulf %190, %198 : vector<2x128xf32>
    %207 = arith.addf %205, %206 : vector<2x128xf32>
    %208 = math.tanh %207 : vector<2x128xf32>
    %209 = arith.mulf %204, %208 : vector<2x128xf32>
    %cst_43 = arith.constant dense<0.000000e+00> : vector<2x512xf32>
    %210 = tpu.matmul %209, %5, %cst_43 {dimension_numbers = #tpu.dot_dimension_numbers<[1], [0], [0], [1], [0, 0, 1, 1], [], []>} : vector<2x128xf32>, vector<128x512xf32>, vector<2x512xf32> -> vector<2x512xf32>
    %211 = vector.broadcast %6 : vector<1x128xf32> to vector<2x128xf32>
    %212 = arith.mulf %209, %211 : vector<2x128xf32>
    %cst_44 = arith.constant dense<0.000000e+00> : vector<2xf32>
    %213 = vector.multi_reduction <add>, %212, %cst_44 [1] : vector<2x128xf32> to vector<2xf32>
    %214 = vector.shape_cast %213 : vector<2xf32> to vector<2x1xf32>
    %215 = vector.broadcast %7 : vector<1x1xf32> to vector<2x1xf32>
    %216 = arith.addf %214, %215 : vector<2x1xf32>
    %217 = vector.extract_strided_slice %15 {offsets = [3, 0, 0], sizes = [1, 2, 512], strides = [1, 1, 1]} : vector<8x2x512xf32> to vector<1x2x512xf32>
    %218 = vector.shape_cast %217 : vector<1x2x512xf32> to vector<2x512xf32>
    %219 = arith.addf %218, %184 : vector<2x512xf32>
    %220 = vector.extract_strided_slice %219 {offsets = [0, 0], sizes = [2, 128], strides = [1, 1]} : vector<2x512xf32> to vector<2x128xf32>
    %221 = arith.negf %220 : vector<2x128xf32>
    %222 = math.exp %221 : vector<2x128xf32>
    %cst_45 = arith.constant 1.000000e+00 : f32
    %223 = vector.broadcast %cst_45 : f32 to vector<2x128xf32>
    %224 = arith.addf %223, %222 : vector<2x128xf32>
    %225 = arith.divf %223, %224 : vector<2x128xf32>
    %226 = vector.extract_strided_slice %219 {offsets = [0, 128], sizes = [2, 128], strides = [1, 1]} : vector<2x512xf32> to vector<2x128xf32>
    %227 = arith.negf %226 : vector<2x128xf32>
    %228 = math.exp %227 : vector<2x128xf32>
    %cst_46 = arith.constant 1.000000e+00 : f32
    %229 = vector.broadcast %cst_46 : f32 to vector<2x128xf32>
    %230 = arith.addf %229, %228 : vector<2x128xf32>
    %231 = arith.divf %229, %230 : vector<2x128xf32>
    %232 = vector.extract_strided_slice %219 {offsets = [0, 256], sizes = [2, 128], strides = [1, 1]} : vector<2x512xf32> to vector<2x128xf32>
    %233 = math.tanh %232 : vector<2x128xf32>
    %234 = vector.extract_strided_slice %219 {offsets = [0, 384], sizes = [2, 128], strides = [1, 1]} : vector<2x512xf32> to vector<2x128xf32>
    %235 = arith.negf %234 : vector<2x128xf32>
    %236 = math.exp %235 : vector<2x128xf32>
    %cst_47 = arith.constant 1.000000e+00 : f32
    %237 = vector.broadcast %cst_47 : f32 to vector<2x128xf32>
    %238 = arith.addf %237, %236 : vector<2x128xf32>
    %239 = arith.divf %237, %238 : vector<2x128xf32>
    %240 = arith.mulf %231, %177 : vector<2x128xf32>
    %241 = arith.mulf %225, %233 : vector<2x128xf32>
    %242 = arith.addf %240, %241 : vector<2x128xf32>
    %243 = math.tanh %242 : vector<2x128xf32>
    %244 = arith.mulf %239, %243 : vector<2x128xf32>
    %cst_48 = arith.constant dense<0.000000e+00> : vector<2x1024xf32>
    %245 = tpu.matmul %244, %3, %cst_48 {dimension_numbers = #tpu.dot_dimension_numbers<[1], [0], [0], [1], [0, 0, 1, 1], [], []>} : vector<2x128xf32>, vector<128x1024xf32>, vector<2x1024xf32> -> vector<2x1024xf32>
    %246 = vector.extract_strided_slice %245 {offsets = [0, 0], sizes = [2, 512], strides = [1, 1]} : vector<2x1024xf32> to vector<2x512xf32>
    %247 = arith.addf %246, %210 : vector<2x512xf32>
    %248 = arith.addf %247, %17 : vector<2x512xf32>
    %249 = vector.extract_strided_slice %245 {offsets = [0, 512], sizes = [2, 512], strides = [1, 1]} : vector<2x1024xf32> to vector<2x512xf32>
    %250 = vector.extract_strided_slice %248 {offsets = [0, 0], sizes = [2, 128], strides = [1, 1]} : vector<2x512xf32> to vector<2x128xf32>
    %251 = arith.negf %250 : vector<2x128xf32>
    %252 = math.exp %251 : vector<2x128xf32>
    %cst_49 = arith.constant 1.000000e+00 : f32
    %253 = vector.broadcast %cst_49 : f32 to vector<2x128xf32>
    %254 = arith.addf %253, %252 : vector<2x128xf32>
    %255 = arith.divf %253, %254 : vector<2x128xf32>
    %256 = vector.extract_strided_slice %248 {offsets = [0, 128], sizes = [2, 128], strides = [1, 1]} : vector<2x512xf32> to vector<2x128xf32>
    %257 = arith.negf %256 : vector<2x128xf32>
    %258 = math.exp %257 : vector<2x128xf32>
    %cst_50 = arith.constant 1.000000e+00 : f32
    %259 = vector.broadcast %cst_50 : f32 to vector<2x128xf32>
    %260 = arith.addf %259, %258 : vector<2x128xf32>
    %261 = arith.divf %259, %260 : vector<2x128xf32>
    %262 = vector.extract_strided_slice %248 {offsets = [0, 256], sizes = [2, 128], strides = [1, 1]} : vector<2x512xf32> to vector<2x128xf32>
    %263 = math.tanh %262 : vector<2x128xf32>
    %264 = vector.extract_strided_slice %248 {offsets = [0, 384], sizes = [2, 128], strides = [1, 1]} : vector<2x512xf32> to vector<2x128xf32>
    %265 = arith.negf %264 : vector<2x128xf32>
    %266 = math.exp %265 : vector<2x128xf32>
    %cst_51 = arith.constant 1.000000e+00 : f32
    %267 = vector.broadcast %cst_51 : f32 to vector<2x128xf32>
    %268 = arith.addf %267, %266 : vector<2x128xf32>
    %269 = arith.divf %267, %268 : vector<2x128xf32>
    %270 = arith.mulf %261, %207 : vector<2x128xf32>
    %271 = arith.mulf %255, %263 : vector<2x128xf32>
    %272 = arith.addf %270, %271 : vector<2x128xf32>
    %273 = math.tanh %272 : vector<2x128xf32>
    %274 = arith.mulf %269, %273 : vector<2x128xf32>
    %cst_52 = arith.constant dense<0.000000e+00> : vector<2x512xf32>
    %275 = tpu.matmul %274, %5, %cst_52 {dimension_numbers = #tpu.dot_dimension_numbers<[1], [0], [0], [1], [0, 0, 1, 1], [], []>} : vector<2x128xf32>, vector<128x512xf32>, vector<2x512xf32> -> vector<2x512xf32>
    %276 = vector.broadcast %6 : vector<1x128xf32> to vector<2x128xf32>
    %277 = arith.mulf %274, %276 : vector<2x128xf32>
    %cst_53 = arith.constant dense<0.000000e+00> : vector<2xf32>
    %278 = vector.multi_reduction <add>, %277, %cst_53 [1] : vector<2x128xf32> to vector<2xf32>
    %279 = vector.shape_cast %278 : vector<2xf32> to vector<2x1xf32>
    %280 = vector.broadcast %7 : vector<1x1xf32> to vector<2x1xf32>
    %281 = arith.addf %279, %280 : vector<2x1xf32>
    %282 = vector.extract_strided_slice %15 {offsets = [4, 0, 0], sizes = [1, 2, 512], strides = [1, 1, 1]} : vector<8x2x512xf32> to vector<1x2x512xf32>
    %283 = vector.shape_cast %282 : vector<1x2x512xf32> to vector<2x512xf32>
    %284 = arith.addf %283, %249 : vector<2x512xf32>
    %285 = vector.extract_strided_slice %284 {offsets = [0, 0], sizes = [2, 128], strides = [1, 1]} : vector<2x512xf32> to vector<2x128xf32>
    %286 = arith.negf %285 : vector<2x128xf32>
    %287 = math.exp %286 : vector<2x128xf32>
    %cst_54 = arith.constant 1.000000e+00 : f32
    %288 = vector.broadcast %cst_54 : f32 to vector<2x128xf32>
    %289 = arith.addf %288, %287 : vector<2x128xf32>
    %290 = arith.divf %288, %289 : vector<2x128xf32>
    %291 = vector.extract_strided_slice %284 {offsets = [0, 128], sizes = [2, 128], strides = [1, 1]} : vector<2x512xf32> to vector<2x128xf32>
    %292 = arith.negf %291 : vector<2x128xf32>
    %293 = math.exp %292 : vector<2x128xf32>
    %cst_55 = arith.constant 1.000000e+00 : f32
    %294 = vector.broadcast %cst_55 : f32 to vector<2x128xf32>
    %295 = arith.addf %294, %293 : vector<2x128xf32>
    %296 = arith.divf %294, %295 : vector<2x128xf32>
    %297 = vector.extract_strided_slice %284 {offsets = [0, 256], sizes = [2, 128], strides = [1, 1]} : vector<2x512xf32> to vector<2x128xf32>
    %298 = math.tanh %297 : vector<2x128xf32>
    %299 = vector.extract_strided_slice %284 {offsets = [0, 384], sizes = [2, 128], strides = [1, 1]} : vector<2x512xf32> to vector<2x128xf32>
    %300 = arith.negf %299 : vector<2x128xf32>
    %301 = math.exp %300 : vector<2x128xf32>
    %cst_56 = arith.constant 1.000000e+00 : f32
    %302 = vector.broadcast %cst_56 : f32 to vector<2x128xf32>
    %303 = arith.addf %302, %301 : vector<2x128xf32>
    %304 = arith.divf %302, %303 : vector<2x128xf32>
    %305 = arith.mulf %296, %242 : vector<2x128xf32>
    %306 = arith.mulf %290, %298 : vector<2x128xf32>
    %307 = arith.addf %305, %306 : vector<2x128xf32>
    %308 = math.tanh %307 : vector<2x128xf32>
    %309 = arith.mulf %304, %308 : vector<2x128xf32>
    %cst_57 = arith.constant dense<0.000000e+00> : vector<2x1024xf32>
    %310 = tpu.matmul %309, %3, %cst_57 {dimension_numbers = #tpu.dot_dimension_numbers<[1], [0], [0], [1], [0, 0, 1, 1], [], []>} : vector<2x128xf32>, vector<128x1024xf32>, vector<2x1024xf32> -> vector<2x1024xf32>
    %311 = vector.extract_strided_slice %310 {offsets = [0, 0], sizes = [2, 512], strides = [1, 1]} : vector<2x1024xf32> to vector<2x512xf32>
    %312 = arith.addf %311, %275 : vector<2x512xf32>
    %313 = arith.addf %312, %17 : vector<2x512xf32>
    %314 = vector.extract_strided_slice %310 {offsets = [0, 512], sizes = [2, 512], strides = [1, 1]} : vector<2x1024xf32> to vector<2x512xf32>
    %315 = vector.extract_strided_slice %313 {offsets = [0, 0], sizes = [2, 128], strides = [1, 1]} : vector<2x512xf32> to vector<2x128xf32>
    %316 = arith.negf %315 : vector<2x128xf32>
    %317 = math.exp %316 : vector<2x128xf32>
    %cst_58 = arith.constant 1.000000e+00 : f32
    %318 = vector.broadcast %cst_58 : f32 to vector<2x128xf32>
    %319 = arith.addf %318, %317 : vector<2x128xf32>
    %320 = arith.divf %318, %319 : vector<2x128xf32>
    %321 = vector.extract_strided_slice %313 {offsets = [0, 128], sizes = [2, 128], strides = [1, 1]} : vector<2x512xf32> to vector<2x128xf32>
    %322 = arith.negf %321 : vector<2x128xf32>
    %323 = math.exp %322 : vector<2x128xf32>
    %cst_59 = arith.constant 1.000000e+00 : f32
    %324 = vector.broadcast %cst_59 : f32 to vector<2x128xf32>
    %325 = arith.addf %324, %323 : vector<2x128xf32>
    %326 = arith.divf %324, %325 : vector<2x128xf32>
    %327 = vector.extract_strided_slice %313 {offsets = [0, 256], sizes = [2, 128], strides = [1, 1]} : vector<2x512xf32> to vector<2x128xf32>
    %328 = math.tanh %327 : vector<2x128xf32>
    %329 = vector.extract_strided_slice %313 {offsets = [0, 384], sizes = [2, 128], strides = [1, 1]} : vector<2x512xf32> to vector<2x128xf32>
    %330 = arith.negf %329 : vector<2x128xf32>
    %331 = math.exp %330 : vector<2x128xf32>
    %cst_60 = arith.constant 1.000000e+00 : f32
    %332 = vector.broadcast %cst_60 : f32 to vector<2x128xf32>
    %333 = arith.addf %332, %331 : vector<2x128xf32>
    %334 = arith.divf %332, %333 : vector<2x128xf32>
    %335 = arith.mulf %326, %272 : vector<2x128xf32>
    %336 = arith.mulf %320, %328 : vector<2x128xf32>
    %337 = arith.addf %335, %336 : vector<2x128xf32>
    %338 = math.tanh %337 : vector<2x128xf32>
    %339 = arith.mulf %334, %338 : vector<2x128xf32>
    %cst_61 = arith.constant dense<0.000000e+00> : vector<2x512xf32>
    %340 = tpu.matmul %339, %5, %cst_61 {dimension_numbers = #tpu.dot_dimension_numbers<[1], [0], [0], [1], [0, 0, 1, 1], [], []>} : vector<2x128xf32>, vector<128x512xf32>, vector<2x512xf32> -> vector<2x512xf32>
    %341 = vector.broadcast %6 : vector<1x128xf32> to vector<2x128xf32>
    %342 = arith.mulf %339, %341 : vector<2x128xf32>
    %cst_62 = arith.constant dense<0.000000e+00> : vector<2xf32>
    %343 = vector.multi_reduction <add>, %342, %cst_62 [1] : vector<2x128xf32> to vector<2xf32>
    %344 = vector.shape_cast %343 : vector<2xf32> to vector<2x1xf32>
    %345 = vector.broadcast %7 : vector<1x1xf32> to vector<2x1xf32>
    %346 = arith.addf %344, %345 : vector<2x1xf32>
    %347 = vector.extract_strided_slice %15 {offsets = [5, 0, 0], sizes = [1, 2, 512], strides = [1, 1, 1]} : vector<8x2x512xf32> to vector<1x2x512xf32>
    %348 = vector.shape_cast %347 : vector<1x2x512xf32> to vector<2x512xf32>
    %349 = arith.addf %348, %314 : vector<2x512xf32>
    %350 = vector.extract_strided_slice %349 {offsets = [0, 0], sizes = [2, 128], strides = [1, 1]} : vector<2x512xf32> to vector<2x128xf32>
    %351 = arith.negf %350 : vector<2x128xf32>
    %352 = math.exp %351 : vector<2x128xf32>
    %cst_63 = arith.constant 1.000000e+00 : f32
    %353 = vector.broadcast %cst_63 : f32 to vector<2x128xf32>
    %354 = arith.addf %353, %352 : vector<2x128xf32>
    %355 = arith.divf %353, %354 : vector<2x128xf32>
    %356 = vector.extract_strided_slice %349 {offsets = [0, 128], sizes = [2, 128], strides = [1, 1]} : vector<2x512xf32> to vector<2x128xf32>
    %357 = arith.negf %356 : vector<2x128xf32>
    %358 = math.exp %357 : vector<2x128xf32>
    %cst_64 = arith.constant 1.000000e+00 : f32
    %359 = vector.broadcast %cst_64 : f32 to vector<2x128xf32>
    %360 = arith.addf %359, %358 : vector<2x128xf32>
    %361 = arith.divf %359, %360 : vector<2x128xf32>
    %362 = vector.extract_strided_slice %349 {offsets = [0, 256], sizes = [2, 128], strides = [1, 1]} : vector<2x512xf32> to vector<2x128xf32>
    %363 = math.tanh %362 : vector<2x128xf32>
    %364 = vector.extract_strided_slice %349 {offsets = [0, 384], sizes = [2, 128], strides = [1, 1]} : vector<2x512xf32> to vector<2x128xf32>
    %365 = arith.negf %364 : vector<2x128xf32>
    %366 = math.exp %365 : vector<2x128xf32>
    %cst_65 = arith.constant 1.000000e+00 : f32
    %367 = vector.broadcast %cst_65 : f32 to vector<2x128xf32>
    %368 = arith.addf %367, %366 : vector<2x128xf32>
    %369 = arith.divf %367, %368 : vector<2x128xf32>
    %370 = arith.mulf %361, %307 : vector<2x128xf32>
    %371 = arith.mulf %355, %363 : vector<2x128xf32>
    %372 = arith.addf %370, %371 : vector<2x128xf32>
    %373 = math.tanh %372 : vector<2x128xf32>
    %374 = arith.mulf %369, %373 : vector<2x128xf32>
    %cst_66 = arith.constant dense<0.000000e+00> : vector<2x1024xf32>
    %375 = tpu.matmul %374, %3, %cst_66 {dimension_numbers = #tpu.dot_dimension_numbers<[1], [0], [0], [1], [0, 0, 1, 1], [], []>} : vector<2x128xf32>, vector<128x1024xf32>, vector<2x1024xf32> -> vector<2x1024xf32>
    %376 = vector.extract_strided_slice %375 {offsets = [0, 0], sizes = [2, 512], strides = [1, 1]} : vector<2x1024xf32> to vector<2x512xf32>
    %377 = arith.addf %376, %340 : vector<2x512xf32>
    %378 = arith.addf %377, %17 : vector<2x512xf32>
    %379 = vector.extract_strided_slice %375 {offsets = [0, 512], sizes = [2, 512], strides = [1, 1]} : vector<2x1024xf32> to vector<2x512xf32>
    %380 = vector.extract_strided_slice %378 {offsets = [0, 0], sizes = [2, 128], strides = [1, 1]} : vector<2x512xf32> to vector<2x128xf32>
    %381 = arith.negf %380 : vector<2x128xf32>
    %382 = math.exp %381 : vector<2x128xf32>
    %cst_67 = arith.constant 1.000000e+00 : f32
    %383 = vector.broadcast %cst_67 : f32 to vector<2x128xf32>
    %384 = arith.addf %383, %382 : vector<2x128xf32>
    %385 = arith.divf %383, %384 : vector<2x128xf32>
    %386 = vector.extract_strided_slice %378 {offsets = [0, 128], sizes = [2, 128], strides = [1, 1]} : vector<2x512xf32> to vector<2x128xf32>
    %387 = arith.negf %386 : vector<2x128xf32>
    %388 = math.exp %387 : vector<2x128xf32>
    %cst_68 = arith.constant 1.000000e+00 : f32
    %389 = vector.broadcast %cst_68 : f32 to vector<2x128xf32>
    %390 = arith.addf %389, %388 : vector<2x128xf32>
    %391 = arith.divf %389, %390 : vector<2x128xf32>
    %392 = vector.extract_strided_slice %378 {offsets = [0, 256], sizes = [2, 128], strides = [1, 1]} : vector<2x512xf32> to vector<2x128xf32>
    %393 = math.tanh %392 : vector<2x128xf32>
    %394 = vector.extract_strided_slice %378 {offsets = [0, 384], sizes = [2, 128], strides = [1, 1]} : vector<2x512xf32> to vector<2x128xf32>
    %395 = arith.negf %394 : vector<2x128xf32>
    %396 = math.exp %395 : vector<2x128xf32>
    %cst_69 = arith.constant 1.000000e+00 : f32
    %397 = vector.broadcast %cst_69 : f32 to vector<2x128xf32>
    %398 = arith.addf %397, %396 : vector<2x128xf32>
    %399 = arith.divf %397, %398 : vector<2x128xf32>
    %400 = arith.mulf %391, %337 : vector<2x128xf32>
    %401 = arith.mulf %385, %393 : vector<2x128xf32>
    %402 = arith.addf %400, %401 : vector<2x128xf32>
    %403 = math.tanh %402 : vector<2x128xf32>
    %404 = arith.mulf %399, %403 : vector<2x128xf32>
    %cst_70 = arith.constant dense<0.000000e+00> : vector<2x512xf32>
    %405 = tpu.matmul %404, %5, %cst_70 {dimension_numbers = #tpu.dot_dimension_numbers<[1], [0], [0], [1], [0, 0, 1, 1], [], []>} : vector<2x128xf32>, vector<128x512xf32>, vector<2x512xf32> -> vector<2x512xf32>
    %406 = vector.broadcast %6 : vector<1x128xf32> to vector<2x128xf32>
    %407 = arith.mulf %404, %406 : vector<2x128xf32>
    %cst_71 = arith.constant dense<0.000000e+00> : vector<2xf32>
    %408 = vector.multi_reduction <add>, %407, %cst_71 [1] : vector<2x128xf32> to vector<2xf32>
    %409 = vector.shape_cast %408 : vector<2xf32> to vector<2x1xf32>
    %410 = vector.broadcast %7 : vector<1x1xf32> to vector<2x1xf32>
    %411 = arith.addf %409, %410 : vector<2x1xf32>
    %412 = vector.extract_strided_slice %15 {offsets = [6, 0, 0], sizes = [1, 2, 512], strides = [1, 1, 1]} : vector<8x2x512xf32> to vector<1x2x512xf32>
    %413 = vector.shape_cast %412 : vector<1x2x512xf32> to vector<2x512xf32>
    %414 = arith.addf %413, %379 : vector<2x512xf32>
    %415 = vector.extract_strided_slice %414 {offsets = [0, 0], sizes = [2, 128], strides = [1, 1]} : vector<2x512xf32> to vector<2x128xf32>
    %416 = arith.negf %415 : vector<2x128xf32>
    %417 = math.exp %416 : vector<2x128xf32>
    %cst_72 = arith.constant 1.000000e+00 : f32
    %418 = vector.broadcast %cst_72 : f32 to vector<2x128xf32>
    %419 = arith.addf %418, %417 : vector<2x128xf32>
    %420 = arith.divf %418, %419 : vector<2x128xf32>
    %421 = vector.extract_strided_slice %414 {offsets = [0, 128], sizes = [2, 128], strides = [1, 1]} : vector<2x512xf32> to vector<2x128xf32>
    %422 = arith.negf %421 : vector<2x128xf32>
    %423 = math.exp %422 : vector<2x128xf32>
    %cst_73 = arith.constant 1.000000e+00 : f32
    %424 = vector.broadcast %cst_73 : f32 to vector<2x128xf32>
    %425 = arith.addf %424, %423 : vector<2x128xf32>
    %426 = arith.divf %424, %425 : vector<2x128xf32>
    %427 = vector.extract_strided_slice %414 {offsets = [0, 256], sizes = [2, 128], strides = [1, 1]} : vector<2x512xf32> to vector<2x128xf32>
    %428 = math.tanh %427 : vector<2x128xf32>
    %429 = vector.extract_strided_slice %414 {offsets = [0, 384], sizes = [2, 128], strides = [1, 1]} : vector<2x512xf32> to vector<2x128xf32>
    %430 = arith.negf %429 : vector<2x128xf32>
    %431 = math.exp %430 : vector<2x128xf32>
    %cst_74 = arith.constant 1.000000e+00 : f32
    %432 = vector.broadcast %cst_74 : f32 to vector<2x128xf32>
    %433 = arith.addf %432, %431 : vector<2x128xf32>
    %434 = arith.divf %432, %433 : vector<2x128xf32>
    %435 = arith.mulf %426, %372 : vector<2x128xf32>
    %436 = arith.mulf %420, %428 : vector<2x128xf32>
    %437 = arith.addf %435, %436 : vector<2x128xf32>
    %438 = math.tanh %437 : vector<2x128xf32>
    %439 = arith.mulf %434, %438 : vector<2x128xf32>
    %cst_75 = arith.constant dense<0.000000e+00> : vector<2x1024xf32>
    %440 = tpu.matmul %439, %3, %cst_75 {dimension_numbers = #tpu.dot_dimension_numbers<[1], [0], [0], [1], [0, 0, 1, 1], [], []>} : vector<2x128xf32>, vector<128x1024xf32>, vector<2x1024xf32> -> vector<2x1024xf32>
    %441 = vector.extract_strided_slice %440 {offsets = [0, 0], sizes = [2, 512], strides = [1, 1]} : vector<2x1024xf32> to vector<2x512xf32>
    %442 = arith.addf %441, %405 : vector<2x512xf32>
    %443 = arith.addf %442, %17 : vector<2x512xf32>
    %444 = vector.extract_strided_slice %440 {offsets = [0, 512], sizes = [2, 512], strides = [1, 1]} : vector<2x1024xf32> to vector<2x512xf32>
    %445 = vector.extract_strided_slice %443 {offsets = [0, 0], sizes = [2, 128], strides = [1, 1]} : vector<2x512xf32> to vector<2x128xf32>
    %446 = arith.negf %445 : vector<2x128xf32>
    %447 = math.exp %446 : vector<2x128xf32>
    %cst_76 = arith.constant 1.000000e+00 : f32
    %448 = vector.broadcast %cst_76 : f32 to vector<2x128xf32>
    %449 = arith.addf %448, %447 : vector<2x128xf32>
    %450 = arith.divf %448, %449 : vector<2x128xf32>
    %451 = vector.extract_strided_slice %443 {offsets = [0, 128], sizes = [2, 128], strides = [1, 1]} : vector<2x512xf32> to vector<2x128xf32>
    %452 = arith.negf %451 : vector<2x128xf32>
    %453 = math.exp %452 : vector<2x128xf32>
    %cst_77 = arith.constant 1.000000e+00 : f32
    %454 = vector.broadcast %cst_77 : f32 to vector<2x128xf32>
    %455 = arith.addf %454, %453 : vector<2x128xf32>
    %456 = arith.divf %454, %455 : vector<2x128xf32>
    %457 = vector.extract_strided_slice %443 {offsets = [0, 256], sizes = [2, 128], strides = [1, 1]} : vector<2x512xf32> to vector<2x128xf32>
    %458 = math.tanh %457 : vector<2x128xf32>
    %459 = vector.extract_strided_slice %443 {offsets = [0, 384], sizes = [2, 128], strides = [1, 1]} : vector<2x512xf32> to vector<2x128xf32>
    %460 = arith.negf %459 : vector<2x128xf32>
    %461 = math.exp %460 : vector<2x128xf32>
    %cst_78 = arith.constant 1.000000e+00 : f32
    %462 = vector.broadcast %cst_78 : f32 to vector<2x128xf32>
    %463 = arith.addf %462, %461 : vector<2x128xf32>
    %464 = arith.divf %462, %463 : vector<2x128xf32>
    %465 = arith.mulf %456, %402 : vector<2x128xf32>
    %466 = arith.mulf %450, %458 : vector<2x128xf32>
    %467 = arith.addf %465, %466 : vector<2x128xf32>
    %468 = math.tanh %467 : vector<2x128xf32>
    %469 = arith.mulf %464, %468 : vector<2x128xf32>
    %cst_79 = arith.constant dense<0.000000e+00> : vector<2x512xf32>
    %470 = tpu.matmul %469, %5, %cst_79 {dimension_numbers = #tpu.dot_dimension_numbers<[1], [0], [0], [1], [0, 0, 1, 1], [], []>} : vector<2x128xf32>, vector<128x512xf32>, vector<2x512xf32> -> vector<2x512xf32>
    %471 = vector.broadcast %6 : vector<1x128xf32> to vector<2x128xf32>
    %472 = arith.mulf %469, %471 : vector<2x128xf32>
    %cst_80 = arith.constant dense<0.000000e+00> : vector<2xf32>
    %473 = vector.multi_reduction <add>, %472, %cst_80 [1] : vector<2x128xf32> to vector<2xf32>
    %474 = vector.shape_cast %473 : vector<2xf32> to vector<2x1xf32>
    %475 = vector.broadcast %7 : vector<1x1xf32> to vector<2x1xf32>
    %476 = arith.addf %474, %475 : vector<2x1xf32>
    %477 = vector.extract_strided_slice %15 {offsets = [7, 0, 0], sizes = [1, 2, 512], strides = [1, 1, 1]} : vector<8x2x512xf32> to vector<1x2x512xf32>
    %478 = vector.shape_cast %477 : vector<1x2x512xf32> to vector<2x512xf32>
    %479 = arith.addf %478, %444 : vector<2x512xf32>
    %480 = vector.extract_strided_slice %479 {offsets = [0, 0], sizes = [2, 128], strides = [1, 1]} : vector<2x512xf32> to vector<2x128xf32>
    %481 = arith.negf %480 : vector<2x128xf32>
    %482 = math.exp %481 : vector<2x128xf32>
    %cst_81 = arith.constant 1.000000e+00 : f32
    %483 = vector.broadcast %cst_81 : f32 to vector<2x128xf32>
    %484 = arith.addf %483, %482 : vector<2x128xf32>
    %485 = arith.divf %483, %484 : vector<2x128xf32>
    %486 = vector.extract_strided_slice %479 {offsets = [0, 128], sizes = [2, 128], strides = [1, 1]} : vector<2x512xf32> to vector<2x128xf32>
    %487 = arith.negf %486 : vector<2x128xf32>
    %488 = math.exp %487 : vector<2x128xf32>
    %cst_82 = arith.constant 1.000000e+00 : f32
    %489 = vector.broadcast %cst_82 : f32 to vector<2x128xf32>
    %490 = arith.addf %489, %488 : vector<2x128xf32>
    %491 = arith.divf %489, %490 : vector<2x128xf32>
    %492 = vector.extract_strided_slice %479 {offsets = [0, 256], sizes = [2, 128], strides = [1, 1]} : vector<2x512xf32> to vector<2x128xf32>
    %493 = math.tanh %492 : vector<2x128xf32>
    %494 = vector.extract_strided_slice %479 {offsets = [0, 384], sizes = [2, 128], strides = [1, 1]} : vector<2x512xf32> to vector<2x128xf32>
    %495 = arith.negf %494 : vector<2x128xf32>
    %496 = math.exp %495 : vector<2x128xf32>
    %cst_83 = arith.constant 1.000000e+00 : f32
    %497 = vector.broadcast %cst_83 : f32 to vector<2x128xf32>
    %498 = arith.addf %497, %496 : vector<2x128xf32>
    %499 = arith.divf %497, %498 : vector<2x128xf32>
    %500 = arith.mulf %491, %437 : vector<2x128xf32>
    %501 = arith.mulf %485, %493 : vector<2x128xf32>
    %502 = arith.addf %500, %501 : vector<2x128xf32>
    %503 = math.tanh %502 : vector<2x128xf32>
    %504 = arith.mulf %499, %503 : vector<2x128xf32>
    %cst_84 = arith.constant dense<0.000000e+00> : vector<2x1024xf32>
    %505 = tpu.matmul %504, %3, %cst_84 {dimension_numbers = #tpu.dot_dimension_numbers<[1], [0], [0], [1], [0, 0, 1, 1], [], []>} : vector<2x128xf32>, vector<128x1024xf32>, vector<2x1024xf32> -> vector<2x1024xf32>
    %506 = vector.extract_strided_slice %505 {offsets = [0, 0], sizes = [2, 512], strides = [1, 1]} : vector<2x1024xf32> to vector<2x512xf32>
    %507 = arith.addf %506, %470 : vector<2x512xf32>
    %508 = arith.addf %507, %17 : vector<2x512xf32>
    %509 = vector.extract_strided_slice %508 {offsets = [0, 0], sizes = [2, 128], strides = [1, 1]} : vector<2x512xf32> to vector<2x128xf32>
    %510 = arith.negf %509 : vector<2x128xf32>
    %511 = math.exp %510 : vector<2x128xf32>
    %cst_85 = arith.constant 1.000000e+00 : f32
    %512 = vector.broadcast %cst_85 : f32 to vector<2x128xf32>
    %513 = arith.addf %512, %511 : vector<2x128xf32>
    %514 = arith.divf %512, %513 : vector<2x128xf32>
    %515 = vector.extract_strided_slice %508 {offsets = [0, 128], sizes = [2, 128], strides = [1, 1]} : vector<2x512xf32> to vector<2x128xf32>
    %516 = arith.negf %515 : vector<2x128xf32>
    %517 = math.exp %516 : vector<2x128xf32>
    %cst_86 = arith.constant 1.000000e+00 : f32
    %518 = vector.broadcast %cst_86 : f32 to vector<2x128xf32>
    %519 = arith.addf %518, %517 : vector<2x128xf32>
    %520 = arith.divf %518, %519 : vector<2x128xf32>
    %521 = vector.extract_strided_slice %508 {offsets = [0, 256], sizes = [2, 128], strides = [1, 1]} : vector<2x512xf32> to vector<2x128xf32>
    %522 = math.tanh %521 : vector<2x128xf32>
    %523 = vector.extract_strided_slice %508 {offsets = [0, 384], sizes = [2, 128], strides = [1, 1]} : vector<2x512xf32> to vector<2x128xf32>
    %524 = arith.negf %523 : vector<2x128xf32>
    %525 = math.exp %524 : vector<2x128xf32>
    %cst_87 = arith.constant 1.000000e+00 : f32
    %526 = vector.broadcast %cst_87 : f32 to vector<2x128xf32>
    %527 = arith.addf %526, %525 : vector<2x128xf32>
    %528 = arith.divf %526, %527 : vector<2x128xf32>
    %529 = arith.mulf %520, %467 : vector<2x128xf32>
    %530 = arith.mulf %514, %522 : vector<2x128xf32>
    %531 = arith.addf %529, %530 : vector<2x128xf32>
    %532 = math.tanh %531 : vector<2x128xf32>
    %533 = arith.mulf %528, %532 : vector<2x128xf32>
    %534 = vector.broadcast %6 : vector<1x128xf32> to vector<2x128xf32>
    %535 = arith.mulf %533, %534 : vector<2x128xf32>
    %cst_88 = arith.constant dense<0.000000e+00> : vector<2xf32>
    %536 = vector.multi_reduction <add>, %535, %cst_88 [1] : vector<2x128xf32> to vector<2xf32>
    %537 = vector.shape_cast %536 : vector<2xf32> to vector<2x1xf32>
    %538 = vector.broadcast %7 : vector<1x1xf32> to vector<2x1xf32>
    %539 = arith.addf %537, %538 : vector<2x1xf32>
    %540 = tpu.concatenate %86, %151, %216, %281, %346, %411, %476, %539 in 1 : vector<2x1xf32>, vector<2x1xf32>, vector<2x1xf32>, vector<2x1xf32>, vector<2x1xf32>, vector<2x1xf32>, vector<2x1xf32>, vector<2x1xf32> -> vector<2x8xf32>
    %c0_89 = arith.constant 0 : index
    %c0_90 = arith.constant 0 : index
    %541 = vector.load %arg9[%c0_89, %c0_90] : memref<2x8xf32, #tpu.memory_space<vmem>>, vector<2x8xf32>
    tpu.vector_store %arg9[%c0_89, %c0_90], %540 {strides = array<i32>} : memref<2x8xf32, #tpu.memory_space<vmem>>, vector<2x8xf32>,
    return
  }
}

</mosaic_0001>

<llo_original>
// kernel: sine_lstm_forward.1
$region0: #{sine_lstm_forward.1}
  #allocation0 [shape = 'u32[]', space=smem, size = 0x4, offset = 0x4, fixed_abs, tag = 'smem constant byte address 0x4 - core index']
  #allocation1 [shape = 'u32[72,128]{1,0:T(1,128)}', space=vmem, size = 0x9000, scoped, tag = 'internal scratch']
  #allocation2 [shape = 'f32[1,1]{1,0:T(1,128)S(1)}', space=vmem, size = 0x200, scoped, tag = 'scoped memory for sine_lstm_forward.1']
  %s0 = inlined_call_operand.vmem [shape: f32[8,2], index: 0, kind: input, shape index: {}]
  %s1 = inlined_call_operand.vmem [shape: f32[1,512], index: 1, kind: input, shape index: {}]
  %s2 = inlined_call_operand.vmem [shape: f32[1,512], index: 2, kind: input, shape index: {}]
  %s3 = inlined_call_operand.hbm [shape: f32[128,1024], index: 3, kind: input, shape index: {}]
  %s4 = inlined_call_operand.hbm [shape: f32[1,512], index: 4, kind: input, shape index: {}]
  %s5 = inlined_call_operand.hbm [shape: f32[128,512], index: 5, kind: input, shape index: {}]
  %s6 = inlined_call_operand.hbm [shape: f32[128,1024], index: 6, kind: input, shape index: {}]
  %s7 = inlined_call_operand.vmem [shape: f32[1,128], index: 7, kind: input, shape index: {}]
  %s8 = inlined_call_operand.<no memory space> [shape: f32[1,1], index: 8, kind: input, shape index: {}]
  %s9 = inlined_call_operand.hbm [shape: f32[2,8], index: 9, kind: output, shape index: {}]
  %s10 = sld [smem:[#allocation0]]
  $region62: #{sine_lstm_forward.1} parent=0
    _
  %s12 = ssub.s32 1, %s10
  %s13 = scalar_select 0, %s12, %s10
  %v14 = vstv %s8
  %15 = vst [vmem:[#allocation2] sm:$0x1] %v14
  $region1: #{sine_lstm_forward.1} parent=0
    #allocation3 [shape = 'u8[524288]{0}', space=vmem, size = 0x80000, scoped, tag = 'input window, operand 3, single buffered']
    #allocation4 [shape = 's32[1]{0}', space=sflag, size = 0x4, scoped, tag = 'scoped memory for sine_lstm_forward.1']
    #allocation5 [shape = 's32[1]{0}', space=sflag, size = 0x4, scoped, tag = 'scoped memory for sine_lstm_forward.1']
    #allocation6 [shape = 'u8[2048]{0}', space=vmem, size = 0x800, scoped, tag = 'input window, operand 4, single buffered']
    #allocation7 [shape = 's32[1]{0}', space=sflag, size = 0x4, scoped, tag = 'scoped memory for sine_lstm_forward.1']
    #allocation8 [shape = 'u8[262144]{0}', space=vmem, size = 0x40000, scoped, tag = 'input window, operand 5, single buffered']
    #allocation9 [shape = 'u8[524288]{0}', space=vmem, size = 0x80000, scoped, tag = 'input window, operand 6, single buffered']
    #allocation10 [shape = 's32[1]{0}', space=sflag, size = 0x4, scoped, tag = 'scoped memory for sine_lstm_forward.1']
    #allocation11 [shape = 'u8[1024]{0}', space=vmem, size = 0x400, scoped, tag = 'output window, operand 0, single buffered']
    %16 = vsyncpa [#allocation4], 0
    %17 = vsyncpa [#allocation7], 0
    %18 = vsyncpa [#allocation10], 0
    %19 = vsyncpa [#allocation5], 0
    // Predicated region
    $region2: #{sine_lstm_forward.1} parent=1 // pred_check
      _
    $region3: #{sine_lstm_forward.1} parent=1 // pred_check_branch
      %21 = sbr.rel (0) target = $region5
    $region4: #{sine_lstm_forward.1} parent=1 // pred_region
      _
    $region5: #{sine_lstm_forward.1} parent=1 // pred_fallthru
      _
    // Predicated region
    $region6: #{sine_lstm_forward.1} parent=1 // pred_check
      _
    $region7: #{sine_lstm_forward.1} parent=1 // pred_check_branch
      %23 = sbr.rel (0) target = $region9
    $region8: #{sine_lstm_forward.1} parent=1 // pred_region
      _
    $region9: #{sine_lstm_forward.1} parent=1 // pred_fallthru
      _
    // Predicated region
    $region10: #{sine_lstm_forward.1} parent=1 // pred_check
      _
    $region11: #{sine_lstm_forward.1} parent=1 // pred_check_branch
      %25 = sbr.rel (0) target = $region13
    $region12: #{sine_lstm_forward.1} parent=1 // pred_region
      _
    $region13: #{sine_lstm_forward.1} parent=1 // pred_fallthru
      _
    // Predicated region
    $region14: #{sine_lstm_forward.1} parent=1 // pred_check
      _
    $region15: #{sine_lstm_forward.1} parent=1 // pred_check_branch
      %27 = sbr.rel (0) target = $region17
    $region16: #{sine_lstm_forward.1} parent=1 // pred_region
      %29 = vsyncadd [#allocation4], 0
      %s30 = sshll.u32 %s3, 4
      %s31 = int_to_ptr.hbm [resolvable:$true] %s30
      %s32 = sshll.u32 [#allocation3], 4
      %s33 = int_to_ptr.vmem [resolvable:$true] %s32
      %38 = dma.hbm_to_vmem [thread:$0]  %s31, 16384, %s33, [#allocation4], 1024, 1024, 64
    $region17: #{sine_lstm_forward.1} parent=1 // pred_fallthru
      _
    // Predicated region
    $region18: #{sine_lstm_forward.1} parent=1 // pred_check
      _
    $region19: #{sine_lstm_forward.1} parent=1 // pred_check_branch
      %40 = sbr.rel (0) target = $region21
    $region20: #{sine_lstm_forward.1} parent=1 // pred_region
      %42 = vsyncadd [#allocation7], 0
      %s44 = sshll.u32 %s4, 4
      %s45 = int_to_ptr.hbm [resolvable:$true] %s44
      %s46 = sshll.u32 [#allocation6], 4
      %s47 = int_to_ptr.vmem [resolvable:$true] %s46
      %49 = dma.hbm_to_vmem [thread:$0]  %s45, 64, %s47, [#allocation7]
    $region21: #{sine_lstm_forward.1} parent=1 // pred_fallthru
      _
    // Predicated region
    $region22: #{sine_lstm_forward.1} parent=1 // pred_check
      _
    $region23: #{sine_lstm_forward.1} parent=1 // pred_check_branch
      %51 = sbr.rel (0) target = $region25
    $region24: #{sine_lstm_forward.1} parent=1 // pred_region
      %53 = vsyncadd [#allocation7], 0
      %s54 = sshll.u32 %s5, 4
      %s55 = int_to_ptr.hbm [resolvable:$true] %s54
      %s56 = sshll.u32 [#allocation8], 4
      %s57 = int_to_ptr.vmem [resolvable:$true] %s56
      %62 = dma.hbm_to_vmem [thread:$0]  %s55, 8192, %s57, [#allocation7], 512, 512, 32
    $region25: #{sine_lstm_forward.1} parent=1 // pred_fallthru
      _
    // Predicated region
    $region26: #{sine_lstm_forward.1} parent=1 // pred_check
      _
    $region27: #{sine_lstm_forward.1} parent=1 // pred_check_branch
      %64 = sbr.rel (0) target = $region29
    $region28: #{sine_lstm_forward.1} parent=1 // pred_region
      %66 = vsyncadd [#allocation10], 0
      %s67 = sshll.u32 %s6, 4
      %s68 = int_to_ptr.hbm [resolvable:$true] %s67
      %s69 = sshll.u32 [#allocation9], 4
      %s70 = int_to_ptr.vmem [resolvable:$true] %s69
      %75 = dma.hbm_to_vmem [thread:$0]  %s68, 16384, %s70, [#allocation10], 1024, 1024, 64
    $region29: #{sine_lstm_forward.1} parent=1 // pred_fallthru
      _
    // Predicated region
    $region30: #{sine_lstm_forward.1} parent=1 // pred_check
      _
    $region31: #{sine_lstm_forward.1} parent=1 // pred_check_branch
      %77 = sbr.rel (0) target = $region33
    $region32: #{sine_lstm_forward.1} parent=1 // pred_region
      _
    $region33: #{sine_lstm_forward.1} parent=1 // pred_fallthru
      _
    // Predicated region
    $region34: #{sine_lstm_forward.1} parent=1 // pred_check
      _
    $region35: #{sine_lstm_forward.1} parent=1 // pred_check_branch
      %79 = sbr.rel (0) target = $region37
    $region36: #{sine_lstm_forward.1} parent=1 // pred_region
      _
    $region37: #{sine_lstm_forward.1} parent=1 // pred_fallthru
      _
    // Predicated region
    $region38: #{sine_lstm_forward.1} parent=1 // pred_check
      _
    $region39: #{sine_lstm_forward.1} parent=1 // pred_check_branch
      %81 = sbr.rel (0) target = $region41
    $region40: #{sine_lstm_forward.1} parent=1 // pred_region
      %83 = dma.done [#allocation4], 16384
    $region41: #{sine_lstm_forward.1} parent=1 // pred_fallthru
      _
    // Predicated region
    $region42: #{sine_lstm_forward.1} parent=1 // pred_check
      _
    $region43: #{sine_lstm_forward.1} parent=1 // pred_check_branch
      %85 = sbr.rel (0) target = $region45
    $region44: #{sine_lstm_forward.1} parent=1 // pred_region
      %87 = dma.done [#allocation7], 64
    $region45: #{sine_lstm_forward.1} parent=1 // pred_fallthru
      _
    // Predicated region
    $region46: #{sine_lstm_forward.1} parent=1 // pred_check
      _
    $region47: #{sine_lstm_forward.1} parent=1 // pred_check_branch
      %89 = sbr.rel (0) target = $region49
    $region48: #{sine_lstm_forward.1} parent=1 // pred_region
      %91 = dma.done [#allocation7], 8192
    $region49: #{sine_lstm_forward.1} parent=1 // pred_fallthru
      _
    // Predicated region
    $region50: #{sine_lstm_forward.1} parent=1 // pred_check
      _
    $region51: #{sine_lstm_forward.1} parent=1 // pred_check_branch
      %93 = sbr.rel (0) target = $region53
    $region52: #{sine_lstm_forward.1} parent=1 // pred_region
      %95 = dma.done [#allocation10], 16384
    $region53: #{sine_lstm_forward.1} parent=1 // pred_fallthru
      _
    %v96 = vld [vmem:[%s0] sm:$0xff]
    %v97 = vld [vmem:[%s1] sm:$0xf]
    %v98 = vld [vmem:[%s2] sm:$0xf]
    %v99 = vld [vmem:[#allocation3] sm:$0xff]
    %v100 = vld [vmem:[#allocation3 + $0x8] sm:$0xff]
    %v101 = vld [vmem:[#allocation3 + $0x10] sm:$0xff]
    %v102 = vld [vmem:[#allocation3 + $0x18] sm:$0xff]
    %v103 = vld [vmem:[#allocation3 + $0x20] sm:$0xff]
    %v104 = vld [vmem:[#allocation3 + $0x28] sm:$0xff]
    %v105 = vld [vmem:[#allocation3 + $0x30] sm:$0xff]
    %v106 = vld [vmem:[#allocation3 + $0x38] sm:$0xff]
    %v107 = vld [vmem:[#allocation3 + $0x40] sm:$0xff]
    %v108 = vld [vmem:[#allocation3 + $0x48] sm:$0xff]
    %v109 = vld [vmem:[#allocation3 + $0x50] sm:$0xff]
    %v110 = vld [vmem:[#allocation3 + $0x58] sm:$0xff]
    %v111 = vld [vmem:[#allocation3 + $0x60] sm:$0xff]
    %v112 = vld [vmem:[#allocation3 + $0x68] sm:$0xff]
    %v113 = vld [vmem:[#allocation3 + $0x70] sm:$0xff]
    %v114 = vld [vmem:[#allocation3 + $0x78] sm:$0xff]
    %v115 = vld [vmem:[#allocation3 + $0x80] sm:$0xff]
    %v116 = vld [vmem:[#allocation3 + $0x88] sm:$0xff]
    %v117 = vld [vmem:[#allocation3 + $0x90] sm:$0xff]
    %v118 = vld [vmem:[#allocation3 + $0x98] sm:$0xff]
    %v119 = vld [vmem:[#allocation3 + $0xa0] sm:$0xff]
    %v120 = vld [vmem:[#allocation3 + $0xa8] sm:$0xff]
    %v121 = vld [vmem:[#allocation3 + $0xb0] sm:$0xff]
    %v122 = vld [vmem:[#allocation3 + $0xb8] sm:$0xff]
    %v123 = vld [vmem:[#allocation3 + $0xc0] sm:$0xff]
    %v124 = vld [vmem:[#allocation3 + $0xc8] sm:$0xff]
    %v125 = vld [vmem:[#allocation3 + $0xd0] sm:$0xff]
    %v126 = vld [vmem:[#allocation3 + $0xd8] sm:$0xff]
    %v127 = vld [vmem:[#allocation3 + $0xe0] sm:$0xff]
    %v128 = vld [vmem:[#allocation3 + $0xe8] sm:$0xff]
    %v129 = vld [vmem:[#allocation3 + $0xf0] sm:$0xff]
    %v130 = vld [vmem:[#allocation3 + $0xf8] sm:$0xff]
    %v131 = vld [vmem:[#allocation3 + $0x100] sm:$0xff]
    %v132 = vld [vmem:[#allocation3 + $0x108] sm:$0xff]
    %v133 = vld [vmem:[#allocation3 + $0x110] sm:$0xff]
    %v134 = vld [vmem:[#allocation3 + $0x118] sm:$0xff]
    %v135 = vld [vmem:[#allocation3 + $0x120] sm:$0xff]
    %v136 = vld [vmem:[#allocation3 + $0x128] sm:$0xff]
    %v137 = vld [vmem:[#allocation3 + $0x130] sm:$0xff]
    %v138 = vld [vmem:[#allocation3 + $0x138] sm:$0xff]
    %v139 = vld [vmem:[#allocation3 + $0x140] sm:$0xff]
    %v140 = vld [vmem:[#allocation3 + $0x148] sm:$0xff]
    %v141 = vld [vmem:[#allocation3 + $0x150] sm:$0xff]
    %v142 = vld [vmem:[#allocation3 + $0x158] sm:$0xff]
    %v143 = vld [vmem:[#allocation3 + $0x160] sm:$0xff]
    %v144 = vld [vmem:[#allocation3 + $0x168] sm:$0xff]
    %v145 = vld [vmem:[#allocation3 + $0x170] sm:$0xff]
    %v146 = vld [vmem:[#allocation3 + $0x178] sm:$0xff]
    %v147 = vld [vmem:[#allocation3 + $0x180] sm:$0xff]
    %v148 = vld [vmem:[#allocation3 + $0x188] sm:$0xff]
    %v149 = vld [vmem:[#allocation3 + $0x190] sm:$0xff]
    %v150 = vld [vmem:[#allocation3 + $0x198] sm:$0xff]
    %v151 = vld [vmem:[#allocation3 + $0x1a0] sm:$0xff]
    %v152 = vld [vmem:[#allocation3 + $0x1a8] sm:$0xff]
    %v153 = vld [vmem:[#allocation3 + $0x1b0] sm:$0xff]
    %v154 = vld [vmem:[#allocation3 + $0x1b8] sm:$0xff]
    %v155 = vld [vmem:[#allocation3 + $0x1c0] sm:$0xff]
    %v156 = vld [vmem:[#allocation3 + $0x1c8] sm:$0xff]
    %v157 = vld [vmem:[#allocation3 + $0x1d0] sm:$0xff]
    %v158 = vld [vmem:[#allocation3 + $0x1d8] sm:$0xff]
    %v159 = vld [vmem:[#allocation3 + $0x1e0] sm:$0xff]
    %v160 = vld [vmem:[#allocation3 + $0x1e8] sm:$0xff]
    %v161 = vld [vmem:[#allocation3 + $0x1f0] sm:$0xff]
    %v162 = vld [vmem:[#allocation3 + $0x1f8] sm:$0xff]
    %v163 = vld [vmem:[#allocation3 + $0x200] sm:$0xff]
    %v164 = vld [vmem:[#allocation3 + $0x208] sm:$0xff]
    %v165 = vld [vmem:[#allocation3 + $0x210] sm:$0xff]
    %v166 = vld [vmem:[#allocation3 + $0x218] sm:$0xff]
    %v167 = vld [vmem:[#allocation3 + $0x220] sm:$0xff]
    %v168 = vld [vmem:[#allocation3 + $0x228] sm:$0xff]
    %v169 = vld [vmem:[#allocation3 + $0x230] sm:$0xff]
    %v170 = vld [vmem:[#allocation3 + $0x238] sm:$0xff]
    %v171 = vld [vmem:[#allocation3 + $0x240] sm:$0xff]
    %v172 = vld [vmem:[#allocation3 + $0x248] sm:$0xff]
    %v173 = vld [vmem:[#allocation3 + $0x250] sm:$0xff]
    %v174 = vld [vmem:[#allocation3 + $0x258] sm:$0xff]
    %v175 = vld [vmem:[#allocation3 + $0x260] sm:$0xff]
    %v176 = vld [vmem:[#allocation3 + $0x268] sm:$0xff]
    %v177 = vld [vmem:[#allocation3 + $0x270] sm:$0xff]
    %v178 = vld [vmem:[#allocation3 + $0x278] sm:$0xff]
    %v179 = vld [vmem:[#allocation3 + $0x280] sm:$0xff]
    %v180 = vld [vmem:[#allocation3 + $0x288] sm:$0xff]
    %v181 = vld [vmem:[#allocation3 + $0x290] sm:$0xff]
    %v182 = vld [vmem:[#allocation3 + $0x298] sm:$0xff]
    %v183 = vld [vmem:[#allocation3 + $0x2a0] sm:$0xff]
    %v184 = vld [vmem:[#allocation3 + $0x2a8] sm:$0xff]
    %v185 = vld [vmem:[#allocation3 + $0x2b0] sm:$0xff]
    %v186 = vld [vmem:[#allocation3 + $0x2b8] sm:$0xff]
    %v187 = vld [vmem:[#allocation3 + $0x2c0] sm:$0xff]
    %v188 = vld [vmem:[#allocation3 + $0x2c8] sm:$0xff]
    %v189 = vld [vmem:[#allocation3 + $0x2d0] sm:$0xff]
    %v190 = vld [vmem:[#allocation3 + $0x2d8] sm:$0xff]
    %v191 = vld [vmem:[#allocation3 + $0x2e0] sm:$0xff]
    %v192 = vld [vmem:[#allocation3 + $0x2e8] sm:$0xff]
    %v193 = vld [vmem:[#allocation3 + $0x2f0] sm:$0xff]
    %v194 = vld [vmem:[#allocation3 + $0x2f8] sm:$0xff]
    %v195 = vld [vmem:[#allocation3 + $0x300] sm:$0xff]
    %v196 = vld [vmem:[#allocation3 + $0x308] sm:$0xff]
    %v197 = vld [vmem:[#allocation3 + $0x310] sm:$0xff]
    %v198 = vld [vmem:[#allocation3 + $0x318] sm:$0xff]
    %v199 = vld [vmem:[#allocation3 + $0x320] sm:$0xff]
    %v200 = vld [vmem:[#allocation3 + $0x328] sm:$0xff]
    %v201 = vld [vmem:[#allocation3 + $0x330] sm:$0xff]
    %v202 = vld [vmem:[#allocation3 + $0x338] sm:$0xff]
    %v203 = vld [vmem:[#allocation3 + $0x340] sm:$0xff]
    %v204 = vld [vmem:[#allocation3 + $0x348] sm:$0xff]
    %v205 = vld [vmem:[#allocation3 + $0x350] sm:$0xff]
    %v206 = vld [vmem:[#allocation3 + $0x358] sm:$0xff]
    %v207 = vld [vmem:[#allocation3 + $0x360] sm:$0xff]
    %v208 = vld [vmem:[#allocation3 + $0x368] sm:$0xff]
    %v209 = vld [vmem:[#allocation3 + $0x370] sm:$0xff]
    %v210 = vld [vmem:[#allocation3 + $0x378] sm:$0xff]
    %v211 = vld [vmem:[#allocation3 + $0x380] sm:$0xff]
    %v212 = vld [vmem:[#allocation3 + $0x388] sm:$0xff]
    %v213 = vld [vmem:[#allocation3 + $0x390] sm:$0xff]
    %v214 = vld [vmem:[#allocation3 + $0x398] sm:$0xff]
    %v215 = vld [vmem:[#allocation3 + $0x3a0] sm:$0xff]
    %v216 = vld [vmem:[#allocation3 + $0x3a8] sm:$0xff]
    %v217 = vld [vmem:[#allocation3 + $0x3b0] sm:$0xff]
    %v218 = vld [vmem:[#allocation3 + $0x3b8] sm:$0xff]
    %v219 = vld [vmem:[#allocation3 + $0x3c0] sm:$0xff]
    %v220 = vld [vmem:[#allocation3 + $0x3c8] sm:$0xff]
    %v221 = vld [vmem:[#allocation3 + $0x3d0] sm:$0xff]
    %v222 = vld [vmem:[#allocation3 + $0x3d8] sm:$0xff]
    %v223 = vld [vmem:[#allocation3 + $0x3e0] sm:$0xff]
    %v224 = vld [vmem:[#allocation3 + $0x3e8] sm:$0xff]
    %v225 = vld [vmem:[#allocation3 + $0x3f0] sm:$0xff]
    %v226 = vld [vmem:[#allocation3 + $0x3f8] sm:$0xff]
    %v227 = vld [vmem:[#allocation6] sm:$0xf]
    %v228 = vld [vmem:[#allocation8] sm:$0xff]
    %v229 = vld [vmem:[#allocation8 + $0x8] sm:$0xff]
    %v230 = vld [vmem:[#allocation8 + $0x10] sm:$0xff]
    %v231 = vld [vmem:[#allocation8 + $0x18] sm:$0xff]
    %v232 = vld [vmem:[#allocation8 + $0x20] sm:$0xff]
    %v233 = vld [vmem:[#allocation8 + $0x28] sm:$0xff]
    %v234 = vld [vmem:[#allocation8 + $0x30] sm:$0xff]
    %v235 = vld [vmem:[#allocation8 + $0x38] sm:$0xff]
    %v236 = vld [vmem:[#allocation8 + $0x40] sm:$0xff]
    %v237 = vld [vmem:[#allocation8 + $0x48] sm:$0xff]
    %v238 = vld [vmem:[#allocation8 + $0x50] sm:$0xff]
    %v239 = vld [vmem:[#allocation8 + $0x58] sm:$0xff]
    %v240 = vld [vmem:[#allocation8 + $0x60] sm:$0xff]
    %v241 = vld [vmem:[#allocation8 + $0x68] sm:$0xff]
    %v242 = vld [vmem:[#allocation8 + $0x70] sm:$0xff]
    %v243 = vld [vmem:[#allocation8 + $0x78] sm:$0xff]
    %v244 = vld [vmem:[#allocation8 + $0x80] sm:$0xff]
    %v245 = vld [vmem:[#allocation8 + $0x88] sm:$0xff]
    %v246 = vld [vmem:[#allocation8 + $0x90] sm:$0xff]
    %v247 = vld [vmem:[#allocation8 + $0x98] sm:$0xff]
    %v248 = vld [vmem:[#allocation8 + $0xa0] sm:$0xff]
    %v249 = vld [vmem:[#allocation8 + $0xa8] sm:$0xff]
    %v250 = vld [vmem:[#allocation8 + $0xb0] sm:$0xff]
    %v251 = vld [vmem:[#allocation8 + $0xb8] sm:$0xff]
    %v252 = vld [vmem:[#allocation8 + $0xc0] sm:$0xff]
    %v253 = vld [vmem:[#allocation8 + $0xc8] sm:$0xff]
    %v254 = vld [vmem:[#allocation8 + $0xd0] sm:$0xff]
    %v255 = vld [vmem:[#allocation8 + $0xd8] sm:$0xff]
    %v256 = vld [vmem:[#allocation8 + $0xe0] sm:$0xff]
    %v257 = vld [vmem:[#allocation8 + $0xe8] sm:$0xff]
    %v258 = vld [vmem:[#allocation8 + $0xf0] sm:$0xff]
    %v259 = vld [vmem:[#allocation8 + $0xf8] sm:$0xff]
    %v260 = vld [vmem:[#allocation8 + $0x100] sm:$0xff]
    %v261 = vld [vmem:[#allocation8 + $0x108] sm:$0xff]
    %v262 = vld [vmem:[#allocation8 + $0x110] sm:$0xff]
    %v263 = vld [vmem:[#allocation8 + $0x118] sm:$0xff]
    %v264 = vld [vmem:[#allocation8 + $0x120] sm:$0xff]
    %v265 = vld [vmem:[#allocation8 + $0x128] sm:$0xff]
    %v266 = vld [vmem:[#allocation8 + $0x130] sm:$0xff]
    %v267 = vld [vmem:[#allocation8 + $0x138] sm:$0xff]
    %v268 = vld [vmem:[#allocation8 + $0x140] sm:$0xff]
    %v269 = vld [vmem:[#allocation8 + $0x148] sm:$0xff]
    %v270 = vld [vmem:[#allocation8 + $0x150] sm:$0xff]
    %v271 = vld [vmem:[#allocation8 + $0x158] sm:$0xff]
    %v272 = vld [vmem:[#allocation8 + $0x160] sm:$0xff]
    %v273 = vld [vmem:[#allocation8 + $0x168] sm:$0xff]
    %v274 = vld [vmem:[#allocation8 + $0x170] sm:$0xff]
    %v275 = vld [vmem:[#allocation8 + $0x178] sm:$0xff]
    %v276 = vld [vmem:[#allocation8 + $0x180] sm:$0xff]
    %v277 = vld [vmem:[#allocation8 + $0x188] sm:$0xff]
    %v278 = vld [vmem:[#allocation8 + $0x190] sm:$0xff]
    %v279 = vld [vmem:[#allocation8 + $0x198] sm:$0xff]
    %v280 = vld [vmem:[#allocation8 + $0x1a0] sm:$0xff]
    %v281 = vld [vmem:[#allocation8 + $0x1a8] sm:$0xff]
    %v282 = vld [vmem:[#allocation8 + $0x1b0] sm:$0xff]
    %v283 = vld [vmem:[#allocation8 + $0x1b8] sm:$0xff]
    %v284 = vld [vmem:[#allocation8 + $0x1c0] sm:$0xff]
    %v285 = vld [vmem:[#allocation8 + $0x1c8] sm:$0xff]
    %v286 = vld [vmem:[#allocation8 + $0x1d0] sm:$0xff]
    %v287 = vld [vmem:[#allocation8 + $0x1d8] sm:$0xff]
    %v288 = vld [vmem:[#allocation8 + $0x1e0] sm:$0xff]
    %v289 = vld [vmem:[#allocation8 + $0x1e8] sm:$0xff]
    %v290 = vld [vmem:[#allocation8 + $0x1f0] sm:$0xff]
    %v291 = vld [vmem:[#allocation8 + $0x1f8] sm:$0xff]
    %v292 = vld [vmem:[%s7] sm:$0x1]
    %v293 = vld [vmem:[#allocation2] sm:$0x1]
    %v294 = vperm.slane %v96, 0
    %v295 = vlaneseq
    %v296 = vshrl.u32 %v295, 7
    %298 = vset.pattern.permute.xlu0 %v296
    %299 = vperm.xlu0 %298, %v294
    %v300 = vpop.permute.xlu0 %299
    %v301 = vperm.slane %v96, 1
    %v302 = vlaneseq
    %v303 = vshrl.u32 %v302, 7
    %305 = vset.pattern.permute.xlu0 %v303
    %306 = vperm.xlu0 %305, %v301
    %v307 = vpop.permute.xlu0 %306
    %v308 = vperm.slane %v96, 2
    %v309 = vlaneseq
    %v310 = vshrl.u32 %v309, 7
    %312 = vset.pattern.permute.xlu0 %v310
    %313 = vperm.xlu0 %312, %v308
    %v314 = vpop.permute.xlu0 %313
    %v315 = vperm.slane %v96, 3
    %v316 = vlaneseq
    %v317 = vshrl.u32 %v316, 7
    %319 = vset.pattern.permute.xlu0 %v317
    %320 = vperm.xlu0 %319, %v315
    %v321 = vpop.permute.xlu0 %320
    %v322 = vperm.slane %v96, 4
    %v323 = vlaneseq
    %v324 = vshrl.u32 %v323, 7
    %326 = vset.pattern.permute.xlu0 %v324
    %327 = vperm.xlu0 %326, %v322
    %v328 = vpop.permute.xlu0 %327
    %v329 = vperm.slane %v96, 5
    %v330 = vlaneseq
    %v331 = vshrl.u32 %v330, 7
    %333 = vset.pattern.permute.xlu0 %v331
    %334 = vperm.xlu0 %333, %v329
    %v335 = vpop.permute.xlu0 %334
    %v336 = vperm.slane %v96, 6
    %v337 = vlaneseq
    %v338 = vshrl.u32 %v337, 7
    %340 = vset.pattern.permute.xlu0 %v338
    %341 = vperm.xlu0 %340, %v336
    %v342 = vpop.permute.xlu0 %341
    %v343 = vperm.slane %v96, 7
    %v344 = vlaneseq
    %v345 = vshrl.u32 %v344, 7
    %347 = vset.pattern.permute.xlu0 %v345
    %348 = vperm.xlu0 %347, %v343
    %v349 = vpop.permute.xlu0 %348
    %v351 = vperm.slane %v97, 0
    %v352 = vperm.slane %v97, 1
    %v353 = vperm.slane %v97, 2
    %v354 = vperm.slane %v97, 3
    %v359 = vmul.f32 %v300, %v351
    %v360 = vmul.f32 %v300, %v352
    %v361 = vmul.f32 %v300, %v353
    %v362 = vmul.f32 %v300, %v354
    %v363 = vmul.f32 %v307, %v351
    %v364 = vmul.f32 %v307, %v352
    %v365 = vmul.f32 %v307, %v353
    %v366 = vmul.f32 %v307, %v354
    %v367 = vmul.f32 %v314, %v351
    %v368 = vmul.f32 %v314, %v352
    %v369 = vmul.f32 %v314, %v353
    %v370 = vmul.f32 %v314, %v354
    %v371 = vmul.f32 %v321, %v351
    %v372 = vmul.f32 %v321, %v352
    %v373 = vmul.f32 %v321, %v353
    %v374 = vmul.f32 %v321, %v354
    %v375 = vmul.f32 %v328, %v351
    %v376 = vmul.f32 %v328, %v352
    %v377 = vmul.f32 %v328, %v353
    %v378 = vmul.f32 %v328, %v354
    %v379 = vmul.f32 %v335, %v351
    %v380 = vmul.f32 %v335, %v352
    %v381 = vmul.f32 %v335, %v353
    %v382 = vmul.f32 %v335, %v354
    %v383 = vmul.f32 %v342, %v351
    %v384 = vmul.f32 %v342, %v352
    %v385 = vmul.f32 %v342, %v353
    %v386 = vmul.f32 %v342, %v354
    %v387 = vmul.f32 %v349, %v351
    %v388 = vmul.f32 %v349, %v352
    %v389 = vmul.f32 %v349, %v353
    %v390 = vmul.f32 %v349, %v354
    %v392 = vperm.slane %v98, 0
    %v393 = vperm.slane %v98, 1
    %v394 = vperm.slane %v98, 2
    %v395 = vperm.slane %v98, 3
    %v400 = vadd.f32 %v359, %v392
    %v401 = vadd.f32 %v360, %v393
    %v402 = vadd.f32 %v361, %v394
    %v403 = vadd.f32 %v362, %v395
    %v404 = vadd.f32 %v363, %v392
    %v405 = vadd.f32 %v364, %v393
    %v406 = vadd.f32 %v365, %v394
    %v407 = vadd.f32 %v366, %v395
    %v408 = vadd.f32 %v367, %v392
    %v409 = vadd.f32 %v368, %v393
    %v410 = vadd.f32 %v369, %v394
    %v411 = vadd.f32 %v370, %v395
    %v412 = vadd.f32 %v371, %v392
    %v413 = vadd.f32 %v372, %v393
    %v414 = vadd.f32 %v373, %v394
    %v415 = vadd.f32 %v374, %v395
    %v416 = vadd.f32 %v375, %v392
    %v417 = vadd.f32 %v376, %v393
    %v418 = vadd.f32 %v377, %v394
    %v419 = vadd.f32 %v378, %v395
    %v420 = vadd.f32 %v379, %v392
    %v421 = vadd.f32 %v380, %v393
    %v422 = vadd.f32 %v381, %v394
    %v423 = vadd.f32 %v382, %v395
    %v424 = vadd.f32 %v383, %v392
    %v425 = vadd.f32 %v384, %v393
    %v426 = vadd.f32 %v385, %v394
    %v427 = vadd.f32 %v386, %v395
    %v428 = vadd.f32 %v387, %v392
    %v429 = vadd.f32 %v388, %v393
    %v430 = vadd.f32 %v389, %v394
    %v431 = vadd.f32 %v390, %v395
    %v433 = vperm.slane %v227, 0
    %v434 = vperm.slane %v227, 1
    %v435 = vperm.slane %v227, 2
    %v436 = vperm.slane %v227, 3
    %v441 = vadd.f32 %v400, 0.0
    %v442 = vadd.f32 %v401, 0.0
    %v443 = vadd.f32 %v402, 0.0
    %v444 = vadd.f32 %v403, 0.0
    %v445 = vxor.u32 %v441, 2147483648
    %v446 = vmul.f32 %v445, 1.442695
    %v447 = vpow.pop %v446
    %v448 = vadd.f32 %v447, 1.0
    %v449 = vrcp.pop %v448
    %v450 = vmul.f32 %v448, %v449
    %v451 = vsub.f32 1.0, %v450
    %v452 = vmul.f32 %v449, %v451
    %v453 = vadd.f32 %v449, %v452
    %vm454 = vweird.f32 %v448
    %vm455 = vweird.f32 %v449
    %vm456 = vmor %vm454, %vm455
    %v457 = vsel %vm456, %v449, %v453
    %v458 = vand.u32 2147483647, %v448
    %vm459 = vcmp.eq.f32.partialorder %v458, 8.507059e+37
    %v460 = vand.u32 %v448, 2147483648
    %v461 = vor.u32 1.1754944e-38, %v460
    %v462 = vsel %vm459, %v461, %v457
    %v463 = vmul.f32 1.0, %v462
    %v464 = vxor.u32 %v442, 2147483648
    %v465 = vmul.f32 %v464, 1.442695
    %v466 = vpow.pop %v465
    %v467 = vadd.f32 %v466, 1.0
    %v468 = vrcp.pop %v467
    %v469 = vmul.f32 %v467, %v468
    %v470 = vsub.f32 1.0, %v469
    %v471 = vmul.f32 %v468, %v470
    %v472 = vadd.f32 %v468, %v471
    %vm473 = vweird.f32 %v467
    %vm474 = vweird.f32 %v468
    %vm475 = vmor %vm473, %vm474
    %v476 = vsel %vm475, %v468, %v472
    %v477 = vand.u32 2147483647, %v467
    %vm478 = vcmp.eq.f32.partialorder %v477, 8.507059e+37
    %v479 = vand.u32 %v467, 2147483648
    %v480 = vor.u32 1.1754944e-38, %v479
    %v481 = vsel %vm478, %v480, %v476
    %v482 = vmul.f32 1.0, %v481
    %v483 = vtanh.pop %v443
    %v484 = vxor.u32 %v444, 2147483648
    %v485 = vmul.f32 %v484, 1.442695
    %v486 = vpow.pop %v485
    %v487 = vadd.f32 %v486, 1.0
    %v488 = vrcp.pop %v487
    %v489 = vmul.f32 %v487, %v488
    %v490 = vsub.f32 1.0, %v489
    %v491 = vmul.f32 %v488, %v490
    %v492 = vadd.f32 %v488, %v491
    %vm493 = vweird.f32 %v487
    %vm494 = vweird.f32 %v488
    %vm495 = vmor %vm493, %vm494
    %v496 = vsel %vm495, %v488, %v492
    %v497 = vand.u32 2147483647, %v487
    %vm498 = vcmp.eq.f32.partialorder %v497, 8.507059e+37
    %v499 = vand.u32 %v487, 2147483648
    %v500 = vor.u32 1.1754944e-38, %v499
    %v501 = vsel %vm498, %v500, %v496
    %v502 = vmul.f32 1.0, %v501
    %v503 = vmul.f32 %v482, 0.0
    %v504 = vmul.f32 %v463, %v483
    %v505 = vadd.f32 %v503, %v504
    %v506 = vtanh.pop %v505
    %v507 = vmul.f32 %v502, %v506
    %508 = vmatpush.msra.mxu0 %v219
    %509 = vmatpush.msra.mxu0 %v211
    %510 = vmatpush.msra.mxu0 %v203
    %511 = vmatpush.msra.mxu0 %v195
    %512 = vmatpush.msra.mxu0 %v187
    %513 = vmatpush.msra.mxu0 %v179
    %514 = vmatpush.msra.mxu0 %v171
    %515 = vmatpush.msra.mxu0 %v163
    %516 = vmatpush.msra.mxu0 %v155
    %517 = vmatpush.msra.mxu0 %v147
    %518 = vmatpush.msra.mxu0 %v139
    %519 = vmatpush.msra.mxu0 %v131
    %520 = vmatpush.msra.mxu0 %v123
    %521 = vmatpush.msra.mxu0 %v115
    %522 = vmatpush.msra.mxu0 %v107
    %523 = vmatpush.msra.mxu0 %v99
    %524 = vmatmul.f32.gmra.mxu0 %v507
    %v525 = vpop.f32.mrf.mxu0
    %v526 = vadd.f32 0.0, %v525
    %527 = vdwg.mxu0
    %528 = vmatpush.msra.mxu0 %v220
    %529 = vmatpush.msra.mxu0 %v212
    %530 = vmatpush.msra.mxu0 %v204
    %531 = vmatpush.msra.mxu0 %v196
    %532 = vmatpush.msra.mxu0 %v188
    %533 = vmatpush.msra.mxu0 %v180
    %534 = vmatpush.msra.mxu0 %v172
    %535 = vmatpush.msra.mxu0 %v164
    %536 = vmatpush.msra.mxu0 %v156
    %537 = vmatpush.msra.mxu0 %v148
    %538 = vmatpush.msra.mxu0 %v140
    %539 = vmatpush.msra.mxu0 %v132
    %540 = vmatpush.msra.mxu0 %v124
    %541 = vmatpush.msra.mxu0 %v116
    %542 = vmatpush.msra.mxu0 %v108
    %543 = vmatpush.msra.mxu0 %v100
    %544 = vmatmul.f32.gmra.mxu0 %v507
    %v545 = vpop.f32.mrf.mxu0
    %v546 = vadd.f32 0.0, %v545
    %547 = vdwg.mxu0
    %548 = vmatpush.msra.mxu0 %v221
    %549 = vmatpush.msra.mxu0 %v213
    %550 = vmatpush.msra.mxu0 %v205
    %551 = vmatpush.msra.mxu0 %v197
    %552 = vmatpush.msra.mxu0 %v189
    %553 = vmatpush.msra.mxu0 %v181
    %554 = vmatpush.msra.mxu0 %v173
    %555 = vmatpush.msra.mxu0 %v165
    %556 = vmatpush.msra.mxu0 %v157
    %557 = vmatpush.msra.mxu0 %v149
    %558 = vmatpush.msra.mxu0 %v141
    %559 = vmatpush.msra.mxu0 %v133
    %560 = vmatpush.msra.mxu0 %v125
    %561 = vmatpush.msra.mxu0 %v117
    %562 = vmatpush.msra.mxu0 %v109
    %563 = vmatpush.msra.mxu0 %v101
    %564 = vmatmul.f32.gmra.mxu0 %v507
    %v565 = vpop.f32.mrf.mxu0
    %v566 = vadd.f32 0.0, %v565
    %567 = vdwg.mxu0
    %568 = vmatpush.msra.mxu0 %v222
    %569 = vmatpush.msra.mxu0 %v214
    %570 = vmatpush.msra.mxu0 %v206
    %571 = vmatpush.msra.mxu0 %v198
    %572 = vmatpush.msra.mxu0 %v190
    %573 = vmatpush.msra.mxu0 %v182
    %574 = vmatpush.msra.mxu0 %v174
    %575 = vmatpush.msra.mxu0 %v166
    %576 = vmatpush.msra.mxu0 %v158
    %577 = vmatpush.msra.mxu0 %v150
    %578 = vmatpush.msra.mxu0 %v142
    %579 = vmatpush.msra.mxu0 %v134
    %580 = vmatpush.msra.mxu0 %v126
    %581 = vmatpush.msra.mxu0 %v118
    %582 = vmatpush.msra.mxu0 %v110
    %583 = vmatpush.msra.mxu0 %v102
    %584 = vmatmul.f32.gmra.mxu0 %v507
    %v585 = vpop.f32.mrf.mxu0
    %v586 = vadd.f32 0.0, %v585
    %587 = vdwg.mxu0
    %588 = vmatpush.msra.mxu0 %v223
    %589 = vmatpush.msra.mxu0 %v215
    %590 = vmatpush.msra.mxu0 %v207
    %591 = vmatpush.msra.mxu0 %v199
    %592 = vmatpush.msra.mxu0 %v191
    %593 = vmatpush.msra.mxu0 %v183
    %594 = vmatpush.msra.mxu0 %v175
    %595 = vmatpush.msra.mxu0 %v167
    %596 = vmatpush.msra.mxu0 %v159
    %597 = vmatpush.msra.mxu0 %v151
    %598 = vmatpush.msra.mxu0 %v143
    %599 = vmatpush.msra.mxu0 %v135
    %600 = vmatpush.msra.mxu0 %v127
    %601 = vmatpush.msra.mxu0 %v119
    %602 = vmatpush.msra.mxu0 %v111
    %603 = vmatpush.msra.mxu0 %v103
    %604 = vmatmul.f32.gmra.mxu0 %v507
    %v605 = vpop.f32.mrf.mxu0
    %v606 = vadd.f32 0.0, %v605
    %607 = vdwg.mxu0
    %608 = vmatpush.msra.mxu0 %v224
    %609 = vmatpush.msra.mxu0 %v216
    %610 = vmatpush.msra.mxu0 %v208
    %611 = vmatpush.msra.mxu0 %v200
    %612 = vmatpush.msra.mxu0 %v192
    %613 = vmatpush.msra.mxu0 %v184
    %614 = vmatpush.msra.mxu0 %v176
    %615 = vmatpush.msra.mxu0 %v168
    %616 = vmatpush.msra.mxu0 %v160
    %617 = vmatpush.msra.mxu0 %v152
    %618 = vmatpush.msra.mxu0 %v144
    %619 = vmatpush.msra.mxu0 %v136
    %620 = vmatpush.msra.mxu0 %v128
    %621 = vmatpush.msra.mxu0 %v120
    %622 = vmatpush.msra.mxu0 %v112
    %623 = vmatpush.msra.mxu0 %v104
    %624 = vmatmul.f32.gmra.mxu0 %v507
    %v625 = vpop.f32.mrf.mxu0
    %v626 = vadd.f32 0.0, %v625
    %627 = vdwg.mxu0
    %628 = vmatpush.msra.mxu0 %v225
    %629 = vmatpush.msra.mxu0 %v217
    %630 = vmatpush.msra.mxu0 %v209
    %631 = vmatpush.msra.mxu0 %v201
    %632 = vmatpush.msra.mxu0 %v193
    %633 = vmatpush.msra.mxu0 %v185
    %634 = vmatpush.msra.mxu0 %v177
    %635 = vmatpush.msra.mxu0 %v169
    %636 = vmatpush.msra.mxu0 %v161
    %637 = vmatpush.msra.mxu0 %v153
    %638 = vmatpush.msra.mxu0 %v145
    %639 = vmatpush.msra.mxu0 %v137
    %640 = vmatpush.msra.mxu0 %v129
    %641 = vmatpush.msra.mxu0 %v121
    %642 = vmatpush.msra.mxu0 %v113
    %643 = vmatpush.msra.mxu0 %v105
    %644 = vmatmul.f32.gmra.mxu0 %v507
    %v645 = vpop.f32.mrf.mxu0
    %v646 = vadd.f32 0.0, %v645
    %647 = vdwg.mxu0
    %648 = vmatpush.msra.mxu0 %v226
    %649 = vmatpush.msra.mxu0 %v218
    %650 = vmatpush.msra.mxu0 %v210
    %651 = vmatpush.msra.mxu0 %v202
    %652 = vmatpush.msra.mxu0 %v194
    %653 = vmatpush.msra.mxu0 %v186
    %654 = vmatpush.msra.mxu0 %v178
    %655 = vmatpush.msra.mxu0 %v170
    %656 = vmatpush.msra.mxu0 %v162
    %657 = vmatpush.msra.mxu0 %v154
    %658 = vmatpush.msra.mxu0 %v146
    %659 = vmatpush.msra.mxu0 %v138
    %660 = vmatpush.msra.mxu0 %v130
    %661 = vmatpush.msra.mxu0 %v122
    %662 = vmatpush.msra.mxu0 %v114
    %663 = vmatpush.msra.mxu0 %v106
    %664 = vmatmul.f32.gmra.mxu0 %v507
    %v665 = vpop.f32.mrf.mxu0
    %v666 = vadd.f32 0.0, %v665
    %667 = vdwg.mxu0
    %v668 = vadd.f32 %v526, 0.0
    %v669 = vadd.f32 %v546, 0.0
    %v670 = vadd.f32 %v566, 0.0
    %v671 = vadd.f32 %v586, 0.0
    %v672 = vadd.f32 %v668, %v433
    %v673 = vadd.f32 %v669, %v434
    %v674 = vadd.f32 %v670, %v435
    %v675 = vadd.f32 %v671, %v436
    %v676 = vxor.u32 %v672, 2147483648
    %v677 = vmul.f32 %v676, 1.442695
    %v678 = vpow.pop %v677
    %v679 = vadd.f32 %v678, 1.0
    %v680 = vrcp.pop %v679
    %v681 = vmul.f32 %v679, %v680
    %v682 = vsub.f32 1.0, %v681
    %v683 = vmul.f32 %v680, %v682
    %v684 = vadd.f32 %v680, %v683
    %vm685 = vweird.f32 %v679
    %vm686 = vweird.f32 %v680
    %vm687 = vmor %vm685, %vm686
    %v688 = vsel %vm687, %v680, %v684
    %v689 = vand.u32 2147483647, %v679
    %vm690 = vcmp.eq.f32.partialorder %v689, 8.507059e+37
    %v691 = vand.u32 %v679, 2147483648
    %v692 = vor.u32 1.1754944e-38, %v691
    %v693 = vsel %vm690, %v692, %v688
    %v694 = vmul.f32 1.0, %v693
    %v695 = vxor.u32 %v673, 2147483648
    %v696 = vmul.f32 %v695, 1.442695
    %v697 = vpow.pop %v696
    %v698 = vadd.f32 %v697, 1.0
    %v699 = vrcp.pop %v698
    %v700 = vmul.f32 %v698, %v699
    %v701 = vsub.f32 1.0, %v700
    %v702 = vmul.f32 %v699, %v701
    %v703 = vadd.f32 %v699, %v702
    %vm704 = vweird.f32 %v698
    %vm705 = vweird.f32 %v699
    %vm706 = vmor %vm704, %vm705
    %v707 = vsel %vm706, %v699, %v703
    %v708 = vand.u32 2147483647, %v698
    %vm709 = vcmp.eq.f32.partialorder %v708, 8.507059e+37
    %v710 = vand.u32 %v698, 2147483648
    %v711 = vor.u32 1.1754944e-38, %v710
    %v712 = vsel %vm709, %v711, %v707
    %v713 = vmul.f32 1.0, %v712
    %v714 = vtanh.pop %v674
    %v715 = vxor.u32 %v675, 2147483648
    %v716 = vmul.f32 %v715, 1.442695
    %v717 = vpow.pop %v716
    %v718 = vadd.f32 %v717, 1.0
    %v719 = vrcp.pop %v718
    %v720 = vmul.f32 %v718, %v719
    %v721 = vsub.f32 1.0, %v720
    %v722 = vmul.f32 %v719, %v721
    %v723 = vadd.f32 %v719, %v722
    %vm724 = vweird.f32 %v718
    %vm725 = vweird.f32 %v719
    %vm726 = vmor %vm724, %vm725
    %v727 = vsel %vm726, %v719, %v723
    %v728 = vand.u32 2147483647, %v718
    %vm729 = vcmp.eq.f32.partialorder %v728, 8.507059e+37
    %v730 = vand.u32 %v718, 2147483648
    %v731 = vor.u32 1.1754944e-38, %v730
    %v732 = vsel %vm729, %v731, %v727
    %v733 = vmul.f32 1.0, %v732
    %v734 = vmul.f32 %v713, 0.0
    %v735 = vmul.f32 %v694, %v714
    %v736 = vadd.f32 %v734, %v735
    %v737 = vtanh.pop %v736
    %v738 = vmul.f32 %v733, %v737
    %739 = vmatpush.msra.mxu0 %v288
    %740 = vmatpush.msra.mxu0 %v284
    %741 = vmatpush.msra.mxu0 %v280
    %742 = vmatpush.msra.mxu0 %v276
    %743 = vmatpush.msra.mxu0 %v272
    %744 = vmatpush.msra.mxu0 %v268
    %745 = vmatpush.msra.mxu0 %v264
    %746 = vmatpush.msra.mxu0 %v260
    %747 = vmatpush.msra.mxu0 %v256
    %748 = vmatpush.msra.mxu0 %v252
    %749 = vmatpush.msra.mxu0 %v248
    %750 = vmatpush.msra.mxu0 %v244
    %751 = vmatpush.msra.mxu0 %v240
    %752 = vmatpush.msra.mxu0 %v236
    %753 = vmatpush.msra.mxu0 %v232
    %754 = vmatpush.msra.mxu0 %v228
    %755 = vmatmul.f32.gmra.mxu0 %v738
    %v756 = vpop.f32.mrf.mxu0
    %v757 = vadd.f32 0.0, %v756
    %758 = vdwg.mxu0
    %759 = vmatpush.msra.mxu0 %v289
    %760 = vmatpush.msra.mxu0 %v285
    %761 = vmatpush.msra.mxu0 %v281
    %762 = vmatpush.msra.mxu0 %v277
    %763 = vmatpush.msra.mxu0 %v273
    %764 = vmatpush.msra.mxu0 %v269
    %765 = vmatpush.msra.mxu0 %v265
    %766 = vmatpush.msra.mxu0 %v261
    %767 = vmatpush.msra.mxu0 %v257
    %768 = vmatpush.msra.mxu0 %v253
    %769 = vmatpush.msra.mxu0 %v249
    %770 = vmatpush.msra.mxu0 %v245
    %771 = vmatpush.msra.mxu0 %v241
    %772 = vmatpush.msra.mxu0 %v237
    %773 = vmatpush.msra.mxu0 %v233
    %774 = vmatpush.msra.mxu0 %v229
    %775 = vmatmul.f32.gmra.mxu0 %v738
    %v776 = vpop.f32.mrf.mxu0
    %v777 = vadd.f32 0.0, %v776
    %778 = vdwg.mxu0
    %779 = vmatpush.msra.mxu0 %v290
    %780 = vmatpush.msra.mxu0 %v286
    %781 = vmatpush.msra.mxu0 %v282
    %782 = vmatpush.msra.mxu0 %v278
    %783 = vmatpush.msra.mxu0 %v274
    %784 = vmatpush.msra.mxu0 %v270
    %785 = vmatpush.msra.mxu0 %v266
    %786 = vmatpush.msra.mxu0 %v262
    %787 = vmatpush.msra.mxu0 %v258
    %788 = vmatpush.msra.mxu0 %v254
    %789 = vmatpush.msra.mxu0 %v250
    %790 = vmatpush.msra.mxu0 %v246
    %791 = vmatpush.msra.mxu0 %v242
    %792 = vmatpush.msra.mxu0 %v238
    %793 = vmatpush.msra.mxu0 %v234
    %794 = vmatpush.msra.mxu0 %v230
    %795 = vmatmul.f32.gmra.mxu0 %v738
    %v796 = vpop.f32.mrf.mxu0
    %v797 = vadd.f32 0.0, %v796
    %798 = vdwg.mxu0
    %799 = vmatpush.msra.mxu0 %v291
    %800 = vmatpush.msra.mxu0 %v287
    %801 = vmatpush.msra.mxu0 %v283
    %802 = vmatpush.msra.mxu0 %v279
    %803 = vmatpush.msra.mxu0 %v275
    %804 = vmatpush.msra.mxu0 %v271
    %805 = vmatpush.msra.mxu0 %v267
    %806 = vmatpush.msra.mxu0 %v263
    %807 = vmatpush.msra.mxu0 %v259
    %808 = vmatpush.msra.mxu0 %v255
    %809 = vmatpush.msra.mxu0 %v251
    %810 = vmatpush.msra.mxu0 %v247
    %811 = vmatpush.msra.mxu0 %v243
    %812 = vmatpush.msra.mxu0 %v239
    %813 = vmatpush.msra.mxu0 %v235
    %814 = vmatpush.msra.mxu0 %v231
    %815 = vmatmul.f32.gmra.mxu0 %v738
    %v816 = vpop.f32.mrf.mxu0
    %v817 = vadd.f32 0.0, %v816
    %818 = vdwg.mxu0
    %v820 = vperm.slane %v292, 0
    %v822 = vmul.f32 %v738, %v820
    %vm823 = vcmask 1041408
    %v824 = vsel %vm823, %v822, 0.0
    %825 = vadd.xlane.f32.xlu0 %v824
    %v826 = vpop.xlane.xlu0 %825
    %v828 = vperm.slane %v293, 0
    %v830 = vadd.f32 %v826, %v828
    %v831 = vadd.f32 %v404, %v606
    %v832 = vadd.f32 %v405, %v626
    %v833 = vadd.f32 %v406, %v646
    %v834 = vadd.f32 %v407, %v666
    %v835 = vxor.u32 %v831, 2147483648
    %v836 = vmul.f32 %v835, 1.442695
    %v837 = vpow.pop %v836
    %v838 = vadd.f32 %v837, 1.0
    %v839 = vrcp.pop %v838
    %v840 = vmul.f32 %v838, %v839
    %v841 = vsub.f32 1.0, %v840
    %v842 = vmul.f32 %v839, %v841
    %v843 = vadd.f32 %v839, %v842
    %vm844 = vweird.f32 %v838
    %vm845 = vweird.f32 %v839
    %vm846 = vmor %vm844, %vm845
    %v847 = vsel %vm846, %v839, %v843
    %v848 = vand.u32 2147483647, %v838
    %vm849 = vcmp.eq.f32.partialorder %v848, 8.507059e+37
    %v850 = vand.u32 %v838, 2147483648
    %v851 = vor.u32 1.1754944e-38, %v850
    %v852 = vsel %vm849, %v851, %v847
    %v853 = vmul.f32 1.0, %v852
    %v854 = vxor.u32 %v832, 2147483648
    %v855 = vmul.f32 %v854, 1.442695
    %v856 = vpow.pop %v855
    %v857 = vadd.f32 %v856, 1.0
    %v858 = vrcp.pop %v857
    %v859 = vmul.f32 %v857, %v858
    %v860 = vsub.f32 1.0, %v859
    %v861 = vmul.f32 %v858, %v860
    %v862 = vadd.f32 %v858, %v861
    %vm863 = vweird.f32 %v857
    %vm864 = vweird.f32 %v858
    %vm865 = vmor %vm863, %vm864
    %v866 = vsel %vm865, %v858, %v862
    %v867 = vand.u32 2147483647, %v857
    %vm868 = vcmp.eq.f32.partialorder %v867, 8.507059e+37
    %v869 = vand.u32 %v857, 2147483648
    %v870 = vor.u32 1.1754944e-38, %v869
    %v871 = vsel %vm868, %v870, %v866
    %v872 = vmul.f32 1.0, %v871
    %v873 = vtanh.pop %v833
    %v874 = vxor.u32 %v834, 2147483648
    %v875 = vmul.f32 %v874, 1.442695
    %v876 = vpow.pop %v875
    %v877 = vadd.f32 %v876, 1.0
    %v878 = vrcp.pop %v877
    %v879 = vmul.f32 %v877, %v878
    %v880 = vsub.f32 1.0, %v879
    %v881 = vmul.f32 %v878, %v880
    %v882 = vadd.f32 %v878, %v881
    %vm883 = vweird.f32 %v877
    %vm884 = vweird.f32 %v878
    %vm885 = vmor %vm883, %vm884
    %v886 = vsel %vm885, %v878, %v882
    %v887 = vand.u32 2147483647, %v877
    %vm888 = vcmp.eq.f32.partialorder %v887, 8.507059e+37
    %v889 = vand.u32 %v877, 2147483648
    %v890 = vor.u32 1.1754944e-38, %v889
    %v891 = vsel %vm888, %v890, %v886
    %v892 = vmul.f32 1.0, %v891
    %v893 = vmul.f32 %v872, %v505
    %v894 = vmul.f32 %v853, %v873
    %v895 = vadd.f32 %v893, %v894
    %v896 = vtanh.pop %v895
    %v897 = vmul.f32 %v892, %v896
    %898 = vmatpush.msra.mxu0 %v219
    %899 = vmatpush.msra.mxu0 %v211
    %900 = vmatpush.msra.mxu0 %v203
    %901 = vmatpush.msra.mxu0 %v195
    %902 = vmatpush.msra.mxu0 %v187
    %903 = vmatpush.msra.mxu0 %v179
    %904 = vmatpush.msra.mxu0 %v171
    %905 = vmatpush.msra.mxu0 %v163
    %906 = vmatpush.msra.mxu0 %v155
    %907 = vmatpush.msra.mxu0 %v147
    %908 = vmatpush.msra.mxu0 %v139
    %909 = vmatpush.msra.mxu0 %v131
    %910 = vmatpush.msra.mxu0 %v123
    %911 = vmatpush.msra.mxu0 %v115
    %912 = vmatpush.msra.mxu0 %v107
    %913 = vmatpush.msra.mxu0 %v99
    %914 = vmatmul.f32.gmra.mxu0 %v897
    %v915 = vpop.f32.mrf.mxu0
    %v916 = vadd.f32 0.0, %v915
    %917 = vdwg.mxu0
    %918 = vmatpush.msra.mxu0 %v220
    %919 = vmatpush.msra.mxu0 %v212
    %920 = vmatpush.msra.mxu0 %v204
    %921 = vmatpush.msra.mxu0 %v196
    %922 = vmatpush.msra.mxu0 %v188
    %923 = vmatpush.msra.mxu0 %v180
    %924 = vmatpush.msra.mxu0 %v172
    %925 = vmatpush.msra.mxu0 %v164
    %926 = vmatpush.msra.mxu0 %v156
    %927 = vmatpush.msra.mxu0 %v148
    %928 = vmatpush.msra.mxu0 %v140
    %929 = vmatpush.msra.mxu0 %v132
    %930 = vmatpush.msra.mxu0 %v124
    %931 = vmatpush.msra.mxu0 %v116
    %932 = vmatpush.msra.mxu0 %v108
    %933 = vmatpush.msra.mxu0 %v100
    %934 = vmatmul.f32.gmra.mxu0 %v897
    %v935 = vpop.f32.mrf.mxu0
    %v936 = vadd.f32 0.0, %v935
    %937 = vdwg.mxu0
    %938 = vmatpush.msra.mxu0 %v221
    %939 = vmatpush.msra.mxu0 %v213
    %940 = vmatpush.msra.mxu0 %v205
    %941 = vmatpush.msra.mxu0 %v197
    %942 = vmatpush.msra.mxu0 %v189
    %943 = vmatpush.msra.mxu0 %v181
    %944 = vmatpush.msra.mxu0 %v173
    %945 = vmatpush.msra.mxu0 %v165
    %946 = vmatpush.msra.mxu0 %v157
    %947 = vmatpush.msra.mxu0 %v149
    %948 = vmatpush.msra.mxu0 %v141
    %949 = vmatpush.msra.mxu0 %v133
    %950 = vmatpush.msra.mxu0 %v125
    %951 = vmatpush.msra.mxu0 %v117
    %952 = vmatpush.msra.mxu0 %v109
    %953 = vmatpush.msra.mxu0 %v101
    %954 = vmatmul.f32.gmra.mxu0 %v897
    %v955 = vpop.f32.mrf.mxu0
    %v956 = vadd.f32 0.0, %v955
    %957 = vdwg.mxu0
    %958 = vmatpush.msra.mxu0 %v222
    %959 = vmatpush.msra.mxu0 %v214
    %960 = vmatpush.msra.mxu0 %v206
    %961 = vmatpush.msra.mxu0 %v198
    %962 = vmatpush.msra.mxu0 %v190
    %963 = vmatpush.msra.mxu0 %v182
    %964 = vmatpush.msra.mxu0 %v174
    %965 = vmatpush.msra.mxu0 %v166
    %966 = vmatpush.msra.mxu0 %v158
    %967 = vmatpush.msra.mxu0 %v150
    %968 = vmatpush.msra.mxu0 %v142
    %969 = vmatpush.msra.mxu0 %v134
    %970 = vmatpush.msra.mxu0 %v126
    %971 = vmatpush.msra.mxu0 %v118
    %972 = vmatpush.msra.mxu0 %v110
    %973 = vmatpush.msra.mxu0 %v102
    %974 = vmatmul.f32.gmra.mxu0 %v897
    %v975 = vpop.f32.mrf.mxu0
    %v976 = vadd.f32 0.0, %v975
    %977 = vdwg.mxu0
    %978 = vmatpush.msra.mxu0 %v223
    %979 = vmatpush.msra.mxu0 %v215
    %980 = vmatpush.msra.mxu0 %v207
    %981 = vmatpush.msra.mxu0 %v199
    %982 = vmatpush.msra.mxu0 %v191
    %983 = vmatpush.msra.mxu0 %v183
    %984 = vmatpush.msra.mxu0 %v175
    %985 = vmatpush.msra.mxu0 %v167
    %986 = vmatpush.msra.mxu0 %v159
    %987 = vmatpush.msra.mxu0 %v151
    %988 = vmatpush.msra.mxu0 %v143
    %989 = vmatpush.msra.mxu0 %v135
    %990 = vmatpush.msra.mxu0 %v127
    %991 = vmatpush.msra.mxu0 %v119
    %992 = vmatpush.msra.mxu0 %v111
    %993 = vmatpush.msra.mxu0 %v103
    %994 = vmatmul.f32.gmra.mxu0 %v897
    %v995 = vpop.f32.mrf.mxu0
    %v996 = vadd.f32 0.0, %v995
    %997 = vdwg.mxu0
    %998 = vmatpush.msra.mxu0 %v224
    %999 = vmatpush.msra.mxu0 %v216
    %1000 = vmatpush.msra.mxu0 %v208
    %1001 = vmatpush.msra.mxu0 %v200
    %1002 = vmatpush.msra.mxu0 %v192
    %1003 = vmatpush.msra.mxu0 %v184
    %1004 = vmatpush.msra.mxu0 %v176
    %1005 = vmatpush.msra.mxu0 %v168
    %1006 = vmatpush.msra.mxu0 %v160
    %1007 = vmatpush.msra.mxu0 %v152
    %1008 = vmatpush.msra.mxu0 %v144
    %1009 = vmatpush.msra.mxu0 %v136
    %1010 = vmatpush.msra.mxu0 %v128
    %1011 = vmatpush.msra.mxu0 %v120
    %1012 = vmatpush.msra.mxu0 %v112
    %1013 = vmatpush.msra.mxu0 %v104
    %1014 = vmatmul.f32.gmra.mxu0 %v897
    %v1015 = vpop.f32.mrf.mxu0
    %v1016 = vadd.f32 0.0, %v1015
    %1017 = vdwg.mxu0
    %1018 = vmatpush.msra.mxu0 %v225
    %1019 = vmatpush.msra.mxu0 %v217
    %1020 = vmatpush.msra.mxu0 %v209
    %1021 = vmatpush.msra.mxu0 %v201
    %1022 = vmatpush.msra.mxu0 %v193
    %1023 = vmatpush.msra.mxu0 %v185
    %1024 = vmatpush.msra.mxu0 %v177
    %1025 = vmatpush.msra.mxu0 %v169
    %1026 = vmatpush.msra.mxu0 %v161
    %1027 = vmatpush.msra.mxu0 %v153
    %1028 = vmatpush.msra.mxu0 %v145
    %1029 = vmatpush.msra.mxu0 %v137
    %1030 = vmatpush.msra.mxu0 %v129
    %1031 = vmatpush.msra.mxu0 %v121
    %1032 = vmatpush.msra.mxu0 %v113
    %1033 = vmatpush.msra.mxu0 %v105
    %1034 = vmatmul.f32.gmra.mxu0 %v897
    %v1035 = vpop.f32.mrf.mxu0
    %v1036 = vadd.f32 0.0, %v1035
    %1037 = vdwg.mxu0
    %1038 = vmatpush.msra.mxu0 %v226
    %1039 = vmatpush.msra.mxu0 %v218
    %1040 = vmatpush.msra.mxu0 %v210
    %1041 = vmatpush.msra.mxu0 %v202
    %1042 = vmatpush.msra.mxu0 %v194
    %1043 = vmatpush.msra.mxu0 %v186
    %1044 = vmatpush.msra.mxu0 %v178
    %1045 = vmatpush.msra.mxu0 %v170
    %1046 = vmatpush.msra.mxu0 %v162
    %1047 = vmatpush.msra.mxu0 %v154
    %1048 = vmatpush.msra.mxu0 %v146
    %1049 = vmatpush.msra.mxu0 %v138
    %1050 = vmatpush.msra.mxu0 %v130
    %1051 = vmatpush.msra.mxu0 %v122
    %1052 = vmatpush.msra.mxu0 %v114
    %1053 = vmatpush.msra.mxu0 %v106
    %1054 = vmatmul.f32.gmra.mxu0 %v897
    %v1055 = vpop.f32.mrf.mxu0
    %v1056 = vadd.f32 0.0, %v1055
    %1057 = vdwg.mxu0
    %v1058 = vadd.f32 %v916, %v757
    %v1059 = vadd.f32 %v936, %v777
    %v1060 = vadd.f32 %v956, %v797
    %v1061 = vadd.f32 %v976, %v817
    %v1062 = vadd.f32 %v1058, %v433
    %v1063 = vadd.f32 %v1059, %v434
    %v1064 = vadd.f32 %v1060, %v435
    %v1065 = vadd.f32 %v1061, %v436
    %v1066 = vxor.u32 %v1062, 2147483648
    %v1067 = vmul.f32 %v1066, 1.442695
    %v1068 = vpow.pop %v1067
    %v1069 = vadd.f32 %v1068, 1.0
    %v1070 = vrcp.pop %v1069
    %v1071 = vmul.f32 %v1069, %v1070
    %v1072 = vsub.f32 1.0, %v1071
    %v1073 = vmul.f32 %v1070, %v1072
    %v1074 = vadd.f32 %v1070, %v1073
    %vm1075 = vweird.f32 %v1069
    %vm1076 = vweird.f32 %v1070
    %vm1077 = vmor %vm1075, %vm1076
    %v1078 = vsel %vm1077, %v1070, %v1074
    %v1079 = vand.u32 2147483647, %v1069
    %vm1080 = vcmp.eq.f32.partialorder %v1079, 8.507059e+37
    %v1081 = vand.u32 %v1069, 2147483648
    %v1082 = vor.u32 1.1754944e-38, %v1081
    %v1083 = vsel %vm1080, %v1082, %v1078
    %v1084 = vmul.f32 1.0, %v1083
    %v1085 = vxor.u32 %v1063, 2147483648
    %v1086 = vmul.f32 %v1085, 1.442695
    %v1087 = vpow.pop %v1086
    %v1088 = vadd.f32 %v1087, 1.0
    %v1089 = vrcp.pop %v1088
    %v1090 = vmul.f32 %v1088, %v1089
    %v1091 = vsub.f32 1.0, %v1090
    %v1092 = vmul.f32 %v1089, %v1091
    %v1093 = vadd.f32 %v1089, %v1092
    %vm1094 = vweird.f32 %v1088
    %vm1095 = vweird.f32 %v1089
    %vm1096 = vmor %vm1094, %vm1095
    %v1097 = vsel %vm1096, %v1089, %v1093
    %v1098 = vand.u32 2147483647, %v1088
    %vm1099 = vcmp.eq.f32.partialorder %v1098, 8.507059e+37
    %v1100 = vand.u32 %v1088, 2147483648
    %v1101 = vor.u32 1.1754944e-38, %v1100
    %v1102 = vsel %vm1099, %v1101, %v1097
    %v1103 = vmul.f32 1.0, %v1102
    %v1104 = vtanh.pop %v1064
    %v1105 = vxor.u32 %v1065, 2147483648
    %v1106 = vmul.f32 %v1105, 1.442695
    %v1107 = vpow.pop %v1106
    %v1108 = vadd.f32 %v1107, 1.0
    %v1109 = vrcp.pop %v1108
    %v1110 = vmul.f32 %v1108, %v1109
    %v1111 = vsub.f32 1.0, %v1110
    %v1112 = vmul.f32 %v1109, %v1111
    %v1113 = vadd.f32 %v1109, %v1112
    %vm1114 = vweird.f32 %v1108
    %vm1115 = vweird.f32 %v1109
    %vm1116 = vmor %vm1114, %vm1115
    %v1117 = vsel %vm1116, %v1109, %v1113
    %v1118 = vand.u32 2147483647, %v1108
    %vm1119 = vcmp.eq.f32.partialorder %v1118, 8.507059e+37
    %v1120 = vand.u32 %v1108, 2147483648
    %v1121 = vor.u32 1.1754944e-38, %v1120
    %v1122 = vsel %vm1119, %v1121, %v1117
    %v1123 = vmul.f32 1.0, %v1122
    %v1124 = vmul.f32 %v1103, %v736
    %v1125 = vmul.f32 %v1084, %v1104
    %v1126 = vadd.f32 %v1124, %v1125
    %v1127 = vtanh.pop %v1126
    %v1128 = vmul.f32 %v1123, %v1127
    %1129 = vmatpush.msra.mxu0 %v288
    %1130 = vmatpush.msra.mxu0 %v284
    %1131 = vmatpush.msra.mxu0 %v280
    %1132 = vmatpush.msra.mxu0 %v276
    %1133 = vmatpush.msra.mxu0 %v272
    %1134 = vmatpush.msra.mxu0 %v268
    %1135 = vmatpush.msra.mxu0 %v264
    %1136 = vmatpush.msra.mxu0 %v260
    %1137 = vmatpush.msra.mxu0 %v256
    %1138 = vmatpush.msra.mxu0 %v252
    %1139 = vmatpush.msra.mxu0 %v248
    %1140 = vmatpush.msra.mxu0 %v244
    %1141 = vmatpush.msra.mxu0 %v240
    %1142 = vmatpush.msra.mxu0 %v236
    %1143 = vmatpush.msra.mxu0 %v232
    %1144 = vmatpush.msra.mxu0 %v228
    %1145 = vmatmul.f32.gmra.mxu0 %v1128
    %v1146 = vpop.f32.mrf.mxu0
    %v1147 = vadd.f32 0.0, %v1146
    %1148 = vdwg.mxu0
    %1149 = vmatpush.msra.mxu0 %v289
    %1150 = vmatpush.msra.mxu0 %v285
    %1151 = vmatpush.msra.mxu0 %v281
    %1152 = vmatpush.msra.mxu0 %v277
    %1153 = vmatpush.msra.mxu0 %v273
    %1154 = vmatpush.msra.mxu0 %v269
    %1155 = vmatpush.msra.mxu0 %v265
    %1156 = vmatpush.msra.mxu0 %v261
    %1157 = vmatpush.msra.mxu0 %v257
    %1158 = vmatpush.msra.mxu0 %v253
    %1159 = vmatpush.msra.mxu0 %v249
    %1160 = vmatpush.msra.mxu0 %v245
    %1161 = vmatpush.msra.mxu0 %v241
    %1162 = vmatpush.msra.mxu0 %v237
    %1163 = vmatpush.msra.mxu0 %v233
    %1164 = vmatpush.msra.mxu0 %v229
    %1165 = vmatmul.f32.gmra.mxu0 %v1128
    %v1166 = vpop.f32.mrf.mxu0
    %v1167 = vadd.f32 0.0, %v1166
    %1168 = vdwg.mxu0
    %1169 = vmatpush.msra.mxu0 %v290
    %1170 = vmatpush.msra.mxu0 %v286
    %1171 = vmatpush.msra.mxu0 %v282
    %1172 = vmatpush.msra.mxu0 %v278
    %1173 = vmatpush.msra.mxu0 %v274
    %1174 = vmatpush.msra.mxu0 %v270
    %1175 = vmatpush.msra.mxu0 %v266
    %1176 = vmatpush.msra.mxu0 %v262
    %1177 = vmatpush.msra.mxu0 %v258
    %1178 = vmatpush.msra.mxu0 %v254
    %1179 = vmatpush.msra.mxu0 %v250
    %1180 = vmatpush.msra.mxu0 %v246
    %1181 = vmatpush.msra.mxu0 %v242
    %1182 = vmatpush.msra.mxu0 %v238
    %1183 = vmatpush.msra.mxu0 %v234
    %1184 = vmatpush.msra.mxu0 %v230
    %1185 = vmatmul.f32.gmra.mxu0 %v1128
    %v1186 = vpop.f32.mrf.mxu0
    %v1187 = vadd.f32 0.0, %v1186
    %1188 = vdwg.mxu0
    %1189 = vmatpush.msra.mxu0 %v291
    %1190 = vmatpush.msra.mxu0 %v287
    %1191 = vmatpush.msra.mxu0 %v283
    %1192 = vmatpush.msra.mxu0 %v279
    %1193 = vmatpush.msra.mxu0 %v275
    %1194 = vmatpush.msra.mxu0 %v271
    %1195 = vmatpush.msra.mxu0 %v267
    %1196 = vmatpush.msra.mxu0 %v263
    %1197 = vmatpush.msra.mxu0 %v259
    %1198 = vmatpush.msra.mxu0 %v255
    %1199 = vmatpush.msra.mxu0 %v251
    %1200 = vmatpush.msra.mxu0 %v247
    %1201 = vmatpush.msra.mxu0 %v243
    %1202 = vmatpush.msra.mxu0 %v239
    %1203 = vmatpush.msra.mxu0 %v235
    %1204 = vmatpush.msra.mxu0 %v231
    %1205 = vmatmul.f32.gmra.mxu0 %v1128
    %v1206 = vpop.f32.mrf.mxu0
    %v1207 = vadd.f32 0.0, %v1206
    %1208 = vdwg.mxu0
    %v1209 = vmul.f32 %v1128, %v820
    %v1210 = vsel %vm823, %v1209, 0.0
    %1211 = vadd.xlane.f32.xlu0 %v1210
    %v1212 = vpop.xlane.xlu0 %1211
    %v1213 = vadd.f32 %v1212, %v828
    %v1214 = vadd.f32 %v408, %v996
    %v1215 = vadd.f32 %v409, %v1016
    %v1216 = vadd.f32 %v410, %v1036
    %v1217 = vadd.f32 %v411, %v1056
    %v1218 = vxor.u32 %v1214, 2147483648
    %v1219 = vmul.f32 %v1218, 1.442695
    %v1220 = vpow.pop %v1219
    %v1221 = vadd.f32 %v1220, 1.0
    %v1222 = vrcp.pop %v1221
    %v1223 = vmul.f32 %v1221, %v1222
    %v1224 = vsub.f32 1.0, %v1223
    %v1225 = vmul.f32 %v1222, %v1224
    %v1226 = vadd.f32 %v1222, %v1225
    %vm1227 = vweird.f32 %v1221
    %vm1228 = vweird.f32 %v1222
    %vm1229 = vmor %vm1227, %vm1228
    %v1230 = vsel %vm1229, %v1222, %v1226
    %v1231 = vand.u32 2147483647, %v1221
    %vm1232 = vcmp.eq.f32.partialorder %v1231, 8.507059e+37
    %v1233 = vand.u32 %v1221, 2147483648
    %v1234 = vor.u32 1.1754944e-38, %v1233
    %v1235 = vsel %vm1232, %v1234, %v1230
    %v1236 = vmul.f32 1.0, %v1235
    %v1237 = vxor.u32 %v1215, 2147483648
    %v1238 = vmul.f32 %v1237, 1.442695
    %v1239 = vpow.pop %v1238
    %v1240 = vadd.f32 %v1239, 1.0
    %v1241 = vrcp.pop %v1240
    %v1242 = vmul.f32 %v1240, %v1241
    %v1243 = vsub.f32 1.0, %v1242
    %v1244 = vmul.f32 %v1241, %v1243
    %v1245 = vadd.f32 %v1241, %v1244
    %vm1246 = vweird.f32 %v1240
    %vm1247 = vweird.f32 %v1241
    %vm1248 = vmor %vm1246, %vm1247
    %v1249 = vsel %vm1248, %v1241, %v1245
    %v1250 = vand.u32 2147483647, %v1240
    %vm1251 = vcmp.eq.f32.partialorder %v1250, 8.507059e+37
    %v1252 = vand.u32 %v1240, 2147483648
    %v1253 = vor.u32 1.1754944e-38, %v1252
    %v1254 = vsel %vm1251, %v1253, %v1249
    %v1255 = vmul.f32 1.0, %v1254
    %v1256 = vtanh.pop %v1216
    %v1257 = vxor.u32 %v1217, 2147483648
    %v1258 = vmul.f32 %v1257, 1.442695
    %v1259 = vpow.pop %v1258
    %v1260 = vadd.f32 %v1259, 1.0
    %v1261 = vrcp.pop %v1260
    %v1262 = vmul.f32 %v1260, %v1261
    %v1263 = vsub.f32 1.0, %v1262
    %v1264 = vmul.f32 %v1261, %v1263
    %v1265 = vadd.f32 %v1261, %v1264
    %vm1266 = vweird.f32 %v1260
    %vm1267 = vweird.f32 %v1261
    %vm1268 = vmor %vm1266, %vm1267
    %v1269 = vsel %vm1268, %v1261, %v1265
    %v1270 = vand.u32 2147483647, %v1260
    %vm1271 = vcmp.eq.f32.partialorder %v1270, 8.507059e+37
    %v1272 = vand.u32 %v1260, 2147483648
    %v1273 = vor.u32 1.1754944e-38, %v1272
    %v1274 = vsel %vm1271, %v1273, %v1269
    %v1275 = vmul.f32 1.0, %v1274
    %v1276 = vmul.f32 %v1255, %v895
    %v1277 = vmul.f32 %v1236, %v1256
    %v1278 = vadd.f32 %v1276, %v1277
    %v1279 = vtanh.pop %v1278
    %v1280 = vmul.f32 %v1275, %v1279
    %1281 = vmatpush.msra.mxu0 %v219
    %1282 = vmatpush.msra.mxu0 %v211
    %1283 = vmatpush.msra.mxu0 %v203
    %1284 = vmatpush.msra.mxu0 %v195
    %1285 = vmatpush.msra.mxu0 %v187
    %1286 = vmatpush.msra.mxu0 %v179
    %1287 = vmatpush.msra.mxu0 %v171
    %1288 = vmatpush.msra.mxu0 %v163
    %1289 = vmatpush.msra.mxu0 %v155
    %1290 = vmatpush.msra.mxu0 %v147
    %1291 = vmatpush.msra.mxu0 %v139
    %1292 = vmatpush.msra.mxu0 %v131
    %1293 = vmatpush.msra.mxu0 %v123
    %1294 = vmatpush.msra.mxu0 %v115
    %1295 = vmatpush.msra.mxu0 %v107
    %1296 = vmatpush.msra.mxu0 %v99
    %1297 = vmatmul.f32.gmra.mxu0 %v1280
    %v1298 = vpop.f32.mrf.mxu0
    %v1299 = vadd.f32 0.0, %v1298
    %1300 = vdwg.mxu0
    %1301 = vmatpush.msra.mxu0 %v220
    %1302 = vmatpush.msra.mxu0 %v212
    %1303 = vmatpush.msra.mxu0 %v204
    %1304 = vmatpush.msra.mxu0 %v196
    %1305 = vmatpush.msra.mxu0 %v188
    %1306 = vmatpush.msra.mxu0 %v180
    %1307 = vmatpush.msra.mxu0 %v172
    %1308 = vmatpush.msra.mxu0 %v164
    %1309 = vmatpush.msra.mxu0 %v156
    %1310 = vmatpush.msra.mxu0 %v148
    %1311 = vmatpush.msra.mxu0 %v140
    %1312 = vmatpush.msra.mxu0 %v132
    %1313 = vmatpush.msra.mxu0 %v124
    %1314 = vmatpush.msra.mxu0 %v116
    %1315 = vmatpush.msra.mxu0 %v108
    %1316 = vmatpush.msra.mxu0 %v100
    %1317 = vmatmul.f32.gmra.mxu0 %v1280
    %v1318 = vpop.f32.mrf.mxu0
    %v1319 = vadd.f32 0.0, %v1318
    %1320 = vdwg.mxu0
    %1321 = vmatpush.msra.mxu0 %v221
    %1322 = vmatpush.msra.mxu0 %v213
    %1323 = vmatpush.msra.mxu0 %v205
    %1324 = vmatpush.msra.mxu0 %v197
    %1325 = vmatpush.msra.mxu0 %v189
    %1326 = vmatpush.msra.mxu0 %v181
    %1327 = vmatpush.msra.mxu0 %v173
    %1328 = vmatpush.msra.mxu0 %v165
    %1329 = vmatpush.msra.mxu0 %v157
    %1330 = vmatpush.msra.mxu0 %v149
    %1331 = vmatpush.msra.mxu0 %v141
    %1332 = vmatpush.msra.mxu0 %v133
    %1333 = vmatpush.msra.mxu0 %v125
    %1334 = vmatpush.msra.mxu0 %v117
    %1335 = vmatpush.msra.mxu0 %v109
    %1336 = vmatpush.msra.mxu0 %v101
    %1337 = vmatmul.f32.gmra.mxu0 %v1280
    %v1338 = vpop.f32.mrf.mxu0
    %v1339 = vadd.f32 0.0, %v1338
    %1340 = vdwg.mxu0
    %1341 = vmatpush.msra.mxu0 %v222
    %1342 = vmatpush.msra.mxu0 %v214
    %1343 = vmatpush.msra.mxu0 %v206
    %1344 = vmatpush.msra.mxu0 %v198
    %1345 = vmatpush.msra.mxu0 %v190
    %1346 = vmatpush.msra.mxu0 %v182
    %1347 = vmatpush.msra.mxu0 %v174
    %1348 = vmatpush.msra.mxu0 %v166
    %1349 = vmatpush.msra.mxu0 %v158
    %1350 = vmatpush.msra.mxu0 %v150
    %1351 = vmatpush.msra.mxu0 %v142
    %1352 = vmatpush.msra.mxu0 %v134
    %1353 = vmatpush.msra.mxu0 %v126
    %1354 = vmatpush.msra.mxu0 %v118
    %1355 = vmatpush.msra.mxu0 %v110
    %1356 = vmatpush.msra.mxu0 %v102
    %1357 = vmatmul.f32.gmra.mxu0 %v1280
    %v1358 = vpop.f32.mrf.mxu0
    %v1359 = vadd.f32 0.0, %v1358
    %1360 = vdwg.mxu0
    %1361 = vmatpush.msra.mxu0 %v223
    %1362 = vmatpush.msra.mxu0 %v215
    %1363 = vmatpush.msra.mxu0 %v207
    %1364 = vmatpush.msra.mxu0 %v199
    %1365 = vmatpush.msra.mxu0 %v191
    %1366 = vmatpush.msra.mxu0 %v183
    %1367 = vmatpush.msra.mxu0 %v175
    %1368 = vmatpush.msra.mxu0 %v167
    %1369 = vmatpush.msra.mxu0 %v159
    %1370 = vmatpush.msra.mxu0 %v151
    %1371 = vmatpush.msra.mxu0 %v143
    %1372 = vmatpush.msra.mxu0 %v135
    %1373 = vmatpush.msra.mxu0 %v127
    %1374 = vmatpush.msra.mxu0 %v119
    %1375 = vmatpush.msra.mxu0 %v111
    %1376 = vmatpush.msra.mxu0 %v103
    %1377 = vmatmul.f32.gmra.mxu0 %v1280
    %v1378 = vpop.f32.mrf.mxu0
    %v1379 = vadd.f32 0.0, %v1378
    %1380 = vdwg.mxu0
    %1381 = vmatpush.msra.mxu0 %v224
    %1382 = vmatpush.msra.mxu0 %v216
    %1383 = vmatpush.msra.mxu0 %v208
    %1384 = vmatpush.msra.mxu0 %v200
    %1385 = vmatpush.msra.mxu0 %v192
    %1386 = vmatpush.msra.mxu0 %v184
    %1387 = vmatpush.msra.mxu0 %v176
    %1388 = vmatpush.msra.mxu0 %v168
    %1389 = vmatpush.msra.mxu0 %v160
    %1390 = vmatpush.msra.mxu0 %v152
    %1391 = vmatpush.msra.mxu0 %v144
    %1392 = vmatpush.msra.mxu0 %v136
    %1393 = vmatpush.msra.mxu0 %v128
    %1394 = vmatpush.msra.mxu0 %v120
    %1395 = vmatpush.msra.mxu0 %v112
    %1396 = vmatpush.msra.mxu0 %v104
    %1397 = vmatmul.f32.gmra.mxu0 %v1280
    %v1398 = vpop.f32.mrf.mxu0
    %v1399 = vadd.f32 0.0, %v1398
    %1400 = vdwg.mxu0
    %1401 = vmatpush.msra.mxu0 %v225
    %1402 = vmatpush.msra.mxu0 %v217
    %1403 = vmatpush.msra.mxu0 %v209
    %1404 = vmatpush.msra.mxu0 %v201
    %1405 = vmatpush.msra.mxu0 %v193
    %1406 = vmatpush.msra.mxu0 %v185
    %1407 = vmatpush.msra.mxu0 %v177
    %1408 = vmatpush.msra.mxu0 %v169
    %1409 = vmatpush.msra.mxu0 %v161
    %1410 = vmatpush.msra.mxu0 %v153
    %1411 = vmatpush.msra.mxu0 %v145
    %1412 = vmatpush.msra.mxu0 %v137
    %1413 = vmatpush.msra.mxu0 %v129
    %1414 = vmatpush.msra.mxu0 %v121
    %1415 = vmatpush.msra.mxu0 %v113
    %1416 = vmatpush.msra.mxu0 %v105
    %1417 = vmatmul.f32.gmra.mxu0 %v1280
    %v1418 = vpop.f32.mrf.mxu0
    %v1419 = vadd.f32 0.0, %v1418
    %1420 = vdwg.mxu0
    %1421 = vmatpush.msra.mxu0 %v226
    %1422 = vmatpush.msra.mxu0 %v218
    %1423 = vmatpush.msra.mxu0 %v210
    %1424 = vmatpush.msra.mxu0 %v202
    %1425 = vmatpush.msra.mxu0 %v194
    %1426 = vmatpush.msra.mxu0 %v186
    %1427 = vmatpush.msra.mxu0 %v178
    %1428 = vmatpush.msra.mxu0 %v170
    %1429 = vmatpush.msra.mxu0 %v162
    %1430 = vmatpush.msra.mxu0 %v154
    %1431 = vmatpush.msra.mxu0 %v146
    %1432 = vmatpush.msra.mxu0 %v138
    %1433 = vmatpush.msra.mxu0 %v130
    %1434 = vmatpush.msra.mxu0 %v122
    %1435 = vmatpush.msra.mxu0 %v114
    %1436 = vmatpush.msra.mxu0 %v106
    %1437 = vmatmul.f32.gmra.mxu0 %v1280
    %v1438 = vpop.f32.mrf.mxu0
    %v1439 = vadd.f32 0.0, %v1438
    %1440 = vdwg.mxu0
    %v1441 = vadd.f32 %v1299, %v1147
    %v1442 = vadd.f32 %v1319, %v1167
    %v1443 = vadd.f32 %v1339, %v1187
    %v1444 = vadd.f32 %v1359, %v1207
    %v1445 = vadd.f32 %v1441, %v433
    %v1446 = vadd.f32 %v1442, %v434
    %v1447 = vadd.f32 %v1443, %v435
    %v1448 = vadd.f32 %v1444, %v436
    %v1449 = vxor.u32 %v1445, 2147483648
    %v1450 = vmul.f32 %v1449, 1.442695
    %v1451 = vpow.pop %v1450
    %v1452 = vadd.f32 %v1451, 1.0
    %v1453 = vrcp.pop %v1452
    %v1454 = vmul.f32 %v1452, %v1453
    %v1455 = vsub.f32 1.0, %v1454
    %v1456 = vmul.f32 %v1453, %v1455
    %v1457 = vadd.f32 %v1453, %v1456
    %vm1458 = vweird.f32 %v1452
    %vm1459 = vweird.f32 %v1453
    %vm1460 = vmor %vm1458, %vm1459
    %v1461 = vsel %vm1460, %v1453, %v1457
    %v1462 = vand.u32 2147483647, %v1452
    %vm1463 = vcmp.eq.f32.partialorder %v1462, 8.507059e+37
    %v1464 = vand.u32 %v1452, 2147483648
    %v1465 = vor.u32 1.1754944e-38, %v1464
    %v1466 = vsel %vm1463, %v1465, %v1461
    %v1467 = vmul.f32 1.0, %v1466
    %v1468 = vxor.u32 %v1446, 2147483648
    %v1469 = vmul.f32 %v1468, 1.442695
    %v1470 = vpow.pop %v1469
    %v1471 = vadd.f32 %v1470, 1.0
    %v1472 = vrcp.pop %v1471
    %v1473 = vmul.f32 %v1471, %v1472
    %v1474 = vsub.f32 1.0, %v1473
    %v1475 = vmul.f32 %v1472, %v1474
    %v1476 = vadd.f32 %v1472, %v1475
    %vm1477 = vweird.f32 %v1471
    %vm1478 = vweird.f32 %v1472
    %vm1479 = vmor %vm1477, %vm1478
    %v1480 = vsel %vm1479, %v1472, %v1476
    %v1481 = vand.u32 2147483647, %v1471
    %vm1482 = vcmp.eq.f32.partialorder %v1481, 8.507059e+37
    %v1483 = vand.u32 %v1471, 2147483648
    %v1484 = vor.u32 1.1754944e-38, %v1483
    %v1485 = vsel %vm1482, %v1484, %v1480
    %v1486 = vmul.f32 1.0, %v1485
    %v1487 = vtanh.pop %v1447
    %v1488 = vxor.u32 %v1448, 2147483648
    %v1489 = vmul.f32 %v1488, 1.442695
    %v1490 = vpow.pop %v1489
    %v1491 = vadd.f32 %v1490, 1.0
    %v1492 = vrcp.pop %v1491
    %v1493 = vmul.f32 %v1491, %v1492
    %v1494 = vsub.f32 1.0, %v1493
    %v1495 = vmul.f32 %v1492, %v1494
    %v1496 = vadd.f32 %v1492, %v1495
    %vm1497 = vweird.f32 %v1491
    %vm1498 = vweird.f32 %v1492
    %vm1499 = vmor %vm1497, %vm1498
    %v1500 = vsel %vm1499, %v1492, %v1496
    %v1501 = vand.u32 2147483647, %v1491
    %vm1502 = vcmp.eq.f32.partialorder %v1501, 8.507059e+37
    %v1503 = vand.u32 %v1491, 2147483648
    %v1504 = vor.u32 1.1754944e-38, %v1503
    %v1505 = vsel %vm1502, %v1504, %v1500
    %v1506 = vmul.f32 1.0, %v1505
    %v1507 = vmul.f32 %v1486, %v1126
    %v1508 = vmul.f32 %v1467, %v1487
    %v1509 = vadd.f32 %v1507, %v1508
    %v1510 = vtanh.pop %v1509
    %v1511 = vmul.f32 %v1506, %v1510
    %1512 = vmatpush.msra.mxu0 %v288
    %1513 = vmatpush.msra.mxu0 %v284
    %1514 = vmatpush.msra.mxu0 %v280
    %1515 = vmatpush.msra.mxu0 %v276
    %1516 = vmatpush.msra.mxu0 %v272
    %1517 = vmatpush.msra.mxu0 %v268
    %1518 = vmatpush.msra.mxu0 %v264
    %1519 = vmatpush.msra.mxu0 %v260
    %1520 = vmatpush.msra.mxu0 %v256
    %1521 = vmatpush.msra.mxu0 %v252
    %1522 = vmatpush.msra.mxu0 %v248
    %1523 = vmatpush.msra.mxu0 %v244
    %1524 = vmatpush.msra.mxu0 %v240
    %1525 = vmatpush.msra.mxu0 %v236
    %1526 = vmatpush.msra.mxu0 %v232
    %1527 = vmatpush.msra.mxu0 %v228
    %1528 = vmatmul.f32.gmra.mxu0 %v1511
    %v1529 = vpop.f32.mrf.mxu0
    %v1530 = vadd.f32 0.0, %v1529
    %1531 = vdwg.mxu0
    %1532 = vmatpush.msra.mxu0 %v289
    %1533 = vmatpush.msra.mxu0 %v285
    %1534 = vmatpush.msra.mxu0 %v281
    %1535 = vmatpush.msra.mxu0 %v277
    %1536 = vmatpush.msra.mxu0 %v273
    %1537 = vmatpush.msra.mxu0 %v269
    %1538 = vmatpush.msra.mxu0 %v265
    %1539 = vmatpush.msra.mxu0 %v261
    %1540 = vmatpush.msra.mxu0 %v257
    %1541 = vmatpush.msra.mxu0 %v253
    %1542 = vmatpush.msra.mxu0 %v249
    %1543 = vmatpush.msra.mxu0 %v245
    %1544 = vmatpush.msra.mxu0 %v241
    %1545 = vmatpush.msra.mxu0 %v237
    %1546 = vmatpush.msra.mxu0 %v233
    %1547 = vmatpush.msra.mxu0 %v229
    %1548 = vmatmul.f32.gmra.mxu0 %v1511
    %v1549 = vpop.f32.mrf.mxu0
    %v1550 = vadd.f32 0.0, %v1549
    %1551 = vdwg.mxu0
    %1552 = vmatpush.msra.mxu0 %v290
    %1553 = vmatpush.msra.mxu0 %v286
    %1554 = vmatpush.msra.mxu0 %v282
    %1555 = vmatpush.msra.mxu0 %v278
    %1556 = vmatpush.msra.mxu0 %v274
    %1557 = vmatpush.msra.mxu0 %v270
    %1558 = vmatpush.msra.mxu0 %v266
    %1559 = vmatpush.msra.mxu0 %v262
    %1560 = vmatpush.msra.mxu0 %v258
    %1561 = vmatpush.msra.mxu0 %v254
    %1562 = vmatpush.msra.mxu0 %v250
    %1563 = vmatpush.msra.mxu0 %v246
    %1564 = vmatpush.msra.mxu0 %v242
    %1565 = vmatpush.msra.mxu0 %v238
    %1566 = vmatpush.msra.mxu0 %v234
    %1567 = vmatpush.msra.mxu0 %v230
    %1568 = vmatmul.f32.gmra.mxu0 %v1511
    %v1569 = vpop.f32.mrf.mxu0
    %v1570 = vadd.f32 0.0, %v1569
    %1571 = vdwg.mxu0
    %1572 = vmatpush.msra.mxu0 %v291
    %1573 = vmatpush.msra.mxu0 %v287
    %1574 = vmatpush.msra.mxu0 %v283
    %1575 = vmatpush.msra.mxu0 %v279
    %1576 = vmatpush.msra.mxu0 %v275
    %1577 = vmatpush.msra.mxu0 %v271
    %1578 = vmatpush.msra.mxu0 %v267
    %1579 = vmatpush.msra.mxu0 %v263
    %1580 = vmatpush.msra.mxu0 %v259
    %1581 = vmatpush.msra.mxu0 %v255
    %1582 = vmatpush.msra.mxu0 %v251
    %1583 = vmatpush.msra.mxu0 %v247
    %1584 = vmatpush.msra.mxu0 %v243
    %1585 = vmatpush.msra.mxu0 %v239
    %1586 = vmatpush.msra.mxu0 %v235
    %1587 = vmatpush.msra.mxu0 %v231
    %1588 = vmatmul.f32.gmra.mxu0 %v1511
    %v1589 = vpop.f32.mrf.mxu0
    %v1590 = vadd.f32 0.0, %v1589
    %1591 = vdwg.mxu0
    %v1592 = vmul.f32 %v1511, %v820
    %v1593 = vsel %vm823, %v1592, 0.0
    %1594 = vadd.xlane.f32.xlu0 %v1593
    %v1595 = vpop.xlane.xlu0 %1594
    %v1596 = vadd.f32 %v1595, %v828
    %v1597 = vadd.f32 %v412, %v1379
    %v1598 = vadd.f32 %v413, %v1399
    %v1599 = vadd.f32 %v414, %v1419
    %v1600 = vadd.f32 %v415, %v1439
    %v1601 = vxor.u32 %v1597, 2147483648
    %v1602 = vmul.f32 %v1601, 1.442695
    %v1603 = vpow.pop %v1602
    %v1604 = vadd.f32 %v1603, 1.0
    %v1605 = vrcp.pop %v1604
    %v1606 = vmul.f32 %v1604, %v1605
    %v1607 = vsub.f32 1.0, %v1606
    %v1608 = vmul.f32 %v1605, %v1607
    %v1609 = vadd.f32 %v1605, %v1608
    %vm1610 = vweird.f32 %v1604
    %vm1611 = vweird.f32 %v1605
    %vm1612 = vmor %vm1610, %vm1611
    %v1613 = vsel %vm1612, %v1605, %v1609
    %v1614 = vand.u32 2147483647, %v1604
    %vm1615 = vcmp.eq.f32.partialorder %v1614, 8.507059e+37
    %v1616 = vand.u32 %v1604, 2147483648
    %v1617 = vor.u32 1.1754944e-38, %v1616
    %v1618 = vsel %vm1615, %v1617, %v1613
    %v1619 = vmul.f32 1.0, %v1618
    %v1620 = vxor.u32 %v1598, 2147483648
    %v1621 = vmul.f32 %v1620, 1.442695
    %v1622 = vpow.pop %v1621
    %v1623 = vadd.f32 %v1622, 1.0
    %v1624 = vrcp.pop %v1623
    %v1625 = vmul.f32 %v1623, %v1624
    %v1626 = vsub.f32 1.0, %v1625
    %v1627 = vmul.f32 %v1624, %v1626
    %v1628 = vadd.f32 %v1624, %v1627
    %vm1629 = vweird.f32 %v1623
    %vm1630 = vweird.f32 %v1624
    %vm1631 = vmor %vm1629, %vm1630
    %v1632 = vsel %vm1631, %v1624, %v1628
    %v1633 = vand.u32 2147483647, %v1623
    %vm1634 = vcmp.eq.f32.partialorder %v1633, 8.507059e+37
    %v1635 = vand.u32 %v1623, 2147483648
    %v1636 = vor.u32 1.1754944e-38, %v1635
    %v1637 = vsel %vm1634, %v1636, %v1632
    %v1638 = vmul.f32 1.0, %v1637
    %v1639 = vtanh.pop %v1599
    %v1640 = vxor.u32 %v1600, 2147483648
    %v1641 = vmul.f32 %v1640, 1.442695
    %v1642 = vpow.pop %v1641
    %v1643 = vadd.f32 %v1642, 1.0
    %v1644 = vrcp.pop %v1643
    %v1645 = vmul.f32 %v1643, %v1644
    %v1646 = vsub.f32 1.0, %v1645
    %v1647 = vmul.f32 %v1644, %v1646
    %v1648 = vadd.f32 %v1644, %v1647
    %vm1649 = vweird.f32 %v1643
    %vm1650 = vweird.f32 %v1644
    %vm1651 = vmor %vm1649, %vm1650
    %v1652 = vsel %vm1651, %v1644, %v1648
    %v1653 = vand.u32 2147483647, %v1643
    %vm1654 = vcmp.eq.f32.partialorder %v1653, 8.507059e+37
    %v1655 = vand.u32 %v1643, 2147483648
    %v1656 = vor.u32 1.1754944e-38, %v1655
    %v1657 = vsel %vm1654, %v1656, %v1652
    %v1658 = vmul.f32 1.0, %v1657
    %v1659 = vmul.f32 %v1638, %v1278
    %v1660 = vmul.f32 %v1619, %v1639
    %v1661 = vadd.f32 %v1659, %v1660
    %v1662 = vtanh.pop %v1661
    %v1663 = vmul.f32 %v1658, %v1662
    %1664 = vmatpush.msra.mxu0 %v219
    %1665 = vmatpush.msra.mxu0 %v211
    %1666 = vmatpush.msra.mxu0 %v203
    %1667 = vmatpush.msra.mxu0 %v195
    %1668 = vmatpush.msra.mxu0 %v187
    %1669 = vmatpush.msra.mxu0 %v179
    %1670 = vmatpush.msra.mxu0 %v171
    %1671 = vmatpush.msra.mxu0 %v163
    %1672 = vmatpush.msra.mxu0 %v155
    %1673 = vmatpush.msra.mxu0 %v147
    %1674 = vmatpush.msra.mxu0 %v139
    %1675 = vmatpush.msra.mxu0 %v131
    %1676 = vmatpush.msra.mxu0 %v123
    %1677 = vmatpush.msra.mxu0 %v115
    %1678 = vmatpush.msra.mxu0 %v107
    %1679 = vmatpush.msra.mxu0 %v99
    %1680 = vmatmul.f32.gmra.mxu0 %v1663
    %v1681 = vpop.f32.mrf.mxu0
    %v1682 = vadd.f32 0.0, %v1681
    %1683 = vdwg.mxu0
    %1684 = vmatpush.msra.mxu0 %v220
    %1685 = vmatpush.msra.mxu0 %v212
    %1686 = vmatpush.msra.mxu0 %v204
    %1687 = vmatpush.msra.mxu0 %v196
    %1688 = vmatpush.msra.mxu0 %v188
    %1689 = vmatpush.msra.mxu0 %v180
    %1690 = vmatpush.msra.mxu0 %v172
    %1691 = vmatpush.msra.mxu0 %v164
    %1692 = vmatpush.msra.mxu0 %v156
    %1693 = vmatpush.msra.mxu0 %v148
    %1694 = vmatpush.msra.mxu0 %v140
    %1695 = vmatpush.msra.mxu0 %v132
    %1696 = vmatpush.msra.mxu0 %v124
    %1697 = vmatpush.msra.mxu0 %v116
    %1698 = vmatpush.msra.mxu0 %v108
    %1699 = vmatpush.msra.mxu0 %v100
    %1700 = vmatmul.f32.gmra.mxu0 %v1663
    %v1701 = vpop.f32.mrf.mxu0
    %v1702 = vadd.f32 0.0, %v1701
    %1703 = vdwg.mxu0
    %1704 = vmatpush.msra.mxu0 %v221
    %1705 = vmatpush.msra.mxu0 %v213
    %1706 = vmatpush.msra.mxu0 %v205
    %1707 = vmatpush.msra.mxu0 %v197
    %1708 = vmatpush.msra.mxu0 %v189
    %1709 = vmatpush.msra.mxu0 %v181
    %1710 = vmatpush.msra.mxu0 %v173
    %1711 = vmatpush.msra.mxu0 %v165
    %1712 = vmatpush.msra.mxu0 %v157
    %1713 = vmatpush.msra.mxu0 %v149
    %1714 = vmatpush.msra.mxu0 %v141
    %1715 = vmatpush.msra.mxu0 %v133
    %1716 = vmatpush.msra.mxu0 %v125
    %1717 = vmatpush.msra.mxu0 %v117
    %1718 = vmatpush.msra.mxu0 %v109
    %1719 = vmatpush.msra.mxu0 %v101
    %1720 = vmatmul.f32.gmra.mxu0 %v1663
    %v1721 = vpop.f32.mrf.mxu0
    %v1722 = vadd.f32 0.0, %v1721
    %1723 = vdwg.mxu0
    %1724 = vmatpush.msra.mxu0 %v222
    %1725 = vmatpush.msra.mxu0 %v214
    %1726 = vmatpush.msra.mxu0 %v206
    %1727 = vmatpush.msra.mxu0 %v198
    %1728 = vmatpush.msra.mxu0 %v190
    %1729 = vmatpush.msra.mxu0 %v182
    %1730 = vmatpush.msra.mxu0 %v174
    %1731 = vmatpush.msra.mxu0 %v166
    %1732 = vmatpush.msra.mxu0 %v158
    %1733 = vmatpush.msra.mxu0 %v150
    %1734 = vmatpush.msra.mxu0 %v142
    %1735 = vmatpush.msra.mxu0 %v134
    %1736 = vmatpush.msra.mxu0 %v126
    %1737 = vmatpush.msra.mxu0 %v118
    %1738 = vmatpush.msra.mxu0 %v110
    %1739 = vmatpush.msra.mxu0 %v102
    %1740 = vmatmul.f32.gmra.mxu0 %v1663
    %v1741 = vpop.f32.mrf.mxu0
    %v1742 = vadd.f32 0.0, %v1741
    %1743 = vdwg.mxu0
    %1744 = vmatpush.msra.mxu0 %v223
    %1745 = vmatpush.msra.mxu0 %v215
    %1746 = vmatpush.msra.mxu0 %v207
    %1747 = vmatpush.msra.mxu0 %v199
    %1748 = vmatpush.msra.mxu0 %v191
    %1749 = vmatpush.msra.mxu0 %v183
    %1750 = vmatpush.msra.mxu0 %v175
    %1751 = vmatpush.msra.mxu0 %v167
    %1752 = vmatpush.msra.mxu0 %v159
    %1753 = vmatpush.msra.mxu0 %v151
    %1754 = vmatpush.msra.mxu0 %v143
    %1755 = vmatpush.msra.mxu0 %v135
    %1756 = vmatpush.msra.mxu0 %v127
    %1757 = vmatpush.msra.mxu0 %v119
    %1758 = vmatpush.msra.mxu0 %v111
    %1759 = vmatpush.msra.mxu0 %v103
    %1760 = vmatmul.f32.gmra.mxu0 %v1663
    %v1761 = vpop.f32.mrf.mxu0
    %v1762 = vadd.f32 0.0, %v1761
    %1763 = vdwg.mxu0
    %1764 = vmatpush.msra.mxu0 %v224
    %1765 = vmatpush.msra.mxu0 %v216
    %1766 = vmatpush.msra.mxu0 %v208
    %1767 = vmatpush.msra.mxu0 %v200
    %1768 = vmatpush.msra.mxu0 %v192
    %1769 = vmatpush.msra.mxu0 %v184
    %1770 = vmatpush.msra.mxu0 %v176
    %1771 = vmatpush.msra.mxu0 %v168
    %1772 = vmatpush.msra.mxu0 %v160
    %1773 = vmatpush.msra.mxu0 %v152
    %1774 = vmatpush.msra.mxu0 %v144
    %1775 = vmatpush.msra.mxu0 %v136
    %1776 = vmatpush.msra.mxu0 %v128
    %1777 = vmatpush.msra.mxu0 %v120
    %1778 = vmatpush.msra.mxu0 %v112
    %1779 = vmatpush.msra.mxu0 %v104
    %1780 = vmatmul.f32.gmra.mxu0 %v1663
    %v1781 = vpop.f32.mrf.mxu0
    %v1782 = vadd.f32 0.0, %v1781
    %1783 = vdwg.mxu0
    %1784 = vmatpush.msra.mxu0 %v225
    %1785 = vmatpush.msra.mxu0 %v217
    %1786 = vmatpush.msra.mxu0 %v209
    %1787 = vmatpush.msra.mxu0 %v201
    %1788 = vmatpush.msra.mxu0 %v193
    %1789 = vmatpush.msra.mxu0 %v185
    %1790 = vmatpush.msra.mxu0 %v177
    %1791 = vmatpush.msra.mxu0 %v169
    %1792 = vmatpush.msra.mxu0 %v161
    %1793 = vmatpush.msra.mxu0 %v153
    %1794 = vmatpush.msra.mxu0 %v145
    %1795 = vmatpush.msra.mxu0 %v137
    %1796 = vmatpush.msra.mxu0 %v129
    %1797 = vmatpush.msra.mxu0 %v121
    %1798 = vmatpush.msra.mxu0 %v113
    %1799 = vmatpush.msra.mxu0 %v105
    %1800 = vmatmul.f32.gmra.mxu0 %v1663
    %v1801 = vpop.f32.mrf.mxu0
    %v1802 = vadd.f32 0.0, %v1801
    %1803 = vdwg.mxu0
    %1804 = vmatpush.msra.mxu0 %v226
    %1805 = vmatpush.msra.mxu0 %v218
    %1806 = vmatpush.msra.mxu0 %v210
    %1807 = vmatpush.msra.mxu0 %v202
    %1808 = vmatpush.msra.mxu0 %v194
    %1809 = vmatpush.msra.mxu0 %v186
    %1810 = vmatpush.msra.mxu0 %v178
    %1811 = vmatpush.msra.mxu0 %v170
    %1812 = vmatpush.msra.mxu0 %v162
    %1813 = vmatpush.msra.mxu0 %v154
    %1814 = vmatpush.msra.mxu0 %v146
    %1815 = vmatpush.msra.mxu0 %v138
    %1816 = vmatpush.msra.mxu0 %v130
    %1817 = vmatpush.msra.mxu0 %v122
    %1818 = vmatpush.msra.mxu0 %v114
    %1819 = vmatpush.msra.mxu0 %v106
    %1820 = vmatmul.f32.gmra.mxu0 %v1663
    %v1821 = vpop.f32.mrf.mxu0
    %v1822 = vadd.f32 0.0, %v1821
    %1823 = vdwg.mxu0
    %v1824 = vadd.f32 %v1682, %v1530
    %v1825 = vadd.f32 %v1702, %v1550
    %v1826 = vadd.f32 %v1722, %v1570
    %v1827 = vadd.f32 %v1742, %v1590
    %v1828 = vadd.f32 %v1824, %v433
    %v1829 = vadd.f32 %v1825, %v434
    %v1830 = vadd.f32 %v1826, %v435
    %v1831 = vadd.f32 %v1827, %v436
    %v1832 = vxor.u32 %v1828, 2147483648
    %v1833 = vmul.f32 %v1832, 1.442695
    %v1834 = vpow.pop %v1833
    %v1835 = vadd.f32 %v1834, 1.0
    %v1836 = vrcp.pop %v1835
    %v1837 = vmul.f32 %v1835, %v1836
    %v1838 = vsub.f32 1.0, %v1837
    %v1839 = vmul.f32 %v1836, %v1838
    %v1840 = vadd.f32 %v1836, %v1839
    %vm1841 = vweird.f32 %v1835
    %vm1842 = vweird.f32 %v1836
    %vm1843 = vmor %vm1841, %vm1842
    %v1844 = vsel %vm1843, %v1836, %v1840
    %v1845 = vand.u32 2147483647, %v1835
    %vm1846 = vcmp.eq.f32.partialorder %v1845, 8.507059e+37
    %v1847 = vand.u32 %v1835, 2147483648
    %v1848 = vor.u32 1.1754944e-38, %v1847
    %v1849 = vsel %vm1846, %v1848, %v1844
    %v1850 = vmul.f32 1.0, %v1849
    %v1851 = vxor.u32 %v1829, 2147483648
    %v1852 = vmul.f32 %v1851, 1.442695
    %v1853 = vpow.pop %v1852
    %v1854 = vadd.f32 %v1853, 1.0
    %v1855 = vrcp.pop %v1854
    %v1856 = vmul.f32 %v1854, %v1855
    %v1857 = vsub.f32 1.0, %v1856
    %v1858 = vmul.f32 %v1855, %v1857
    %v1859 = vadd.f32 %v1855, %v1858
    %vm1860 = vweird.f32 %v1854
    %vm1861 = vweird.f32 %v1855
    %vm1862 = vmor %vm1860, %vm1861
    %v1863 = vsel %vm1862, %v1855, %v1859
    %v1864 = vand.u32 2147483647, %v1854
    %vm1865 = vcmp.eq.f32.partialorder %v1864, 8.507059e+37
    %v1866 = vand.u32 %v1854, 2147483648
    %v1867 = vor.u32 1.1754944e-38, %v1866
    %v1868 = vsel %vm1865, %v1867, %v1863
    %v1869 = vmul.f32 1.0, %v1868
    %v1870 = vtanh.pop %v1830
    %v1871 = vxor.u32 %v1831, 2147483648
    %v1872 = vmul.f32 %v1871, 1.442695
    %v1873 = vpow.pop %v1872
    %v1874 = vadd.f32 %v1873, 1.0
    %v1875 = vrcp.pop %v1874
    %v1876 = vmul.f32 %v1874, %v1875
    %v1877 = vsub.f32 1.0, %v1876
    %v1878 = vmul.f32 %v1875, %v1877
    %v1879 = vadd.f32 %v1875, %v1878
    %vm1880 = vweird.f32 %v1874
    %vm1881 = vweird.f32 %v1875
    %vm1882 = vmor %vm1880, %vm1881
    %v1883 = vsel %vm1882, %v1875, %v1879
    %v1884 = vand.u32 2147483647, %v1874
    %vm1885 = vcmp.eq.f32.partialorder %v1884, 8.507059e+37
    %v1886 = vand.u32 %v1874, 2147483648
    %v1887 = vor.u32 1.1754944e-38, %v1886
    %v1888 = vsel %vm1885, %v1887, %v1883
    %v1889 = vmul.f32 1.0, %v1888
    %v1890 = vmul.f32 %v1869, %v1509
    %v1891 = vmul.f32 %v1850, %v1870
    %v1892 = vadd.f32 %v1890, %v1891
    %v1893 = vtanh.pop %v1892
    %v1894 = vmul.f32 %v1889, %v1893
    %1895 = vmatpush.msra.mxu0 %v288
    %1896 = vmatpush.msra.mxu0 %v284
    %1897 = vmatpush.msra.mxu0 %v280
    %1898 = vmatpush.msra.mxu0 %v276
    %1899 = vmatpush.msra.mxu0 %v272
    %1900 = vmatpush.msra.mxu0 %v268
    %1901 = vmatpush.msra.mxu0 %v264
    %1902 = vmatpush.msra.mxu0 %v260
    %1903 = vmatpush.msra.mxu0 %v256
    %1904 = vmatpush.msra.mxu0 %v252
    %1905 = vmatpush.msra.mxu0 %v248
    %1906 = vmatpush.msra.mxu0 %v244
    %1907 = vmatpush.msra.mxu0 %v240
    %1908 = vmatpush.msra.mxu0 %v236
    %1909 = vmatpush.msra.mxu0 %v232
    %1910 = vmatpush.msra.mxu0 %v228
    %1911 = vmatmul.f32.gmra.mxu0 %v1894
    %v1912 = vpop.f32.mrf.mxu0
    %v1913 = vadd.f32 0.0, %v1912
    %1914 = vdwg.mxu0
    %1915 = vmatpush.msra.mxu0 %v289
    %1916 = vmatpush.msra.mxu0 %v285
    %1917 = vmatpush.msra.mxu0 %v281
    %1918 = vmatpush.msra.mxu0 %v277
    %1919 = vmatpush.msra.mxu0 %v273
    %1920 = vmatpush.msra.mxu0 %v269
    %1921 = vmatpush.msra.mxu0 %v265
    %1922 = vmatpush.msra.mxu0 %v261
    %1923 = vmatpush.msra.mxu0 %v257
    %1924 = vmatpush.msra.mxu0 %v253
    %1925 = vmatpush.msra.mxu0 %v249
    %1926 = vmatpush.msra.mxu0 %v245
    %1927 = vmatpush.msra.mxu0 %v241
    %1928 = vmatpush.msra.mxu0 %v237
    %1929 = vmatpush.msra.mxu0 %v233
    %1930 = vmatpush.msra.mxu0 %v229
    %1931 = vmatmul.f32.gmra.mxu0 %v1894
    %v1932 = vpop.f32.mrf.mxu0
    %v1933 = vadd.f32 0.0, %v1932
    %1934 = vdwg.mxu0
    %1935 = vmatpush.msra.mxu0 %v290
    %1936 = vmatpush.msra.mxu0 %v286
    %1937 = vmatpush.msra.mxu0 %v282
    %1938 = vmatpush.msra.mxu0 %v278
    %1939 = vmatpush.msra.mxu0 %v274
    %1940 = vmatpush.msra.mxu0 %v270
    %1941 = vmatpush.msra.mxu0 %v266
    %1942 = vmatpush.msra.mxu0 %v262
    %1943 = vmatpush.msra.mxu0 %v258
    %1944 = vmatpush.msra.mxu0 %v254
    %1945 = vmatpush.msra.mxu0 %v250
    %1946 = vmatpush.msra.mxu0 %v246
    %1947 = vmatpush.msra.mxu0 %v242
    %1948 = vmatpush.msra.mxu0 %v238
    %1949 = vmatpush.msra.mxu0 %v234
    %1950 = vmatpush.msra.mxu0 %v230
    %1951 = vmatmul.f32.gmra.mxu0 %v1894
    %v1952 = vpop.f32.mrf.mxu0
    %v1953 = vadd.f32 0.0, %v1952
    %1954 = vdwg.mxu0
    %1955 = vmatpush.msra.mxu0 %v291
    %1956 = vmatpush.msra.mxu0 %v287
    %1957 = vmatpush.msra.mxu0 %v283
    %1958 = vmatpush.msra.mxu0 %v279
    %1959 = vmatpush.msra.mxu0 %v275
    %1960 = vmatpush.msra.mxu0 %v271
    %1961 = vmatpush.msra.mxu0 %v267
    %1962 = vmatpush.msra.mxu0 %v263
    %1963 = vmatpush.msra.mxu0 %v259
    %1964 = vmatpush.msra.mxu0 %v255
    %1965 = vmatpush.msra.mxu0 %v251
    %1966 = vmatpush.msra.mxu0 %v247
    %1967 = vmatpush.msra.mxu0 %v243
    %1968 = vmatpush.msra.mxu0 %v239
    %1969 = vmatpush.msra.mxu0 %v235
    %1970 = vmatpush.msra.mxu0 %v231
    %1971 = vmatmul.f32.gmra.mxu0 %v1894
    %v1972 = vpop.f32.mrf.mxu0
    %v1973 = vadd.f32 0.0, %v1972
    %1974 = vdwg.mxu0
    %v1975 = vmul.f32 %v1894, %v820
    %v1976 = vsel %vm823, %v1975, 0.0
    %1977 = vadd.xlane.f32.xlu0 %v1976
    %v1978 = vpop.xlane.xlu0 %1977
    %v1979 = vadd.f32 %v1978, %v828
    %v1980 = vadd.f32 %v416, %v1762
    %v1981 = vadd.f32 %v417, %v1782
    %v1982 = vadd.f32 %v418, %v1802
    %v1983 = vadd.f32 %v419, %v1822
    %v1984 = vxor.u32 %v1980, 2147483648
    %v1985 = vmul.f32 %v1984, 1.442695
    %v1986 = vpow.pop %v1985
    %v1987 = vadd.f32 %v1986, 1.0
    %v1988 = vrcp.pop %v1987
    %v1989 = vmul.f32 %v1987, %v1988
    %v1990 = vsub.f32 1.0, %v1989
    %v1991 = vmul.f32 %v1988, %v1990
    %v1992 = vadd.f32 %v1988, %v1991
    %vm1993 = vweird.f32 %v1987
    %vm1994 = vweird.f32 %v1988
    %vm1995 = vmor %vm1993, %vm1994
    %v1996 = vsel %vm1995, %v1988, %v1992
    %v1997 = vand.u32 2147483647, %v1987
    %vm1998 = vcmp.eq.f32.partialorder %v1997, 8.507059e+37
    %v1999 = vand.u32 %v1987, 2147483648
    %v2000 = vor.u32 1.1754944e-38, %v1999
    %v2001 = vsel %vm1998, %v2000, %v1996
    %v2002 = vmul.f32 1.0, %v2001
    %v2003 = vxor.u32 %v1981, 2147483648
    %v2004 = vmul.f32 %v2003, 1.442695
    %v2005 = vpow.pop %v2004
    %v2006 = vadd.f32 %v2005, 1.0
    %v2007 = vrcp.pop %v2006
    %v2008 = vmul.f32 %v2006, %v2007
    %v2009 = vsub.f32 1.0, %v2008
    %v2010 = vmul.f32 %v2007, %v2009
    %v2011 = vadd.f32 %v2007, %v2010
    %vm2012 = vweird.f32 %v2006
    %vm2013 = vweird.f32 %v2007
    %vm2014 = vmor %vm2012, %vm2013
    %v2015 = vsel %vm2014, %v2007, %v2011
    %v2016 = vand.u32 2147483647, %v2006
    %vm2017 = vcmp.eq.f32.partialorder %v2016, 8.507059e+37
    %v2018 = vand.u32 %v2006, 2147483648
    %v2019 = vor.u32 1.1754944e-38, %v2018
    %v2020 = vsel %vm2017, %v2019, %v2015
    %v2021 = vmul.f32 1.0, %v2020
    %v2022 = vtanh.pop %v1982
    %v2023 = vxor.u32 %v1983, 2147483648
    %v2024 = vmul.f32 %v2023, 1.442695
    %v2025 = vpow.pop %v2024
    %v2026 = vadd.f32 %v2025, 1.0
    %v2027 = vrcp.pop %v2026
    %v2028 = vmul.f32 %v2026, %v2027
    %v2029 = vsub.f32 1.0, %v2028
    %v2030 = vmul.f32 %v2027, %v2029
    %v2031 = vadd.f32 %v2027, %v2030
    %vm2032 = vweird.f32 %v2026
    %vm2033 = vweird.f32 %v2027
    %vm2034 = vmor %vm2032, %vm2033
    %v2035 = vsel %vm2034, %v2027, %v2031
    %v2036 = vand.u32 2147483647, %v2026
    %vm2037 = vcmp.eq.f32.partialorder %v2036, 8.507059e+37
    %v2038 = vand.u32 %v2026, 2147483648
    %v2039 = vor.u32 1.1754944e-38, %v2038
    %v2040 = vsel %vm2037, %v2039, %v2035
    %v2041 = vmul.f32 1.0, %v2040
    %v2042 = vmul.f32 %v2021, %v1661
    %v2043 = vmul.f32 %v2002, %v2022
    %v2044 = vadd.f32 %v2042, %v2043
    %v2045 = vtanh.pop %v2044
    %v2046 = vmul.f32 %v2041, %v2045
    %2047 = vmatpush.msra.mxu0 %v219
    %2048 = vmatpush.msra.mxu0 %v211
    %2049 = vmatpush.msra.mxu0 %v203
    %2050 = vmatpush.msra.mxu0 %v195
    %2051 = vmatpush.msra.mxu0 %v187
    %2052 = vmatpush.msra.mxu0 %v179
    %2053 = vmatpush.msra.mxu0 %v171
    %2054 = vmatpush.msra.mxu0 %v163
    %2055 = vmatpush.msra.mxu0 %v155
    %2056 = vmatpush.msra.mxu0 %v147
    %2057 = vmatpush.msra.mxu0 %v139
    %2058 = vmatpush.msra.mxu0 %v131
    %2059 = vmatpush.msra.mxu0 %v123
    %2060 = vmatpush.msra.mxu0 %v115
    %2061 = vmatpush.msra.mxu0 %v107
    %2062 = vmatpush.msra.mxu0 %v99
    %2063 = vmatmul.f32.gmra.mxu0 %v2046
    %v2064 = vpop.f32.mrf.mxu0
    %v2065 = vadd.f32 0.0, %v2064
    %2066 = vdwg.mxu0
    %2067 = vmatpush.msra.mxu0 %v220
    %2068 = vmatpush.msra.mxu0 %v212
    %2069 = vmatpush.msra.mxu0 %v204
    %2070 = vmatpush.msra.mxu0 %v196
    %2071 = vmatpush.msra.mxu0 %v188
    %2072 = vmatpush.msra.mxu0 %v180
    %2073 = vmatpush.msra.mxu0 %v172
    %2074 = vmatpush.msra.mxu0 %v164
    %2075 = vmatpush.msra.mxu0 %v156
    %2076 = vmatpush.msra.mxu0 %v148
    %2077 = vmatpush.msra.mxu0 %v140
    %2078 = vmatpush.msra.mxu0 %v132
    %2079 = vmatpush.msra.mxu0 %v124
    %2080 = vmatpush.msra.mxu0 %v116
    %2081 = vmatpush.msra.mxu0 %v108
    %2082 = vmatpush.msra.mxu0 %v100
    %2083 = vmatmul.f32.gmra.mxu0 %v2046
    %v2084 = vpop.f32.mrf.mxu0
    %v2085 = vadd.f32 0.0, %v2084
    %2086 = vdwg.mxu0
    %2087 = vmatpush.msra.mxu0 %v221
    %2088 = vmatpush.msra.mxu0 %v213
    %2089 = vmatpush.msra.mxu0 %v205
    %2090 = vmatpush.msra.mxu0 %v197
    %2091 = vmatpush.msra.mxu0 %v189
    %2092 = vmatpush.msra.mxu0 %v181
    %2093 = vmatpush.msra.mxu0 %v173
    %2094 = vmatpush.msra.mxu0 %v165
    %2095 = vmatpush.msra.mxu0 %v157
    %2096 = vmatpush.msra.mxu0 %v149
    %2097 = vmatpush.msra.mxu0 %v141
    %2098 = vmatpush.msra.mxu0 %v133
    %2099 = vmatpush.msra.mxu0 %v125
    %2100 = vmatpush.msra.mxu0 %v117
    %2101 = vmatpush.msra.mxu0 %v109
    %2102 = vmatpush.msra.mxu0 %v101
    %2103 = vmatmul.f32.gmra.mxu0 %v2046
    %v2104 = vpop.f32.mrf.mxu0
    %v2105 = vadd.f32 0.0, %v2104
    %2106 = vdwg.mxu0
    %2107 = vmatpush.msra.mxu0 %v222
    %2108 = vmatpush.msra.mxu0 %v214
    %2109 = vmatpush.msra.mxu0 %v206
    %2110 = vmatpush.msra.mxu0 %v198
    %2111 = vmatpush.msra.mxu0 %v190
    %2112 = vmatpush.msra.mxu0 %v182
    %2113 = vmatpush.msra.mxu0 %v174
    %2114 = vmatpush.msra.mxu0 %v166
    %2115 = vmatpush.msra.mxu0 %v158
    %2116 = vmatpush.msra.mxu0 %v150
    %2117 = vmatpush.msra.mxu0 %v142
    %2118 = vmatpush.msra.mxu0 %v134
    %2119 = vmatpush.msra.mxu0 %v126
    %2120 = vmatpush.msra.mxu0 %v118
    %2121 = vmatpush.msra.mxu0 %v110
    %2122 = vmatpush.msra.mxu0 %v102
    %2123 = vmatmul.f32.gmra.mxu0 %v2046
    %v2124 = vpop.f32.mrf.mxu0
    %v2125 = vadd.f32 0.0, %v2124
    %2126 = vdwg.mxu0
    %2127 = vmatpush.msra.mxu0 %v223
    %2128 = vmatpush.msra.mxu0 %v215
    %2129 = vmatpush.msra.mxu0 %v207
    %2130 = vmatpush.msra.mxu0 %v199
    %2131 = vmatpush.msra.mxu0 %v191
    %2132 = vmatpush.msra.mxu0 %v183
    %2133 = vmatpush.msra.mxu0 %v175
    %2134 = vmatpush.msra.mxu0 %v167
    %2135 = vmatpush.msra.mxu0 %v159
    %2136 = vmatpush.msra.mxu0 %v151
    %2137 = vmatpush.msra.mxu0 %v143
    %2138 = vmatpush.msra.mxu0 %v135
    %2139 = vmatpush.msra.mxu0 %v127
    %2140 = vmatpush.msra.mxu0 %v119
    %2141 = vmatpush.msra.mxu0 %v111
    %2142 = vmatpush.msra.mxu0 %v103
    %2143 = vmatmul.f32.gmra.mxu0 %v2046
    %v2144 = vpop.f32.mrf.mxu0
    %v2145 = vadd.f32 0.0, %v2144
    %2146 = vdwg.mxu0
    %2147 = vmatpush.msra.mxu0 %v224
    %2148 = vmatpush.msra.mxu0 %v216
    %2149 = vmatpush.msra.mxu0 %v208
    %2150 = vmatpush.msra.mxu0 %v200
    %2151 = vmatpush.msra.mxu0 %v192
    %2152 = vmatpush.msra.mxu0 %v184
    %2153 = vmatpush.msra.mxu0 %v176
    %2154 = vmatpush.msra.mxu0 %v168
    %2155 = vmatpush.msra.mxu0 %v160
    %2156 = vmatpush.msra.mxu0 %v152
    %2157 = vmatpush.msra.mxu0 %v144
    %2158 = vmatpush.msra.mxu0 %v136
    %2159 = vmatpush.msra.mxu0 %v128
    %2160 = vmatpush.msra.mxu0 %v120
    %2161 = vmatpush.msra.mxu0 %v112
    %2162 = vmatpush.msra.mxu0 %v104
    %2163 = vmatmul.f32.gmra.mxu0 %v2046
    %v2164 = vpop.f32.mrf.mxu0
    %v2165 = vadd.f32 0.0, %v2164
    %2166 = vdwg.mxu0
    %2167 = vmatpush.msra.mxu0 %v225
    %2168 = vmatpush.msra.mxu0 %v217
    %2169 = vmatpush.msra.mxu0 %v209
    %2170 = vmatpush.msra.mxu0 %v201
    %2171 = vmatpush.msra.mxu0 %v193
    %2172 = vmatpush.msra.mxu0 %v185
    %2173 = vmatpush.msra.mxu0 %v177
    %2174 = vmatpush.msra.mxu0 %v169
    %2175 = vmatpush.msra.mxu0 %v161
    %2176 = vmatpush.msra.mxu0 %v153
    %2177 = vmatpush.msra.mxu0 %v145
    %2178 = vmatpush.msra.mxu0 %v137
    %2179 = vmatpush.msra.mxu0 %v129
    %2180 = vmatpush.msra.mxu0 %v121
    %2181 = vmatpush.msra.mxu0 %v113
    %2182 = vmatpush.msra.mxu0 %v105
    %2183 = vmatmul.f32.gmra.mxu0 %v2046
    %v2184 = vpop.f32.mrf.mxu0
    %v2185 = vadd.f32 0.0, %v2184
    %2186 = vdwg.mxu0
    %2187 = vmatpush.msra.mxu0 %v226
    %2188 = vmatpush.msra.mxu0 %v218
    %2189 = vmatpush.msra.mxu0 %v210
    %2190 = vmatpush.msra.mxu0 %v202
    %2191 = vmatpush.msra.mxu0 %v194
    %2192 = vmatpush.msra.mxu0 %v186
    %2193 = vmatpush.msra.mxu0 %v178
    %2194 = vmatpush.msra.mxu0 %v170
    %2195 = vmatpush.msra.mxu0 %v162
    %2196 = vmatpush.msra.mxu0 %v154
    %2197 = vmatpush.msra.mxu0 %v146
    %2198 = vmatpush.msra.mxu0 %v138
    %2199 = vmatpush.msra.mxu0 %v130
    %2200 = vmatpush.msra.mxu0 %v122
    %2201 = vmatpush.msra.mxu0 %v114
    %2202 = vmatpush.msra.mxu0 %v106
    %2203 = vmatmul.f32.gmra.mxu0 %v2046
    %v2204 = vpop.f32.mrf.mxu0
    %v2205 = vadd.f32 0.0, %v2204
    %2206 = vdwg.mxu0
    %v2207 = vadd.f32 %v2065, %v1913
    %v2208 = vadd.f32 %v2085, %v1933
    %v2209 = vadd.f32 %v2105, %v1953
    %v2210 = vadd.f32 %v2125, %v1973
    %v2211 = vadd.f32 %v2207, %v433
    %v2212 = vadd.f32 %v2208, %v434
    %v2213 = vadd.f32 %v2209, %v435
    %v2214 = vadd.f32 %v2210, %v436
    %v2215 = vxor.u32 %v2211, 2147483648
    %v2216 = vmul.f32 %v2215, 1.442695
    %v2217 = vpow.pop %v2216
    %v2218 = vadd.f32 %v2217, 1.0
    %v2219 = vrcp.pop %v2218
    %v2220 = vmul.f32 %v2218, %v2219
    %v2221 = vsub.f32 1.0, %v2220
    %v2222 = vmul.f32 %v2219, %v2221
    %v2223 = vadd.f32 %v2219, %v2222
    %vm2224 = vweird.f32 %v2218
    %vm2225 = vweird.f32 %v2219
    %vm2226 = vmor %vm2224, %vm2225
    %v2227 = vsel %vm2226, %v2219, %v2223
    %v2228 = vand.u32 2147483647, %v2218
    %vm2229 = vcmp.eq.f32.partialorder %v2228, 8.507059e+37
    %v2230 = vand.u32 %v2218, 2147483648
    %v2231 = vor.u32 1.1754944e-38, %v2230
    %v2232 = vsel %vm2229, %v2231, %v2227
    %v2233 = vmul.f32 1.0, %v2232
    %v2234 = vxor.u32 %v2212, 2147483648
    %v2235 = vmul.f32 %v2234, 1.442695
    %v2236 = vpow.pop %v2235
    %v2237 = vadd.f32 %v2236, 1.0
    %v2238 = vrcp.pop %v2237
    %v2239 = vmul.f32 %v2237, %v2238
    %v2240 = vsub.f32 1.0, %v2239
    %v2241 = vmul.f32 %v2238, %v2240
    %v2242 = vadd.f32 %v2238, %v2241
    %vm2243 = vweird.f32 %v2237
    %vm2244 = vweird.f32 %v2238
    %vm2245 = vmor %vm2243, %vm2244
    %v2246 = vsel %vm2245, %v2238, %v2242
    %v2247 = vand.u32 2147483647, %v2237
    %vm2248 = vcmp.eq.f32.partialorder %v2247, 8.507059e+37
    %v2249 = vand.u32 %v2237, 2147483648
    %v2250 = vor.u32 1.1754944e-38, %v2249
    %v2251 = vsel %vm2248, %v2250, %v2246
    %v2252 = vmul.f32 1.0, %v2251
    %v2253 = vtanh.pop %v2213
    %v2254 = vxor.u32 %v2214, 2147483648
    %v2255 = vmul.f32 %v2254, 1.442695
    %v2256 = vpow.pop %v2255
    %v2257 = vadd.f32 %v2256, 1.0
    %v2258 = vrcp.pop %v2257
    %v2259 = vmul.f32 %v2257, %v2258
    %v2260 = vsub.f32 1.0, %v2259
    %v2261 = vmul.f32 %v2258, %v2260
    %v2262 = vadd.f32 %v2258, %v2261
    %vm2263 = vweird.f32 %v2257
    %vm2264 = vweird.f32 %v2258
    %vm2265 = vmor %vm2263, %vm2264
    %v2266 = vsel %vm2265, %v2258, %v2262
    %v2267 = vand.u32 2147483647, %v2257
    %vm2268 = vcmp.eq.f32.partialorder %v2267, 8.507059e+37
    %v2269 = vand.u32 %v2257, 2147483648
    %v2270 = vor.u32 1.1754944e-38, %v2269
    %v2271 = vsel %vm2268, %v2270, %v2266
    %v2272 = vmul.f32 1.0, %v2271
    %v2273 = vmul.f32 %v2252, %v1892
    %v2274 = vmul.f32 %v2233, %v2253
    %v2275 = vadd.f32 %v2273, %v2274
    %v2276 = vtanh.pop %v2275
    %v2277 = vmul.f32 %v2272, %v2276
    %2278 = vmatpush.msra.mxu0 %v288
    %2279 = vmatpush.msra.mxu0 %v284
    %2280 = vmatpush.msra.mxu0 %v280
    %2281 = vmatpush.msra.mxu0 %v276
    %2282 = vmatpush.msra.mxu0 %v272
    %2283 = vmatpush.msra.mxu0 %v268
    %2284 = vmatpush.msra.mxu0 %v264
    %2285 = vmatpush.msra.mxu0 %v260
    %2286 = vmatpush.msra.mxu0 %v256
    %2287 = vmatpush.msra.mxu0 %v252
    %2288 = vmatpush.msra.mxu0 %v248
    %2289 = vmatpush.msra.mxu0 %v244
    %2290 = vmatpush.msra.mxu0 %v240
    %2291 = vmatpush.msra.mxu0 %v236
    %2292 = vmatpush.msra.mxu0 %v232
    %2293 = vmatpush.msra.mxu0 %v228
    %2294 = vmatmul.f32.gmra.mxu0 %v2277
    %v2295 = vpop.f32.mrf.mxu0
    %v2296 = vadd.f32 0.0, %v2295
    %2297 = vdwg.mxu0
    %2298 = vmatpush.msra.mxu0 %v289
    %2299 = vmatpush.msra.mxu0 %v285
    %2300 = vmatpush.msra.mxu0 %v281
    %2301 = vmatpush.msra.mxu0 %v277
    %2302 = vmatpush.msra.mxu0 %v273
    %2303 = vmatpush.msra.mxu0 %v269
    %2304 = vmatpush.msra.mxu0 %v265
    %2305 = vmatpush.msra.mxu0 %v261
    %2306 = vmatpush.msra.mxu0 %v257
    %2307 = vmatpush.msra.mxu0 %v253
    %2308 = vmatpush.msra.mxu0 %v249
    %2309 = vmatpush.msra.mxu0 %v245
    %2310 = vmatpush.msra.mxu0 %v241
    %2311 = vmatpush.msra.mxu0 %v237
    %2312 = vmatpush.msra.mxu0 %v233
    %2313 = vmatpush.msra.mxu0 %v229
    %2314 = vmatmul.f32.gmra.mxu0 %v2277
    %v2315 = vpop.f32.mrf.mxu0
    %v2316 = vadd.f32 0.0, %v2315
    %2317 = vdwg.mxu0
    %2318 = vmatpush.msra.mxu0 %v290
    %2319 = vmatpush.msra.mxu0 %v286
    %2320 = vmatpush.msra.mxu0 %v282
    %2321 = vmatpush.msra.mxu0 %v278
    %2322 = vmatpush.msra.mxu0 %v274
    %2323 = vmatpush.msra.mxu0 %v270
    %2324 = vmatpush.msra.mxu0 %v266
    %2325 = vmatpush.msra.mxu0 %v262
    %2326 = vmatpush.msra.mxu0 %v258
    %2327 = vmatpush.msra.mxu0 %v254
    %2328 = vmatpush.msra.mxu0 %v250
    %2329 = vmatpush.msra.mxu0 %v246
    %2330 = vmatpush.msra.mxu0 %v242
    %2331 = vmatpush.msra.mxu0 %v238
    %2332 = vmatpush.msra.mxu0 %v234
    %2333 = vmatpush.msra.mxu0 %v230
    %2334 = vmatmul.f32.gmra.mxu0 %v2277
    %v2335 = vpop.f32.mrf.mxu0
    %v2336 = vadd.f32 0.0, %v2335
    %2337 = vdwg.mxu0
    %2338 = vmatpush.msra.mxu0 %v291
    %2339 = vmatpush.msra.mxu0 %v287
    %2340 = vmatpush.msra.mxu0 %v283
    %2341 = vmatpush.msra.mxu0 %v279
    %2342 = vmatpush.msra.mxu0 %v275
    %2343 = vmatpush.msra.mxu0 %v271
    %2344 = vmatpush.msra.mxu0 %v267
    %2345 = vmatpush.msra.mxu0 %v263
    %2346 = vmatpush.msra.mxu0 %v259
    %2347 = vmatpush.msra.mxu0 %v255
    %2348 = vmatpush.msra.mxu0 %v251
    %2349 = vmatpush.msra.mxu0 %v247
    %2350 = vmatpush.msra.mxu0 %v243
    %2351 = vmatpush.msra.mxu0 %v239
    %2352 = vmatpush.msra.mxu0 %v235
    %2353 = vmatpush.msra.mxu0 %v231
    %2354 = vmatmul.f32.gmra.mxu0 %v2277
    %v2355 = vpop.f32.mrf.mxu0
    %v2356 = vadd.f32 0.0, %v2355
    %2357 = vdwg.mxu0
    %v2358 = vmul.f32 %v2277, %v820
    %v2359 = vsel %vm823, %v2358, 0.0
    %2360 = vadd.xlane.f32.xlu0 %v2359
    %v2361 = vpop.xlane.xlu0 %2360
    %v2362 = vadd.f32 %v2361, %v828
    %v2363 = vadd.f32 %v420, %v2145
    %v2364 = vadd.f32 %v421, %v2165
    %v2365 = vadd.f32 %v422, %v2185
    %v2366 = vadd.f32 %v423, %v2205
    %v2367 = vxor.u32 %v2363, 2147483648
    %v2368 = vmul.f32 %v2367, 1.442695
    %v2369 = vpow.pop %v2368
    %v2370 = vadd.f32 %v2369, 1.0
    %v2371 = vrcp.pop %v2370
    %v2372 = vmul.f32 %v2370, %v2371
    %v2373 = vsub.f32 1.0, %v2372
    %v2374 = vmul.f32 %v2371, %v2373
    %v2375 = vadd.f32 %v2371, %v2374
    %vm2376 = vweird.f32 %v2370
    %vm2377 = vweird.f32 %v2371
    %vm2378 = vmor %vm2376, %vm2377
    %v2379 = vsel %vm2378, %v2371, %v2375
    %v2380 = vand.u32 2147483647, %v2370
    %vm2381 = vcmp.eq.f32.partialorder %v2380, 8.507059e+37
    %v2382 = vand.u32 %v2370, 2147483648
    %v2383 = vor.u32 1.1754944e-38, %v2382
    %v2384 = vsel %vm2381, %v2383, %v2379
    %v2385 = vmul.f32 1.0, %v2384
    %v2386 = vxor.u32 %v2364, 2147483648
    %v2387 = vmul.f32 %v2386, 1.442695
    %v2388 = vpow.pop %v2387
    %v2389 = vadd.f32 %v2388, 1.0
    %v2390 = vrcp.pop %v2389
    %v2391 = vmul.f32 %v2389, %v2390
    %v2392 = vsub.f32 1.0, %v2391
    %v2393 = vmul.f32 %v2390, %v2392
    %v2394 = vadd.f32 %v2390, %v2393
    %vm2395 = vweird.f32 %v2389
    %vm2396 = vweird.f32 %v2390
    %vm2397 = vmor %vm2395, %vm2396
    %v2398 = vsel %vm2397, %v2390, %v2394
    %v2399 = vand.u32 2147483647, %v2389
    %vm2400 = vcmp.eq.f32.partialorder %v2399, 8.507059e+37
    %v2401 = vand.u32 %v2389, 2147483648
    %v2402 = vor.u32 1.1754944e-38, %v2401
    %v2403 = vsel %vm2400, %v2402, %v2398
    %v2404 = vmul.f32 1.0, %v2403
    %v2405 = vtanh.pop %v2365
    %v2406 = vxor.u32 %v2366, 2147483648
    %v2407 = vmul.f32 %v2406, 1.442695
    %v2408 = vpow.pop %v2407
    %v2409 = vadd.f32 %v2408, 1.0
    %v2410 = vrcp.pop %v2409
    %v2411 = vmul.f32 %v2409, %v2410
    %v2412 = vsub.f32 1.0, %v2411
    %v2413 = vmul.f32 %v2410, %v2412
    %v2414 = vadd.f32 %v2410, %v2413
    %vm2415 = vweird.f32 %v2409
    %vm2416 = vweird.f32 %v2410
    %vm2417 = vmor %vm2415, %vm2416
    %v2418 = vsel %vm2417, %v2410, %v2414
    %v2419 = vand.u32 2147483647, %v2409
    %vm2420 = vcmp.eq.f32.partialorder %v2419, 8.507059e+37
    %v2421 = vand.u32 %v2409, 2147483648
    %v2422 = vor.u32 1.1754944e-38, %v2421
    %v2423 = vsel %vm2420, %v2422, %v2418
    %v2424 = vmul.f32 1.0, %v2423
    %v2425 = vmul.f32 %v2404, %v2044
    %v2426 = vmul.f32 %v2385, %v2405
    %v2427 = vadd.f32 %v2425, %v2426
    %v2428 = vtanh.pop %v2427
    %v2429 = vmul.f32 %v2424, %v2428
    %2430 = vmatpush.msra.mxu0 %v219
    %2431 = vmatpush.msra.mxu0 %v211
    %2432 = vmatpush.msra.mxu0 %v203
    %2433 = vmatpush.msra.mxu0 %v195
    %2434 = vmatpush.msra.mxu0 %v187
    %2435 = vmatpush.msra.mxu0 %v179
    %2436 = vmatpush.msra.mxu0 %v171
    %2437 = vmatpush.msra.mxu0 %v163
    %2438 = vmatpush.msra.mxu0 %v155
    %2439 = vmatpush.msra.mxu0 %v147
    %2440 = vmatpush.msra.mxu0 %v139
    %2441 = vmatpush.msra.mxu0 %v131
    %2442 = vmatpush.msra.mxu0 %v123
    %2443 = vmatpush.msra.mxu0 %v115
    %2444 = vmatpush.msra.mxu0 %v107
    %2445 = vmatpush.msra.mxu0 %v99
    %2446 = vmatmul.f32.gmra.mxu0 %v2429
    %v2447 = vpop.f32.mrf.mxu0
    %v2448 = vadd.f32 0.0, %v2447
    %2449 = vdwg.mxu0
    %2450 = vmatpush.msra.mxu0 %v220
    %2451 = vmatpush.msra.mxu0 %v212
    %2452 = vmatpush.msra.mxu0 %v204
    %2453 = vmatpush.msra.mxu0 %v196
    %2454 = vmatpush.msra.mxu0 %v188
    %2455 = vmatpush.msra.mxu0 %v180
    %2456 = vmatpush.msra.mxu0 %v172
    %2457 = vmatpush.msra.mxu0 %v164
    %2458 = vmatpush.msra.mxu0 %v156
    %2459 = vmatpush.msra.mxu0 %v148
    %2460 = vmatpush.msra.mxu0 %v140
    %2461 = vmatpush.msra.mxu0 %v132
    %2462 = vmatpush.msra.mxu0 %v124
    %2463 = vmatpush.msra.mxu0 %v116
    %2464 = vmatpush.msra.mxu0 %v108
    %2465 = vmatpush.msra.mxu0 %v100
    %2466 = vmatmul.f32.gmra.mxu0 %v2429
    %v2467 = vpop.f32.mrf.mxu0
    %v2468 = vadd.f32 0.0, %v2467
    %2469 = vdwg.mxu0
    %2470 = vmatpush.msra.mxu0 %v221
    %2471 = vmatpush.msra.mxu0 %v213
    %2472 = vmatpush.msra.mxu0 %v205
    %2473 = vmatpush.msra.mxu0 %v197
    %2474 = vmatpush.msra.mxu0 %v189
    %2475 = vmatpush.msra.mxu0 %v181
    %2476 = vmatpush.msra.mxu0 %v173
    %2477 = vmatpush.msra.mxu0 %v165
    %2478 = vmatpush.msra.mxu0 %v157
    %2479 = vmatpush.msra.mxu0 %v149
    %2480 = vmatpush.msra.mxu0 %v141
    %2481 = vmatpush.msra.mxu0 %v133
    %2482 = vmatpush.msra.mxu0 %v125
    %2483 = vmatpush.msra.mxu0 %v117
    %2484 = vmatpush.msra.mxu0 %v109
    %2485 = vmatpush.msra.mxu0 %v101
    %2486 = vmatmul.f32.gmra.mxu0 %v2429
    %v2487 = vpop.f32.mrf.mxu0
    %v2488 = vadd.f32 0.0, %v2487
    %2489 = vdwg.mxu0
    %2490 = vmatpush.msra.mxu0 %v222
    %2491 = vmatpush.msra.mxu0 %v214
    %2492 = vmatpush.msra.mxu0 %v206
    %2493 = vmatpush.msra.mxu0 %v198
    %2494 = vmatpush.msra.mxu0 %v190
    %2495 = vmatpush.msra.mxu0 %v182
    %2496 = vmatpush.msra.mxu0 %v174
    %2497 = vmatpush.msra.mxu0 %v166
    %2498 = vmatpush.msra.mxu0 %v158
    %2499 = vmatpush.msra.mxu0 %v150
    %2500 = vmatpush.msra.mxu0 %v142
    %2501 = vmatpush.msra.mxu0 %v134
    %2502 = vmatpush.msra.mxu0 %v126
    %2503 = vmatpush.msra.mxu0 %v118
    %2504 = vmatpush.msra.mxu0 %v110
    %2505 = vmatpush.msra.mxu0 %v102
    %2506 = vmatmul.f32.gmra.mxu0 %v2429
    %v2507 = vpop.f32.mrf.mxu0
    %v2508 = vadd.f32 0.0, %v2507
    %2509 = vdwg.mxu0
    %2510 = vmatpush.msra.mxu0 %v223
    %2511 = vmatpush.msra.mxu0 %v215
    %2512 = vmatpush.msra.mxu0 %v207
    %2513 = vmatpush.msra.mxu0 %v199
    %2514 = vmatpush.msra.mxu0 %v191
    %2515 = vmatpush.msra.mxu0 %v183
    %2516 = vmatpush.msra.mxu0 %v175
    %2517 = vmatpush.msra.mxu0 %v167
    %2518 = vmatpush.msra.mxu0 %v159
    %2519 = vmatpush.msra.mxu0 %v151
    %2520 = vmatpush.msra.mxu0 %v143
    %2521 = vmatpush.msra.mxu0 %v135
    %2522 = vmatpush.msra.mxu0 %v127
    %2523 = vmatpush.msra.mxu0 %v119
    %2524 = vmatpush.msra.mxu0 %v111
    %2525 = vmatpush.msra.mxu0 %v103
    %2526 = vmatmul.f32.gmra.mxu0 %v2429
    %v2527 = vpop.f32.mrf.mxu0
    %v2528 = vadd.f32 0.0, %v2527
    %2529 = vdwg.mxu0
    %2530 = vmatpush.msra.mxu0 %v224
    %2531 = vmatpush.msra.mxu0 %v216
    %2532 = vmatpush.msra.mxu0 %v208
    %2533 = vmatpush.msra.mxu0 %v200
    %2534 = vmatpush.msra.mxu0 %v192
    %2535 = vmatpush.msra.mxu0 %v184
    %2536 = vmatpush.msra.mxu0 %v176
    %2537 = vmatpush.msra.mxu0 %v168
    %2538 = vmatpush.msra.mxu0 %v160
    %2539 = vmatpush.msra.mxu0 %v152
    %2540 = vmatpush.msra.mxu0 %v144
    %2541 = vmatpush.msra.mxu0 %v136
    %2542 = vmatpush.msra.mxu0 %v128
    %2543 = vmatpush.msra.mxu0 %v120
    %2544 = vmatpush.msra.mxu0 %v112
    %2545 = vmatpush.msra.mxu0 %v104
    %2546 = vmatmul.f32.gmra.mxu0 %v2429
    %v2547 = vpop.f32.mrf.mxu0
    %v2548 = vadd.f32 0.0, %v2547
    %2549 = vdwg.mxu0
    %2550 = vmatpush.msra.mxu0 %v225
    %2551 = vmatpush.msra.mxu0 %v217
    %2552 = vmatpush.msra.mxu0 %v209
    %2553 = vmatpush.msra.mxu0 %v201
    %2554 = vmatpush.msra.mxu0 %v193
    %2555 = vmatpush.msra.mxu0 %v185
    %2556 = vmatpush.msra.mxu0 %v177
    %2557 = vmatpush.msra.mxu0 %v169
    %2558 = vmatpush.msra.mxu0 %v161
    %2559 = vmatpush.msra.mxu0 %v153
    %2560 = vmatpush.msra.mxu0 %v145
    %2561 = vmatpush.msra.mxu0 %v137
    %2562 = vmatpush.msra.mxu0 %v129
    %2563 = vmatpush.msra.mxu0 %v121
    %2564 = vmatpush.msra.mxu0 %v113
    %2565 = vmatpush.msra.mxu0 %v105
    %2566 = vmatmul.f32.gmra.mxu0 %v2429
    %v2567 = vpop.f32.mrf.mxu0
    %v2568 = vadd.f32 0.0, %v2567
    %2569 = vdwg.mxu0
    %2570 = vmatpush.msra.mxu0 %v226
    %2571 = vmatpush.msra.mxu0 %v218
    %2572 = vmatpush.msra.mxu0 %v210
    %2573 = vmatpush.msra.mxu0 %v202
    %2574 = vmatpush.msra.mxu0 %v194
    %2575 = vmatpush.msra.mxu0 %v186
    %2576 = vmatpush.msra.mxu0 %v178
    %2577 = vmatpush.msra.mxu0 %v170
    %2578 = vmatpush.msra.mxu0 %v162
    %2579 = vmatpush.msra.mxu0 %v154
    %2580 = vmatpush.msra.mxu0 %v146
    %2581 = vmatpush.msra.mxu0 %v138
    %2582 = vmatpush.msra.mxu0 %v130
    %2583 = vmatpush.msra.mxu0 %v122
    %2584 = vmatpush.msra.mxu0 %v114
    %2585 = vmatpush.msra.mxu0 %v106
    %2586 = vmatmul.f32.gmra.mxu0 %v2429
    %v2587 = vpop.f32.mrf.mxu0
    %v2588 = vadd.f32 0.0, %v2587
    %2589 = vdwg.mxu0
    %v2590 = vadd.f32 %v2448, %v2296
    %v2591 = vadd.f32 %v2468, %v2316
    %v2592 = vadd.f32 %v2488, %v2336
    %v2593 = vadd.f32 %v2508, %v2356
    %v2594 = vadd.f32 %v2590, %v433
    %v2595 = vadd.f32 %v2591, %v434
    %v2596 = vadd.f32 %v2592, %v435
    %v2597 = vadd.f32 %v2593, %v436
    %v2598 = vxor.u32 %v2594, 2147483648
    %v2599 = vmul.f32 %v2598, 1.442695
    %v2600 = vpow.pop %v2599
    %v2601 = vadd.f32 %v2600, 1.0
    %v2602 = vrcp.pop %v2601
    %v2603 = vmul.f32 %v2601, %v2602
    %v2604 = vsub.f32 1.0, %v2603
    %v2605 = vmul.f32 %v2602, %v2604
    %v2606 = vadd.f32 %v2602, %v2605
    %vm2607 = vweird.f32 %v2601
    %vm2608 = vweird.f32 %v2602
    %vm2609 = vmor %vm2607, %vm2608
    %v2610 = vsel %vm2609, %v2602, %v2606
    %v2611 = vand.u32 2147483647, %v2601
    %vm2612 = vcmp.eq.f32.partialorder %v2611, 8.507059e+37
    %v2613 = vand.u32 %v2601, 2147483648
    %v2614 = vor.u32 1.1754944e-38, %v2613
    %v2615 = vsel %vm2612, %v2614, %v2610
    %v2616 = vmul.f32 1.0, %v2615
    %v2617 = vxor.u32 %v2595, 2147483648
    %v2618 = vmul.f32 %v2617, 1.442695
    %v2619 = vpow.pop %v2618
    %v2620 = vadd.f32 %v2619, 1.0
    %v2621 = vrcp.pop %v2620
    %v2622 = vmul.f32 %v2620, %v2621
    %v2623 = vsub.f32 1.0, %v2622
    %v2624 = vmul.f32 %v2621, %v2623
    %v2625 = vadd.f32 %v2621, %v2624
    %vm2626 = vweird.f32 %v2620
    %vm2627 = vweird.f32 %v2621
    %vm2628 = vmor %vm2626, %vm2627
    %v2629 = vsel %vm2628, %v2621, %v2625
    %v2630 = vand.u32 2147483647, %v2620
    %vm2631 = vcmp.eq.f32.partialorder %v2630, 8.507059e+37
    %v2632 = vand.u32 %v2620, 2147483648
    %v2633 = vor.u32 1.1754944e-38, %v2632
    %v2634 = vsel %vm2631, %v2633, %v2629
    %v2635 = vmul.f32 1.0, %v2634
    %v2636 = vtanh.pop %v2596
    %v2637 = vxor.u32 %v2597, 2147483648
    %v2638 = vmul.f32 %v2637, 1.442695
    %v2639 = vpow.pop %v2638
    %v2640 = vadd.f32 %v2639, 1.0
    %v2641 = vrcp.pop %v2640
    %v2642 = vmul.f32 %v2640, %v2641
    %v2643 = vsub.f32 1.0, %v2642
    %v2644 = vmul.f32 %v2641, %v2643
    %v2645 = vadd.f32 %v2641, %v2644
    %vm2646 = vweird.f32 %v2640
    %vm2647 = vweird.f32 %v2641
    %vm2648 = vmor %vm2646, %vm2647
    %v2649 = vsel %vm2648, %v2641, %v2645
    %v2650 = vand.u32 2147483647, %v2640
    %vm2651 = vcmp.eq.f32.partialorder %v2650, 8.507059e+37
    %v2652 = vand.u32 %v2640, 2147483648
    %v2653 = vor.u32 1.1754944e-38, %v2652
    %v2654 = vsel %vm2651, %v2653, %v2649
    %v2655 = vmul.f32 1.0, %v2654
    %v2656 = vmul.f32 %v2635, %v2275
    %v2657 = vmul.f32 %v2616, %v2636
    %v2658 = vadd.f32 %v2656, %v2657
    %v2659 = vtanh.pop %v2658
    %v2660 = vmul.f32 %v2655, %v2659
    %2661 = vmatpush.msra.mxu0 %v288
    %2662 = vmatpush.msra.mxu0 %v284
    %2663 = vmatpush.msra.mxu0 %v280
    %2664 = vmatpush.msra.mxu0 %v276
    %2665 = vmatpush.msra.mxu0 %v272
    %2666 = vmatpush.msra.mxu0 %v268
    %2667 = vmatpush.msra.mxu0 %v264
    %2668 = vmatpush.msra.mxu0 %v260
    %2669 = vmatpush.msra.mxu0 %v256
    %2670 = vmatpush.msra.mxu0 %v252
    %2671 = vmatpush.msra.mxu0 %v248
    %2672 = vmatpush.msra.mxu0 %v244
    %2673 = vmatpush.msra.mxu0 %v240
    %2674 = vmatpush.msra.mxu0 %v236
    %2675 = vmatpush.msra.mxu0 %v232
    %2676 = vmatpush.msra.mxu0 %v228
    %2677 = vmatmul.f32.gmra.mxu0 %v2660
    %v2678 = vpop.f32.mrf.mxu0
    %v2679 = vadd.f32 0.0, %v2678
    %2680 = vdwg.mxu0
    %2681 = vmatpush.msra.mxu0 %v289
    %2682 = vmatpush.msra.mxu0 %v285
    %2683 = vmatpush.msra.mxu0 %v281
    %2684 = vmatpush.msra.mxu0 %v277
    %2685 = vmatpush.msra.mxu0 %v273
    %2686 = vmatpush.msra.mxu0 %v269
    %2687 = vmatpush.msra.mxu0 %v265
    %2688 = vmatpush.msra.mxu0 %v261
    %2689 = vmatpush.msra.mxu0 %v257
    %2690 = vmatpush.msra.mxu0 %v253
    %2691 = vmatpush.msra.mxu0 %v249
    %2692 = vmatpush.msra.mxu0 %v245
    %2693 = vmatpush.msra.mxu0 %v241
    %2694 = vmatpush.msra.mxu0 %v237
    %2695 = vmatpush.msra.mxu0 %v233
    %2696 = vmatpush.msra.mxu0 %v229
    %2697 = vmatmul.f32.gmra.mxu0 %v2660
    %v2698 = vpop.f32.mrf.mxu0
    %v2699 = vadd.f32 0.0, %v2698
    %2700 = vdwg.mxu0
    %2701 = vmatpush.msra.mxu0 %v290
    %2702 = vmatpush.msra.mxu0 %v286
    %2703 = vmatpush.msra.mxu0 %v282
    %2704 = vmatpush.msra.mxu0 %v278
    %2705 = vmatpush.msra.mxu0 %v274
    %2706 = vmatpush.msra.mxu0 %v270
    %2707 = vmatpush.msra.mxu0 %v266
    %2708 = vmatpush.msra.mxu0 %v262
    %2709 = vmatpush.msra.mxu0 %v258
    %2710 = vmatpush.msra.mxu0 %v254
    %2711 = vmatpush.msra.mxu0 %v250
    %2712 = vmatpush.msra.mxu0 %v246
    %2713 = vmatpush.msra.mxu0 %v242
    %2714 = vmatpush.msra.mxu0 %v238
    %2715 = vmatpush.msra.mxu0 %v234
    %2716 = vmatpush.msra.mxu0 %v230
    %2717 = vmatmul.f32.gmra.mxu0 %v2660
    %v2718 = vpop.f32.mrf.mxu0
    %v2719 = vadd.f32 0.0, %v2718
    %2720 = vdwg.mxu0
    %2721 = vmatpush.msra.mxu0 %v291
    %2722 = vmatpush.msra.mxu0 %v287
    %2723 = vmatpush.msra.mxu0 %v283
    %2724 = vmatpush.msra.mxu0 %v279
    %2725 = vmatpush.msra.mxu0 %v275
    %2726 = vmatpush.msra.mxu0 %v271
    %2727 = vmatpush.msra.mxu0 %v267
    %2728 = vmatpush.msra.mxu0 %v263
    %2729 = vmatpush.msra.mxu0 %v259
    %2730 = vmatpush.msra.mxu0 %v255
    %2731 = vmatpush.msra.mxu0 %v251
    %2732 = vmatpush.msra.mxu0 %v247
    %2733 = vmatpush.msra.mxu0 %v243
    %2734 = vmatpush.msra.mxu0 %v239
    %2735 = vmatpush.msra.mxu0 %v235
    %2736 = vmatpush.msra.mxu0 %v231
    %2737 = vmatmul.f32.gmra.mxu0 %v2660
    %v2738 = vpop.f32.mrf.mxu0
    %v2739 = vadd.f32 0.0, %v2738
    %2740 = vdwg.mxu0
    %v2741 = vmul.f32 %v2660, %v820
    %v2742 = vsel %vm823, %v2741, 0.0
    %2743 = vadd.xlane.f32.xlu0 %v2742
    %v2744 = vpop.xlane.xlu0 %2743
    %v2745 = vadd.f32 %v2744, %v828
    %v2746 = vadd.f32 %v424, %v2528
    %v2747 = vadd.f32 %v425, %v2548
    %v2748 = vadd.f32 %v426, %v2568
    %v2749 = vadd.f32 %v427, %v2588
    %v2750 = vxor.u32 %v2746, 2147483648
    %v2751 = vmul.f32 %v2750, 1.442695
    %v2752 = vpow.pop %v2751
    %v2753 = vadd.f32 %v2752, 1.0
    %v2754 = vrcp.pop %v2753
    %v2755 = vmul.f32 %v2753, %v2754
    %v2756 = vsub.f32 1.0, %v2755
    %v2757 = vmul.f32 %v2754, %v2756
    %v2758 = vadd.f32 %v2754, %v2757
    %vm2759 = vweird.f32 %v2753
    %vm2760 = vweird.f32 %v2754
    %vm2761 = vmor %vm2759, %vm2760
    %v2762 = vsel %vm2761, %v2754, %v2758
    %v2763 = vand.u32 2147483647, %v2753
    %vm2764 = vcmp.eq.f32.partialorder %v2763, 8.507059e+37
    %v2765 = vand.u32 %v2753, 2147483648
    %v2766 = vor.u32 1.1754944e-38, %v2765
    %v2767 = vsel %vm2764, %v2766, %v2762
    %v2768 = vmul.f32 1.0, %v2767
    %v2769 = vxor.u32 %v2747, 2147483648
    %v2770 = vmul.f32 %v2769, 1.442695
    %v2771 = vpow.pop %v2770
    %v2772 = vadd.f32 %v2771, 1.0
    %v2773 = vrcp.pop %v2772
    %v2774 = vmul.f32 %v2772, %v2773
    %v2775 = vsub.f32 1.0, %v2774
    %v2776 = vmul.f32 %v2773, %v2775
    %v2777 = vadd.f32 %v2773, %v2776
    %vm2778 = vweird.f32 %v2772
    %vm2779 = vweird.f32 %v2773
    %vm2780 = vmor %vm2778, %vm2779
    %v2781 = vsel %vm2780, %v2773, %v2777
    %v2782 = vand.u32 2147483647, %v2772
    %vm2783 = vcmp.eq.f32.partialorder %v2782, 8.507059e+37
    %v2784 = vand.u32 %v2772, 2147483648
    %v2785 = vor.u32 1.1754944e-38, %v2784
    %v2786 = vsel %vm2783, %v2785, %v2781
    %v2787 = vmul.f32 1.0, %v2786
    %v2788 = vtanh.pop %v2748
    %v2789 = vxor.u32 %v2749, 2147483648
    %v2790 = vmul.f32 %v2789, 1.442695
    %v2791 = vpow.pop %v2790
    %v2792 = vadd.f32 %v2791, 1.0
    %v2793 = vrcp.pop %v2792
    %v2794 = vmul.f32 %v2792, %v2793
    %v2795 = vsub.f32 1.0, %v2794
    %v2796 = vmul.f32 %v2793, %v2795
    %v2797 = vadd.f32 %v2793, %v2796
    %vm2798 = vweird.f32 %v2792
    %vm2799 = vweird.f32 %v2793
    %vm2800 = vmor %vm2798, %vm2799
    %v2801 = vsel %vm2800, %v2793, %v2797
    %v2802 = vand.u32 2147483647, %v2792
    %vm2803 = vcmp.eq.f32.partialorder %v2802, 8.507059e+37
    %v2804 = vand.u32 %v2792, 2147483648
    %v2805 = vor.u32 1.1754944e-38, %v2804
    %v2806 = vsel %vm2803, %v2805, %v2801
    %v2807 = vmul.f32 1.0, %v2806
    %v2808 = vmul.f32 %v2787, %v2427
    %v2809 = vmul.f32 %v2768, %v2788
    %v2810 = vadd.f32 %v2808, %v2809
    %v2811 = vtanh.pop %v2810
    %v2812 = vmul.f32 %v2807, %v2811
    %2813 = vmatpush.msra.mxu0 %v219
    %2814 = vmatpush.msra.mxu0 %v211
    %2815 = vmatpush.msra.mxu0 %v203
    %2816 = vmatpush.msra.mxu0 %v195
    %2817 = vmatpush.msra.mxu0 %v187
    %2818 = vmatpush.msra.mxu0 %v179
    %2819 = vmatpush.msra.mxu0 %v171
    %2820 = vmatpush.msra.mxu0 %v163
    %2821 = vmatpush.msra.mxu0 %v155
    %2822 = vmatpush.msra.mxu0 %v147
    %2823 = vmatpush.msra.mxu0 %v139
    %2824 = vmatpush.msra.mxu0 %v131
    %2825 = vmatpush.msra.mxu0 %v123
    %2826 = vmatpush.msra.mxu0 %v115
    %2827 = vmatpush.msra.mxu0 %v107
    %2828 = vmatpush.msra.mxu0 %v99
    %2829 = vmatmul.f32.gmra.mxu0 %v2812
    %v2830 = vpop.f32.mrf.mxu0
    %v2831 = vadd.f32 0.0, %v2830
    %2832 = vdwg.mxu0
    %2833 = vmatpush.msra.mxu0 %v220
    %2834 = vmatpush.msra.mxu0 %v212
    %2835 = vmatpush.msra.mxu0 %v204
    %2836 = vmatpush.msra.mxu0 %v196
    %2837 = vmatpush.msra.mxu0 %v188
    %2838 = vmatpush.msra.mxu0 %v180
    %2839 = vmatpush.msra.mxu0 %v172
    %2840 = vmatpush.msra.mxu0 %v164
    %2841 = vmatpush.msra.mxu0 %v156
    %2842 = vmatpush.msra.mxu0 %v148
    %2843 = vmatpush.msra.mxu0 %v140
    %2844 = vmatpush.msra.mxu0 %v132
    %2845 = vmatpush.msra.mxu0 %v124
    %2846 = vmatpush.msra.mxu0 %v116
    %2847 = vmatpush.msra.mxu0 %v108
    %2848 = vmatpush.msra.mxu0 %v100
    %2849 = vmatmul.f32.gmra.mxu0 %v2812
    %v2850 = vpop.f32.mrf.mxu0
    %v2851 = vadd.f32 0.0, %v2850
    %2852 = vdwg.mxu0
    %2853 = vmatpush.msra.mxu0 %v221
    %2854 = vmatpush.msra.mxu0 %v213
    %2855 = vmatpush.msra.mxu0 %v205
    %2856 = vmatpush.msra.mxu0 %v197
    %2857 = vmatpush.msra.mxu0 %v189
    %2858 = vmatpush.msra.mxu0 %v181
    %2859 = vmatpush.msra.mxu0 %v173
    %2860 = vmatpush.msra.mxu0 %v165
    %2861 = vmatpush.msra.mxu0 %v157
    %2862 = vmatpush.msra.mxu0 %v149
    %2863 = vmatpush.msra.mxu0 %v141
    %2864 = vmatpush.msra.mxu0 %v133
    %2865 = vmatpush.msra.mxu0 %v125
    %2866 = vmatpush.msra.mxu0 %v117
    %2867 = vmatpush.msra.mxu0 %v109
    %2868 = vmatpush.msra.mxu0 %v101
    %2869 = vmatmul.f32.gmra.mxu0 %v2812
    %v2870 = vpop.f32.mrf.mxu0
    %v2871 = vadd.f32 0.0, %v2870
    %2872 = vdwg.mxu0
    %2873 = vmatpush.msra.mxu0 %v222
    %2874 = vmatpush.msra.mxu0 %v214
    %2875 = vmatpush.msra.mxu0 %v206
    %2876 = vmatpush.msra.mxu0 %v198
    %2877 = vmatpush.msra.mxu0 %v190
    %2878 = vmatpush.msra.mxu0 %v182
    %2879 = vmatpush.msra.mxu0 %v174
    %2880 = vmatpush.msra.mxu0 %v166
    %2881 = vmatpush.msra.mxu0 %v158
    %2882 = vmatpush.msra.mxu0 %v150
    %2883 = vmatpush.msra.mxu0 %v142
    %2884 = vmatpush.msra.mxu0 %v134
    %2885 = vmatpush.msra.mxu0 %v126
    %2886 = vmatpush.msra.mxu0 %v118
    %2887 = vmatpush.msra.mxu0 %v110
    %2888 = vmatpush.msra.mxu0 %v102
    %2889 = vmatmul.f32.gmra.mxu0 %v2812
    %v2890 = vpop.f32.mrf.mxu0
    %v2891 = vadd.f32 0.0, %v2890
    %2892 = vdwg.mxu0
    %2893 = vmatpush.msra.mxu0 %v223
    %2894 = vmatpush.msra.mxu0 %v215
    %2895 = vmatpush.msra.mxu0 %v207
    %2896 = vmatpush.msra.mxu0 %v199
    %2897 = vmatpush.msra.mxu0 %v191
    %2898 = vmatpush.msra.mxu0 %v183
    %2899 = vmatpush.msra.mxu0 %v175
    %2900 = vmatpush.msra.mxu0 %v167
    %2901 = vmatpush.msra.mxu0 %v159
    %2902 = vmatpush.msra.mxu0 %v151
    %2903 = vmatpush.msra.mxu0 %v143
    %2904 = vmatpush.msra.mxu0 %v135
    %2905 = vmatpush.msra.mxu0 %v127
    %2906 = vmatpush.msra.mxu0 %v119
    %2907 = vmatpush.msra.mxu0 %v111
    %2908 = vmatpush.msra.mxu0 %v103
    %2909 = vmatmul.f32.gmra.mxu0 %v2812
    %v2910 = vpop.f32.mrf.mxu0
    %v2911 = vadd.f32 0.0, %v2910
    %2912 = vdwg.mxu0
    %2913 = vmatpush.msra.mxu0 %v224
    %2914 = vmatpush.msra.mxu0 %v216
    %2915 = vmatpush.msra.mxu0 %v208
    %2916 = vmatpush.msra.mxu0 %v200
    %2917 = vmatpush.msra.mxu0 %v192
    %2918 = vmatpush.msra.mxu0 %v184
    %2919 = vmatpush.msra.mxu0 %v176
    %2920 = vmatpush.msra.mxu0 %v168
    %2921 = vmatpush.msra.mxu0 %v160
    %2922 = vmatpush.msra.mxu0 %v152
    %2923 = vmatpush.msra.mxu0 %v144
    %2924 = vmatpush.msra.mxu0 %v136
    %2925 = vmatpush.msra.mxu0 %v128
    %2926 = vmatpush.msra.mxu0 %v120
    %2927 = vmatpush.msra.mxu0 %v112
    %2928 = vmatpush.msra.mxu0 %v104
    %2929 = vmatmul.f32.gmra.mxu0 %v2812
    %v2930 = vpop.f32.mrf.mxu0
    %v2931 = vadd.f32 0.0, %v2930
    %2932 = vdwg.mxu0
    %2933 = vmatpush.msra.mxu0 %v225
    %2934 = vmatpush.msra.mxu0 %v217
    %2935 = vmatpush.msra.mxu0 %v209
    %2936 = vmatpush.msra.mxu0 %v201
    %2937 = vmatpush.msra.mxu0 %v193
    %2938 = vmatpush.msra.mxu0 %v185
    %2939 = vmatpush.msra.mxu0 %v177
    %2940 = vmatpush.msra.mxu0 %v169
    %2941 = vmatpush.msra.mxu0 %v161
    %2942 = vmatpush.msra.mxu0 %v153
    %2943 = vmatpush.msra.mxu0 %v145
    %2944 = vmatpush.msra.mxu0 %v137
    %2945 = vmatpush.msra.mxu0 %v129
    %2946 = vmatpush.msra.mxu0 %v121
    %2947 = vmatpush.msra.mxu0 %v113
    %2948 = vmatpush.msra.mxu0 %v105
    %2949 = vmatmul.f32.gmra.mxu0 %v2812
    %v2950 = vpop.f32.mrf.mxu0
    %v2951 = vadd.f32 0.0, %v2950
    %2952 = vdwg.mxu0
    %2953 = vmatpush.msra.mxu0 %v226
    %2954 = vmatpush.msra.mxu0 %v218
    %2955 = vmatpush.msra.mxu0 %v210
    %2956 = vmatpush.msra.mxu0 %v202
    %2957 = vmatpush.msra.mxu0 %v194
    %2958 = vmatpush.msra.mxu0 %v186
    %2959 = vmatpush.msra.mxu0 %v178
    %2960 = vmatpush.msra.mxu0 %v170
    %2961 = vmatpush.msra.mxu0 %v162
    %2962 = vmatpush.msra.mxu0 %v154
    %2963 = vmatpush.msra.mxu0 %v146
    %2964 = vmatpush.msra.mxu0 %v138
    %2965 = vmatpush.msra.mxu0 %v130
    %2966 = vmatpush.msra.mxu0 %v122
    %2967 = vmatpush.msra.mxu0 %v114
    %2968 = vmatpush.msra.mxu0 %v106
    %2969 = vmatmul.f32.gmra.mxu0 %v2812
    %v2970 = vpop.f32.mrf.mxu0
    %v2971 = vadd.f32 0.0, %v2970
    %2972 = vdwg.mxu0
    %v2973 = vadd.f32 %v2831, %v2679
    %v2974 = vadd.f32 %v2851, %v2699
    %v2975 = vadd.f32 %v2871, %v2719
    %v2976 = vadd.f32 %v2891, %v2739
    %v2977 = vadd.f32 %v2973, %v433
    %v2978 = vadd.f32 %v2974, %v434
    %v2979 = vadd.f32 %v2975, %v435
    %v2980 = vadd.f32 %v2976, %v436
    %v2981 = vxor.u32 %v2977, 2147483648
    %v2982 = vmul.f32 %v2981, 1.442695
    %v2983 = vpow.pop %v2982
    %v2984 = vadd.f32 %v2983, 1.0
    %v2985 = vrcp.pop %v2984
    %v2986 = vmul.f32 %v2984, %v2985
    %v2987 = vsub.f32 1.0, %v2986
    %v2988 = vmul.f32 %v2985, %v2987
    %v2989 = vadd.f32 %v2985, %v2988
    %vm2990 = vweird.f32 %v2984
    %vm2991 = vweird.f32 %v2985
    %vm2992 = vmor %vm2990, %vm2991
    %v2993 = vsel %vm2992, %v2985, %v2989
    %v2994 = vand.u32 2147483647, %v2984
    %vm2995 = vcmp.eq.f32.partialorder %v2994, 8.507059e+37
    %v2996 = vand.u32 %v2984, 2147483648
    %v2997 = vor.u32 1.1754944e-38, %v2996
    %v2998 = vsel %vm2995, %v2997, %v2993
    %v2999 = vmul.f32 1.0, %v2998
    %v3000 = vxor.u32 %v2978, 2147483648
    %v3001 = vmul.f32 %v3000, 1.442695
    %v3002 = vpow.pop %v3001
    %v3003 = vadd.f32 %v3002, 1.0
    %v3004 = vrcp.pop %v3003
    %v3005 = vmul.f32 %v3003, %v3004
    %v3006 = vsub.f32 1.0, %v3005
    %v3007 = vmul.f32 %v3004, %v3006
    %v3008 = vadd.f32 %v3004, %v3007
    %vm3009 = vweird.f32 %v3003
    %vm3010 = vweird.f32 %v3004
    %vm3011 = vmor %vm3009, %vm3010
    %v3012 = vsel %vm3011, %v3004, %v3008
    %v3013 = vand.u32 2147483647, %v3003
    %vm3014 = vcmp.eq.f32.partialorder %v3013, 8.507059e+37
    %v3015 = vand.u32 %v3003, 2147483648
    %v3016 = vor.u32 1.1754944e-38, %v3015
    %v3017 = vsel %vm3014, %v3016, %v3012
    %v3018 = vmul.f32 1.0, %v3017
    %v3019 = vtanh.pop %v2979
    %v3020 = vxor.u32 %v2980, 2147483648
    %v3021 = vmul.f32 %v3020, 1.442695
    %v3022 = vpow.pop %v3021
    %v3023 = vadd.f32 %v3022, 1.0
    %v3024 = vrcp.pop %v3023
    %v3025 = vmul.f32 %v3023, %v3024
    %v3026 = vsub.f32 1.0, %v3025
    %v3027 = vmul.f32 %v3024, %v3026
    %v3028 = vadd.f32 %v3024, %v3027
    %vm3029 = vweird.f32 %v3023
    %vm3030 = vweird.f32 %v3024
    %vm3031 = vmor %vm3029, %vm3030
    %v3032 = vsel %vm3031, %v3024, %v3028
    %v3033 = vand.u32 2147483647, %v3023
    %vm3034 = vcmp.eq.f32.partialorder %v3033, 8.507059e+37
    %v3035 = vand.u32 %v3023, 2147483648
    %v3036 = vor.u32 1.1754944e-38, %v3035
    %v3037 = vsel %vm3034, %v3036, %v3032
    %v3038 = vmul.f32 1.0, %v3037
    %v3039 = vmul.f32 %v3018, %v2658
    %v3040 = vmul.f32 %v2999, %v3019
    %v3041 = vadd.f32 %v3039, %v3040
    %v3042 = vtanh.pop %v3041
    %v3043 = vmul.f32 %v3038, %v3042
    %3044 = vmatpush.msra.mxu0 %v288
    %3045 = vmatpush.msra.mxu0 %v284
    %3046 = vmatpush.msra.mxu0 %v280
    %3047 = vmatpush.msra.mxu0 %v276
    %3048 = vmatpush.msra.mxu0 %v272
    %3049 = vmatpush.msra.mxu0 %v268
    %3050 = vmatpush.msra.mxu0 %v264
    %3051 = vmatpush.msra.mxu0 %v260
    %3052 = vmatpush.msra.mxu0 %v256
    %3053 = vmatpush.msra.mxu0 %v252
    %3054 = vmatpush.msra.mxu0 %v248
    %3055 = vmatpush.msra.mxu0 %v244
    %3056 = vmatpush.msra.mxu0 %v240
    %3057 = vmatpush.msra.mxu0 %v236
    %3058 = vmatpush.msra.mxu0 %v232
    %3059 = vmatpush.msra.mxu0 %v228
    %3060 = vmatmul.f32.gmra.mxu0 %v3043
    %v3061 = vpop.f32.mrf.mxu0
    %v3062 = vadd.f32 0.0, %v3061
    %3063 = vdwg.mxu0
    %3064 = vmatpush.msra.mxu0 %v289
    %3065 = vmatpush.msra.mxu0 %v285
    %3066 = vmatpush.msra.mxu0 %v281
    %3067 = vmatpush.msra.mxu0 %v277
    %3068 = vmatpush.msra.mxu0 %v273
    %3069 = vmatpush.msra.mxu0 %v269
    %3070 = vmatpush.msra.mxu0 %v265
    %3071 = vmatpush.msra.mxu0 %v261
    %3072 = vmatpush.msra.mxu0 %v257
    %3073 = vmatpush.msra.mxu0 %v253
    %3074 = vmatpush.msra.mxu0 %v249
    %3075 = vmatpush.msra.mxu0 %v245
    %3076 = vmatpush.msra.mxu0 %v241
    %3077 = vmatpush.msra.mxu0 %v237
    %3078 = vmatpush.msra.mxu0 %v233
    %3079 = vmatpush.msra.mxu0 %v229
    %3080 = vmatmul.f32.gmra.mxu0 %v3043
    %v3081 = vpop.f32.mrf.mxu0
    %v3082 = vadd.f32 0.0, %v3081
    %3083 = vdwg.mxu0
    %3084 = vmatpush.msra.mxu0 %v290
    %3085 = vmatpush.msra.mxu0 %v286
    %3086 = vmatpush.msra.mxu0 %v282
    %3087 = vmatpush.msra.mxu0 %v278
    %3088 = vmatpush.msra.mxu0 %v274
    %3089 = vmatpush.msra.mxu0 %v270
    %3090 = vmatpush.msra.mxu0 %v266
    %3091 = vmatpush.msra.mxu0 %v262
    %3092 = vmatpush.msra.mxu0 %v258
    %3093 = vmatpush.msra.mxu0 %v254
    %3094 = vmatpush.msra.mxu0 %v250
    %3095 = vmatpush.msra.mxu0 %v246
    %3096 = vmatpush.msra.mxu0 %v242
    %3097 = vmatpush.msra.mxu0 %v238
    %3098 = vmatpush.msra.mxu0 %v234
    %3099 = vmatpush.msra.mxu0 %v230
    %3100 = vmatmul.f32.gmra.mxu0 %v3043
    %v3101 = vpop.f32.mrf.mxu0
    %v3102 = vadd.f32 0.0, %v3101
    %3103 = vdwg.mxu0
    %3104 = vmatpush.msra.mxu0 %v291
    %3105 = vmatpush.msra.mxu0 %v287
    %3106 = vmatpush.msra.mxu0 %v283
    %3107 = vmatpush.msra.mxu0 %v279
    %3108 = vmatpush.msra.mxu0 %v275
    %3109 = vmatpush.msra.mxu0 %v271
    %3110 = vmatpush.msra.mxu0 %v267
    %3111 = vmatpush.msra.mxu0 %v263
    %3112 = vmatpush.msra.mxu0 %v259
    %3113 = vmatpush.msra.mxu0 %v255
    %3114 = vmatpush.msra.mxu0 %v251
    %3115 = vmatpush.msra.mxu0 %v247
    %3116 = vmatpush.msra.mxu0 %v243
    %3117 = vmatpush.msra.mxu0 %v239
    %3118 = vmatpush.msra.mxu0 %v235
    %3119 = vmatpush.msra.mxu0 %v231
    %3120 = vmatmul.f32.gmra.mxu0 %v3043
    %v3121 = vpop.f32.mrf.mxu0
    %v3122 = vadd.f32 0.0, %v3121
    %3123 = vdwg.mxu0
    %v3124 = vmul.f32 %v3043, %v820
    %v3125 = vsel %vm823, %v3124, 0.0
    %3126 = vadd.xlane.f32.xlu0 %v3125
    %v3127 = vpop.xlane.xlu0 %3126
    %v3128 = vadd.f32 %v3127, %v828
    %v3129 = vadd.f32 %v428, %v2911
    %v3130 = vadd.f32 %v429, %v2931
    %v3131 = vadd.f32 %v430, %v2951
    %v3132 = vadd.f32 %v431, %v2971
    %v3133 = vxor.u32 %v3129, 2147483648
    %v3134 = vmul.f32 %v3133, 1.442695
    %v3135 = vpow.pop %v3134
    %v3136 = vadd.f32 %v3135, 1.0
    %v3137 = vrcp.pop %v3136
    %v3138 = vmul.f32 %v3136, %v3137
    %v3139 = vsub.f32 1.0, %v3138
    %v3140 = vmul.f32 %v3137, %v3139
    %v3141 = vadd.f32 %v3137, %v3140
    %vm3142 = vweird.f32 %v3136
    %vm3143 = vweird.f32 %v3137
    %vm3144 = vmor %vm3142, %vm3143
    %v3145 = vsel %vm3144, %v3137, %v3141
    %v3146 = vand.u32 2147483647, %v3136
    %vm3147 = vcmp.eq.f32.partialorder %v3146, 8.507059e+37
    %v3148 = vand.u32 %v3136, 2147483648
    %v3149 = vor.u32 1.1754944e-38, %v3148
    %v3150 = vsel %vm3147, %v3149, %v3145
    %v3151 = vmul.f32 1.0, %v3150
    %v3152 = vxor.u32 %v3130, 2147483648
    %v3153 = vmul.f32 %v3152, 1.442695
    %v3154 = vpow.pop %v3153
    %v3155 = vadd.f32 %v3154, 1.0
    %v3156 = vrcp.pop %v3155
    %v3157 = vmul.f32 %v3155, %v3156
    %v3158 = vsub.f32 1.0, %v3157
    %v3159 = vmul.f32 %v3156, %v3158
    %v3160 = vadd.f32 %v3156, %v3159
    %vm3161 = vweird.f32 %v3155
    %vm3162 = vweird.f32 %v3156
    %vm3163 = vmor %vm3161, %vm3162
    %v3164 = vsel %vm3163, %v3156, %v3160
    %v3165 = vand.u32 2147483647, %v3155
    %vm3166 = vcmp.eq.f32.partialorder %v3165, 8.507059e+37
    %v3167 = vand.u32 %v3155, 2147483648
    %v3168 = vor.u32 1.1754944e-38, %v3167
    %v3169 = vsel %vm3166, %v3168, %v3164
    %v3170 = vmul.f32 1.0, %v3169
    %v3171 = vtanh.pop %v3131
    %v3172 = vxor.u32 %v3132, 2147483648
    %v3173 = vmul.f32 %v3172, 1.442695
    %v3174 = vpow.pop %v3173
    %v3175 = vadd.f32 %v3174, 1.0
    %v3176 = vrcp.pop %v3175
    %v3177 = vmul.f32 %v3175, %v3176
    %v3178 = vsub.f32 1.0, %v3177
    %v3179 = vmul.f32 %v3176, %v3178
    %v3180 = vadd.f32 %v3176, %v3179
    %vm3181 = vweird.f32 %v3175
    %vm3182 = vweird.f32 %v3176
    %vm3183 = vmor %vm3181, %vm3182
    %v3184 = vsel %vm3183, %v3176, %v3180
    %v3185 = vand.u32 2147483647, %v3175
    %vm3186 = vcmp.eq.f32.partialorder %v3185, 8.507059e+37
    %v3187 = vand.u32 %v3175, 2147483648
    %v3188 = vor.u32 1.1754944e-38, %v3187
    %v3189 = vsel %vm3186, %v3188, %v3184
    %v3190 = vmul.f32 1.0, %v3189
    %v3191 = vmul.f32 %v3170, %v2810
    %v3192 = vmul.f32 %v3151, %v3171
    %v3193 = vadd.f32 %v3191, %v3192
    %v3194 = vtanh.pop %v3193
    %v3195 = vmul.f32 %v3190, %v3194
    %3196 = vmatpush.msra.mxu0 %v219
    %3197 = vmatpush.msra.mxu0 %v211
    %3198 = vmatpush.msra.mxu0 %v203
    %3199 = vmatpush.msra.mxu0 %v195
    %3200 = vmatpush.msra.mxu0 %v187
    %3201 = vmatpush.msra.mxu0 %v179
    %3202 = vmatpush.msra.mxu0 %v171
    %3203 = vmatpush.msra.mxu0 %v163
    %3204 = vmatpush.msra.mxu0 %v155
    %3205 = vmatpush.msra.mxu0 %v147
    %3206 = vmatpush.msra.mxu0 %v139
    %3207 = vmatpush.msra.mxu0 %v131
    %3208 = vmatpush.msra.mxu0 %v123
    %3209 = vmatpush.msra.mxu0 %v115
    %3210 = vmatpush.msra.mxu0 %v107
    %3211 = vmatpush.msra.mxu0 %v99
    %3212 = vmatmul.f32.gmra.mxu0 %v3195
    %v3213 = vpop.f32.mrf.mxu0
    %v3214 = vadd.f32 0.0, %v3213
    %3215 = vdwg.mxu0
    %3216 = vmatpush.msra.mxu0 %v220
    %3217 = vmatpush.msra.mxu0 %v212
    %3218 = vmatpush.msra.mxu0 %v204
    %3219 = vmatpush.msra.mxu0 %v196
    %3220 = vmatpush.msra.mxu0 %v188
    %3221 = vmatpush.msra.mxu0 %v180
    %3222 = vmatpush.msra.mxu0 %v172
    %3223 = vmatpush.msra.mxu0 %v164
    %3224 = vmatpush.msra.mxu0 %v156
    %3225 = vmatpush.msra.mxu0 %v148
    %3226 = vmatpush.msra.mxu0 %v140
    %3227 = vmatpush.msra.mxu0 %v132
    %3228 = vmatpush.msra.mxu0 %v124
    %3229 = vmatpush.msra.mxu0 %v116
    %3230 = vmatpush.msra.mxu0 %v108
    %3231 = vmatpush.msra.mxu0 %v100
    %3232 = vmatmul.f32.gmra.mxu0 %v3195
    %v3233 = vpop.f32.mrf.mxu0
    %v3234 = vadd.f32 0.0, %v3233
    %3235 = vdwg.mxu0
    %3236 = vmatpush.msra.mxu0 %v221
    %3237 = vmatpush.msra.mxu0 %v213
    %3238 = vmatpush.msra.mxu0 %v205
    %3239 = vmatpush.msra.mxu0 %v197
    %3240 = vmatpush.msra.mxu0 %v189
    %3241 = vmatpush.msra.mxu0 %v181
    %3242 = vmatpush.msra.mxu0 %v173
    %3243 = vmatpush.msra.mxu0 %v165
    %3244 = vmatpush.msra.mxu0 %v157
    %3245 = vmatpush.msra.mxu0 %v149
    %3246 = vmatpush.msra.mxu0 %v141
    %3247 = vmatpush.msra.mxu0 %v133
    %3248 = vmatpush.msra.mxu0 %v125
    %3249 = vmatpush.msra.mxu0 %v117
    %3250 = vmatpush.msra.mxu0 %v109
    %3251 = vmatpush.msra.mxu0 %v101
    %3252 = vmatmul.f32.gmra.mxu0 %v3195
    %v3253 = vpop.f32.mrf.mxu0
    %v3254 = vadd.f32 0.0, %v3253
    %3255 = vdwg.mxu0
    %3256 = vmatpush.msra.mxu0 %v222
    %3257 = vmatpush.msra.mxu0 %v214
    %3258 = vmatpush.msra.mxu0 %v206
    %3259 = vmatpush.msra.mxu0 %v198
    %3260 = vmatpush.msra.mxu0 %v190
    %3261 = vmatpush.msra.mxu0 %v182
    %3262 = vmatpush.msra.mxu0 %v174
    %3263 = vmatpush.msra.mxu0 %v166
    %3264 = vmatpush.msra.mxu0 %v158
    %3265 = vmatpush.msra.mxu0 %v150
    %3266 = vmatpush.msra.mxu0 %v142
    %3267 = vmatpush.msra.mxu0 %v134
    %3268 = vmatpush.msra.mxu0 %v126
    %3269 = vmatpush.msra.mxu0 %v118
    %3270 = vmatpush.msra.mxu0 %v110
    %3271 = vmatpush.msra.mxu0 %v102
    %3272 = vmatmul.f32.gmra.mxu0 %v3195
    %v3273 = vpop.f32.mrf.mxu0
    %v3274 = vadd.f32 0.0, %v3273
    %3275 = vdwg.mxu0
    %v3276 = vadd.f32 %v3214, %v3062
    %v3277 = vadd.f32 %v3234, %v3082
    %v3278 = vadd.f32 %v3254, %v3102
    %v3279 = vadd.f32 %v3274, %v3122
    %v3280 = vadd.f32 %v3276, %v433
    %v3281 = vadd.f32 %v3277, %v434
    %v3282 = vadd.f32 %v3278, %v435
    %v3283 = vadd.f32 %v3279, %v436
    %v3284 = vxor.u32 %v3280, 2147483648
    %v3285 = vmul.f32 %v3284, 1.442695
    %v3286 = vpow.pop %v3285
    %v3287 = vadd.f32 %v3286, 1.0
    %v3288 = vrcp.pop %v3287
    %v3289 = vmul.f32 %v3287, %v3288
    %v3290 = vsub.f32 1.0, %v3289
    %v3291 = vmul.f32 %v3288, %v3290
    %v3292 = vadd.f32 %v3288, %v3291
    %vm3293 = vweird.f32 %v3287
    %vm3294 = vweird.f32 %v3288
    %vm3295 = vmor %vm3293, %vm3294
    %v3296 = vsel %vm3295, %v3288, %v3292
    %v3297 = vand.u32 2147483647, %v3287
    %vm3298 = vcmp.eq.f32.partialorder %v3297, 8.507059e+37
    %v3299 = vand.u32 %v3287, 2147483648
    %v3300 = vor.u32 1.1754944e-38, %v3299
    %v3301 = vsel %vm3298, %v3300, %v3296
    %v3302 = vmul.f32 1.0, %v3301
    %v3303 = vxor.u32 %v3281, 2147483648
    %v3304 = vmul.f32 %v3303, 1.442695
    %v3305 = vpow.pop %v3304
    %v3306 = vadd.f32 %v3305, 1.0
    %v3307 = vrcp.pop %v3306
    %v3308 = vmul.f32 %v3306, %v3307
    %v3309 = vsub.f32 1.0, %v3308
    %v3310 = vmul.f32 %v3307, %v3309
    %v3311 = vadd.f32 %v3307, %v3310
    %vm3312 = vweird.f32 %v3306
    %vm3313 = vweird.f32 %v3307
    %vm3314 = vmor %vm3312, %vm3313
    %v3315 = vsel %vm3314, %v3307, %v3311
    %v3316 = vand.u32 2147483647, %v3306
    %vm3317 = vcmp.eq.f32.partialorder %v3316, 8.507059e+37
    %v3318 = vand.u32 %v3306, 2147483648
    %v3319 = vor.u32 1.1754944e-38, %v3318
    %v3320 = vsel %vm3317, %v3319, %v3315
    %v3321 = vmul.f32 1.0, %v3320
    %v3322 = vtanh.pop %v3282
    %v3323 = vxor.u32 %v3283, 2147483648
    %v3324 = vmul.f32 %v3323, 1.442695
    %v3325 = vpow.pop %v3324
    %v3326 = vadd.f32 %v3325, 1.0
    %v3327 = vrcp.pop %v3326
    %v3328 = vmul.f32 %v3326, %v3327
    %v3329 = vsub.f32 1.0, %v3328
    %v3330 = vmul.f32 %v3327, %v3329
    %v3331 = vadd.f32 %v3327, %v3330
    %vm3332 = vweird.f32 %v3326
    %vm3333 = vweird.f32 %v3327
    %vm3334 = vmor %vm3332, %vm3333
    %v3335 = vsel %vm3334, %v3327, %v3331
    %v3336 = vand.u32 2147483647, %v3326
    %vm3337 = vcmp.eq.f32.partialorder %v3336, 8.507059e+37
    %v3338 = vand.u32 %v3326, 2147483648
    %v3339 = vor.u32 1.1754944e-38, %v3338
    %v3340 = vsel %vm3337, %v3339, %v3335
    %v3341 = vmul.f32 1.0, %v3340
    %v3342 = vmul.f32 %v3321, %v3041
    %v3343 = vmul.f32 %v3302, %v3322
    %v3344 = vadd.f32 %v3342, %v3343
    %v3345 = vtanh.pop %v3344
    %v3346 = vmul.f32 %v3341, %v3345
    %v3347 = vmul.f32 %v3346, %v820
    %v3348 = vsel %vm823, %v3347, 0.0
    %3349 = vadd.xlane.f32.xlu0 %v3348
    %v3350 = vpop.xlane.xlu0 %3349
    %v3351 = vadd.f32 %v3350, %v828
    %3353 = vrot.lane.b32.xlu0 %v1213, 1
    %v3354 = vpop.permute.xlu0 %3353
    %3357 = vrot.lane.b32.xlu0 %v1596, 2
    %v3358 = vpop.permute.xlu0 %3357
    %3361 = vrot.lane.b32.xlu0 %v1979, 3
    %v3362 = vpop.permute.xlu0 %3361
    %3365 = vrot.lane.b32.xlu0 %v2362, 4
    %v3366 = vpop.permute.xlu0 %3365
    %3369 = vrot.lane.b32.xlu0 %v2745, 5
    %v3370 = vpop.permute.xlu0 %3369
    %3373 = vrot.lane.b32.xlu0 %v3128, 6
    %v3374 = vpop.permute.xlu0 %3373
    %3377 = vrot.lane.b32.xlu0 %v3351, 7
    %v3378 = vpop.permute.xlu0 %3377
    %vm3380 = vcmask 7168
    %v3381 = vsel %vm3380, %v830, %v3354
    %vm3382 = vcmask 15360
    %v3383 = vsel %vm3382, %v3381, %v3358
    %vm3384 = vcmask 23552
    %v3385 = vsel %vm3384, %v3383, %v3362
    %vm3386 = vcmask 31744
    %v3387 = vsel %vm3386, %v3385, %v3366
    %vm3388 = vcmask 39936
    %v3389 = vsel %vm3388, %v3387, %v3370
    %vm3390 = vcmask 48128
    %v3391 = vsel %vm3390, %v3389, %v3374
    %vm3392 = vcmask 56320
    %v3393 = vsel %vm3392, %v3391, %v3378
    %vm3394 = vcmask 58368
    %3395 = vst.msk [vmem:[#allocation11] sm:$0x3] %vm3394, %v3393
    // Predicated region
    $region54: #{sine_lstm_forward.1} parent=1 // pred_check
      _
    $region55: #{sine_lstm_forward.1} parent=1 // pred_check_branch
      %3397 = sbr.rel (0) target = $region57
    $region56: #{sine_lstm_forward.1} parent=1 // pred_region
      %3399 = vsyncadd [#allocation5], 0
      %s3401 = sshll.u32 [#allocation11], 4
      %s3402 = int_to_ptr.vmem [resolvable:$true] %s3401
      %s3403 = sshll.u32 %s9, 4
      %s3404 = int_to_ptr.hbm [resolvable:$true] %s3403
      %3406 = dma.vmem_to_hbm [thread:$0]  %s3402, 32, %s3404, [#allocation5]
    $region57: #{sine_lstm_forward.1} parent=1 // pred_fallthru
      _
    // Predicated region
    $region58: #{sine_lstm_forward.1} parent=1 // pred_check
      _
    $region59: #{sine_lstm_forward.1} parent=1 // pred_check_branch
      %3408 = sbr.rel (0) target = $region61
    $region60: #{sine_lstm_forward.1} parent=1 // pred_region
      %3410 = dma.done [#allocation5], 32
    $region61: #{sine_lstm_forward.1} parent=1 // pred_fallthru
      _
    %3411 = vsyncpa [#allocation4], 1
    %3412 = vsyncpa [#allocation7], 1
    %3413 = vsyncpa [#allocation10], 1
    %3414 = vsyncpa [#allocation5], 1

</llo_original>
